<compile_context>
chip_gen: v7x
topology: tpu7x:2x2x1
jax: 0.10.0
libtpu: 0.0.40
codegen_flags: <defaults>
</compile_context>

<pallas_src>
import jax
import jax.numpy as jnp
from jax import lax
from jax.experimental import pallas as pl
from jax.experimental.pallas import tpu as pltpu

C = 32                         # channels fixed by the module
K = 5                          # kernel size
PAD = 2                        # padding
KC = K * C                     # 160 = kernel-width-expanded channel axis
MXU_DTYPE = jnp.float32        # set to jnp.bfloat16 on v6e/v7x for the native MXU path
_VMEM_LIMIT = 48 * 1024 * 1024


def _write_shifted_padded(dst_ref, src):
    """dst[r, w, dx*C:(dx+1)*C] = zeropad(src)[r, w + dx, :]  for dx in 0..K-1.

    dst_ref: (H+2*PAD, W, K*C) VMEM ref, already zeroed (zeros supply the conv padding).
    src    : (H, W, C) array.
    """
    H, W = src.shape[0], src.shape[1]
    for dx in range(K):
        lo = max(0, PAD - dx)             # first output col with a real source pixel
        hi = min(W, W + PAD - dx)         # one past the last such col
        src_lo = lo + dx - PAD
        dst_ref[PAD:PAD + H, lo:hi, dx * C:(dx + 1) * C] = (
            src[:, src_lo:src_lo + (hi - lo), :])


def _conv5x5_tile(blk, w_ref, TH):
    """blk: (TH+2*PAD, W, K*C) expanded rows; w_ref: (K, K*C, C). Returns (TH, W, C)."""
    acc = jnp.dot(blk[0:TH].astype(MXU_DTYPE), w_ref[0],
                  preferred_element_type=jnp.float32)
    for dy in range(1, K):
        acc = acc + jnp.dot(blk[dy:dy + TH].astype(MXU_DTYPE), w_ref[dy],
                            preferred_element_type=jnp.float32)
    return acc


def _conv1_bnstats_kernel(x_ref, w_ref, b_ref, y_ref, sum_ref, ssq_ref, xps):
    # x_ref  : (1, H, W, C)   whole unpadded image (DMA'd once per image)
    # w_ref  : (K, K*C, C)    conv1 weights grouped per kernel row dy
    # b_ref  : (1, C)
    # y_ref  : (1, TH, W, C)  conv1 output rows [t*TH, (t+1)*TH)
    # sum_ref, ssq_ref: (1, 1, C)  per-image channel sum / sum-of-squares of y1
    # xps    : VMEM (H+2*PAD, W, K*C) shifted+padded input scratch
    t = pl.program_id(1)
    H, W = x_ref.shape[1], x_ref.shape[2]
    TH = y_ref.shape[1]

    @pl.when(t == 0)
    def _():
        xps[...] = jnp.zeros_like(xps)
        _write_shifted_padded(xps, x_ref[0])
        sum_ref[...] = jnp.zeros_like(sum_ref)
        ssq_ref[...] = jnp.zeros_like(ssq_ref)

    row0 = pl.multiple_of(t * TH, TH)
    blk = xps[pl.ds(row0, TH + 2 * PAD), :, :]          # (TH+4, W, K*C)
    y = _conv5x5_tile(blk, w_ref, TH) + b_ref[...]      # bias once, in the epilogue

    # BatchNorm partial statistics (training-mode batch stats), finished in the wrapper.
    sum_ref[...] += jnp.sum(y, axis=(0, 1), keepdims=True)
    ssq_ref[...] += jnp.sum(y * y, axis=(0, 1), keepdims=True)
    y_ref[0] = y.astype(y_ref.dtype)


def _bn_act_conv2_kernel(y1_ref, x_ref, scale_ref, shift_ref, alpha_ref,
                         w_ref, b_ref, o_ref, zps):
    # y1_ref : (1, H, W, C)   conv1 output, whole image (DMA'd once per image)
    # x_ref  : (1, TH, W, C)  residual tile
    # scale/shift: (1, C)     folded BN (batch stats);  alpha: (1, C) PReLU slope
    # w_ref  : (K, K*C, C)    conv2 weights grouped per kernel row dy;  b_ref: (1, C)
    # o_ref  : (1, TH, W, C)
    # zps    : VMEM (H+2*PAD, W, K*C) shifted+padded *activated* map
    t = pl.program_id(1)
    H, W = y1_ref.shape[1], y1_ref.shape[2]
    TH = o_ref.shape[1]

    @pl.when(t == 0)
    def _():
        z = y1_ref[0] * scale_ref[...] + shift_ref[...]   # BatchNorm (train statistics)
        z = jnp.where(z > 0, z, alpha_ref[...] * z)       # PReLU
        zps[...] = jnp.zeros_like(zps)                    # zeros == conv2's zero padding
        _write_shifted_padded(zps, z)

    row0 = pl.multiple_of(t * TH, TH)
    blk = zps[pl.ds(row0, TH + 2 * PAD), :, :]
    acc = _conv5x5_tile(blk, w_ref, TH)
    o_ref[0] = (acc + b_ref[...] + x_ref[0]).astype(o_ref.dtype)   # bias + residual


def _repack_weight(w_oihw):
    # [Cout, Cin, kh, kw] -> [kh, kw*Cin, Cout]; per-dy matrix rows ordered (dx, ci)
    # to match the (dx, ci)-expanded channel axis of the scratch.
    return jnp.transpose(w_oihw, (2, 3, 1, 0)).reshape(K, KC, C).astype(MXU_DTYPE)


def _pick_tile_h(H):
    for th in (64, 32, 16, 8):
        if H % th == 0 and H > th:
            return th
    return H


@jax.jit
def res_block_forward(x_nchw, params):
    x = jnp.transpose(x_nchw, (0, 2, 3, 1)).astype(jnp.float32)    # NCHW -> NHWC
    N, H, W, _ = x.shape
    TH = _pick_tile_h(H)
    T = H // TH
    Hp = H + 2 * PAD

    w1g = _repack_weight(params["w1"])
    w2g = _repack_weight(params["w2"])
    b1 = params["b1"].reshape(1, C).astype(jnp.float32)
    b2 = params["b2"].reshape(1, C).astype(jnp.float32)

    conv_flops = 2 * N * H * W * C * C * K * K
    act_bytes = 4 * N * H * W * C
    w_bytes = 4 * K * K * C * C

    y1, ssum, ssq = pl.pallas_call(
        _conv1_bnstats_kernel,
        out_shape=(jax.ShapeDtypeStruct((N, H, W, C), jnp.float32),
                   jax.ShapeDtypeStruct((N, 1, C), jnp.float32),
                   jax.ShapeDtypeStruct((N, 1, C), jnp.float32)),
        grid_spec=pltpu.PrefetchScalarGridSpec(
            num_scalar_prefetch=0,
            grid=(N, T),
            in_specs=[
                pl.BlockSpec((1, H, W, C), lambda n, t: (n, 0, 0, 0)),
                pl.BlockSpec((K, KC, C), lambda n, t: (0, 0, 0)),
                pl.BlockSpec((1, C), lambda n, t: (0, 0)),
            ],
            out_specs=[
                pl.BlockSpec((1, TH, W, C), lambda n, t: (n, t, 0, 0)),
                pl.BlockSpec((1, 1, C), lambda n, t: (n, 0, 0)),
                pl.BlockSpec((1, 1, C), lambda n, t: (n, 0, 0)),
            ],
            scratch_shapes=[pltpu.VMEM((Hp, W, KC), jnp.float32)]),
        compiler_params=pltpu.CompilerParams(
            dimension_semantics=("parallel", "arbitrary"),
            vmem_limit_bytes=_VMEM_LIMIT),
        cost_estimate=pl.CostEstimate(flops=conv_flops, transcendentals=0,
                                      bytes_accessed=2 * act_bytes + w_bytes),
    )(x, w1g, b1)

    # Finish BatchNorm2d training-mode batch statistics (tiny O(N*C) glue; biased var).
    cnt = N * H * W
    mean = jnp.sum(ssum, axis=(0, 1)) / cnt
    var = jnp.sum(ssq, axis=(0, 1)) / cnt - mean * mean
    scale = params["gamma"] * lax.rsqrt(var + 1e-6)
    shift = params["beta"] - mean * scale
    scale = scale.reshape(1, C).astype(jnp.float32)
    shift = shift.reshape(1, C).astype(jnp.float32)
    alpha = jnp.broadcast_to(params["alpha"].reshape(1, 1), (1, C)).astype(jnp.float32)

    out = pl.pallas_call(
        _bn_act_conv2_kernel,
        out_shape=jax.ShapeDtypeStruct((N, H, W, C), jnp.float32),
        grid_spec=pltpu.PrefetchScalarGridSpec(
            num_scalar_prefetch=0,
            grid=(N, T),
            in_specs=[
                pl.BlockSpec((1, H, W, C), lambda n, t: (n, 0, 0, 0)),   # y1 (full image)
                pl.BlockSpec((1, TH, W, C), lambda n, t: (n, t, 0, 0)),  # residual tile
                pl.BlockSpec((1, C), lambda n, t: (0, 0)),               # BN scale
                pl.BlockSpec((1, C), lambda n, t: (0, 0)),               # BN shift
                pl.BlockSpec((1, C), lambda n, t: (0, 0)),               # PReLU slope
                pl.BlockSpec((K, KC, C), lambda n, t: (0, 0, 0)),        # conv2 weights
                pl.BlockSpec((1, C), lambda n, t: (0, 0)),               # conv2 bias
            ],
            out_specs=pl.BlockSpec((1, TH, W, C), lambda n, t: (n, t, 0, 0)),
            scratch_shapes=[pltpu.VMEM((Hp, W, KC), jnp.float32)]),
        compiler_params=pltpu.CompilerParams(
            dimension_semantics=("parallel", "arbitrary"),
            vmem_limit_bytes=_VMEM_LIMIT),
        cost_estimate=pl.CostEstimate(flops=conv_flops + 6 * N * H * W * C,
                                      transcendentals=0,
                                      bytes_accessed=3 * act_bytes + w_bytes),
    )(y1, x, scale, shift, alpha, w2g, b2)

    return jnp.transpose(out, (0, 3, 1, 2))   # NHWC -> NCHW


def res_block_reference(x_nchw, params):
    """Pure-JAX reference mirroring PyTorch ResBlock.forward (training-mode BN)."""
    x = jnp.transpose(x_nchw, (0, 2, 3, 1)).astype(jnp.float32)
    dn = ("NHWC", "HWIO", "NHWC")
    w1 = jnp.transpose(params["w1"], (2, 3, 1, 0))
    w2 = jnp.transpose(params["w2"], (2, 3, 1, 0))
    y1 = lax.conv_general_dilated(x, w1, (1, 1), ((PAD, PAD), (PAD, PAD)),
                                  dimension_numbers=dn) + params["b1"]
    mean = jnp.mean(y1, axis=(0, 1, 2))
    var = jnp.var(y1, axis=(0, 1, 2))
    z = (y1 - mean) * lax.rsqrt(var + 1e-6) * params["gamma"] + params["beta"]
    z = jnp.where(z > 0, z, params["alpha"] * z)
    y2 = lax.conv_general_dilated(z, w2, (1, 1), ((PAD, PAD), (PAD, PAD)),
                                  dimension_numbers=dn) + params["b2"]
    return jnp.transpose(y2 + x, (0, 3, 1, 2))


def init_params(key):
    k1, k2 = jax.random.split(key, 2)
    fan = C * K * K
    std = (2.0 / (fan + fan)) ** 0.5                   # xavier_normal_
    w1 = std * jax.random.normal(k1, (C, C, K, K), dtype=jnp.float32)
    w2 = std * jax.random.normal(k2, (C, C, K, K), dtype=jnp.float32)
    return {
        "w1": w1,
        "b1": jnp.zeros((C,), jnp.float32),            # bias_zero_init=True
        "w2": w2,
        "b2": jnp.zeros((C,), jnp.float32),
        "gamma": jnp.ones((C,), jnp.float32),          # BN weight (zero_init=False)
        "beta": jnp.zeros((C,), jnp.float32),          # BN bias
        "alpha": jnp.full((1,), 0.25, jnp.float32),    # nn.PReLU() default slope
    }


if __name__ == "__main__":
    key = jax.random.PRNGKey(0)
    pkey, xkey = jax.random.split(key)
    params = init_params(pkey)

    # module fixes channels=32; small batch / spatial for the demo (PyTorch-style NCHW)
    x = jax.random.normal(xkey, (2, C, 16, 16), dtype=jnp.float32)

    out = res_block_forward(x, params)
    out = jax.block_until_ready(out)

    ref = res_block_reference(x, params)
    assert out.shape == x.shape == ref.shape
    assert jnp.allclose(out, ref, rtol=1e-2, atol=1e-2), (
        f"max abs diff {jnp.max(jnp.abs(out - ref))}")
    print("KERNEL_OK")
</pallas_src>

<mosaic_0001>
module attributes {stable_mosaic.version = 11 : i64} {
  func.func @_conv1_bnstats_kernel(%arg0: i32, %arg1: i32, %arg2: memref<1x16x16x32xf32, #tpu.memory_space<vmem>>, %arg3: memref<5x160x32xf32, #tpu.memory_space<vmem>>, %arg4: memref<1x32xf32, #tpu.memory_space<vmem>>, %arg5: memref<1x8x16x32xf32, #tpu.memory_space<vmem>>, %arg6: memref<1x1x32xf32, #tpu.memory_space<vmem>>, %arg7: memref<1x1x32xf32, #tpu.memory_space<vmem>>, %arg8: memref<20x16x160xf32, #tpu.memory_space<vmem>>) attributes {dimension_semantics = [#tpu.dimension_semantics<parallel>, #tpu.dimension_semantics<arbitrary>], iteration_bounds = array<i64: 2, 2>, scalar_prefetch = 0 : i64, scratch_operands = 1 : i64, tpu.core_type = #tpu.core_type<tc>, window_params = [{transform_indices = @transform_0, window_bounds = array<i64: 1, 16, 16, 32>}, {pipeline_mode = #tpu.pipeline_mode<synchronous>, transform_indices = @transform_1, window_bounds = array<i64: 5, 160, 32>}, {pipeline_mode = #tpu.pipeline_mode<synchronous>, transform_indices = @transform_2, window_bounds = array<i64: 1, 32>}, {transform_indices = @transform_3, window_bounds = array<i64: 1, 8, 16, 32>}, {transform_indices = @transform_4, window_bounds = array<i64: 1, 1, 32>}, {transform_indices = @transform_5, window_bounds = array<i64: 1, 1, 32>}]} {
    %c0_i32 = arith.constant 0 : i32
    %0 = arith.cmpi eq, %arg1, %c0_i32 : i32
    %1 = arith.extui %0 : i1 to i32
    %c0_i32_0 = arith.constant 0 : i32
    %2 = arith.cmpi ne, %1, %c0_i32_0 : i32
    scf.if %2 {
      %cst_37 = arith.constant 0.000000e+00 : f32
      %49 = vector.broadcast %cst_37 : f32 to vector<20x16x160xf32>
      %c0_38 = arith.constant 0 : index
      %c0_39 = arith.constant 0 : index
      %c0_40 = arith.constant 0 : index
      %50 = vector.load %arg8[%c0_38, %c0_39, %c0_40] : memref<20x16x160xf32, #tpu.memory_space<vmem>>, vector<20x16x160xf32>
      tpu.vector_store %arg8[%c0_38, %c0_39, %c0_40], %49 {strides = array<i32>} : memref<20x16x160xf32, #tpu.memory_space<vmem>>, vector<20x16x160xf32>,
      %c0_41 = arith.constant 0 : index
      %c0_42 = arith.constant 0 : index
      %c0_43 = arith.constant 0 : index
      %c0_44 = arith.constant 0 : index
      %51 = vector.load %arg2[%c0_41, %c0_42, %c0_43, %c0_44] : memref<1x16x16x32xf32, #tpu.memory_space<vmem>>, vector<1x16x16x32xf32>
      %52 = vector.shape_cast %51 : vector<1x16x16x32xf32> to vector<16x16x32xf32>
      %53 = vector.extract_strided_slice %52 {offsets = [0, 0, 0], sizes = [16, 14, 32], strides = [1, 1, 1]} : vector<16x16x32xf32> to vector<16x14x32xf32>
      %c2_45 = arith.constant 2 : index
      %c2_46 = arith.constant 2 : index
      %c0_47 = arith.constant 0 : index
      %54 = vector.load %arg8[%c2_45, %c2_46, %c0_47] : memref<20x16x160xf32, #tpu.memory_space<vmem>>, vector<16x14x32xf32>
      tpu.vector_store %arg8[%c2_45, %c2_46, %c0_47], %53 {strides = array<i32>} : memref<20x16x160xf32, #tpu.memory_space<vmem>>, vector<16x14x32xf32>,
      %55 = vector.extract_strided_slice %52 {offsets = [0, 0, 0], sizes = [16, 15, 32], strides = [1, 1, 1]} : vector<16x16x32xf32> to vector<16x15x32xf32>
      %c2_48 = arith.constant 2 : index
      %c1_49 = arith.constant 1 : index
      %c32 = arith.constant 32 : index
      %56 = vector.load %arg8[%c2_48, %c1_49, %c32] : memref<20x16x160xf32, #tpu.memory_space<vmem>>, vector<16x15x32xf32>
      tpu.vector_store %arg8[%c2_48, %c1_49, %c32], %55 {strides = array<i32>} : memref<20x16x160xf32, #tpu.memory_space<vmem>>, vector<16x15x32xf32>,
      %c2_50 = arith.constant 2 : index
      %c0_51 = arith.constant 0 : index
      %c64 = arith.constant 64 : index
      %57 = vector.load %arg8[%c2_50, %c0_51, %c64] : memref<20x16x160xf32, #tpu.memory_space<vmem>>, vector<16x16x32xf32>
      tpu.vector_store %arg8[%c2_50, %c0_51, %c64], %52 {strides = array<i32>} : memref<20x16x160xf32, #tpu.memory_space<vmem>>, vector<16x16x32xf32>,
      %58 = vector.extract_strided_slice %52 {offsets = [0, 1, 0], sizes = [16, 15, 32], strides = [1, 1, 1]} : vector<16x16x32xf32> to vector<16x15x32xf32>
      %c2_52 = arith.constant 2 : index
      %c0_53 = arith.constant 0 : index
      %c96 = arith.constant 96 : index
      %59 = vector.load %arg8[%c2_52, %c0_53, %c96] : memref<20x16x160xf32, #tpu.memory_space<vmem>>, vector<16x15x32xf32>
      tpu.vector_store %arg8[%c2_52, %c0_53, %c96], %58 {strides = array<i32>} : memref<20x16x160xf32, #tpu.memory_space<vmem>>, vector<16x15x32xf32>,
      %60 = vector.extract_strided_slice %52 {offsets = [0, 2, 0], sizes = [16, 14, 32], strides = [1, 1, 1]} : vector<16x16x32xf32> to vector<16x14x32xf32>
      %c2_54 = arith.constant 2 : index
      %c0_55 = arith.constant 0 : index
      %c128 = arith.constant 128 : index
      %61 = vector.load %arg8[%c2_54, %c0_55, %c128] : memref<20x16x160xf32, #tpu.memory_space<vmem>>, vector<16x14x32xf32>
      tpu.vector_store %arg8[%c2_54, %c0_55, %c128], %60 {strides = array<i32>} : memref<20x16x160xf32, #tpu.memory_space<vmem>>, vector<16x14x32xf32>,
      %cst_56 = arith.constant 0.000000e+00 : f32
      %62 = vector.broadcast %cst_56 : f32 to vector<1x1x32xf32>
      %c0_57 = arith.constant 0 : index
      %c0_58 = arith.constant 0 : index
      %c0_59 = arith.constant 0 : index
      %63 = vector.load %arg6[%c0_57, %c0_58, %c0_59] : memref<1x1x32xf32, #tpu.memory_space<vmem>>, vector<1x1x32xf32>
      tpu.vector_store %arg6[%c0_57, %c0_58, %c0_59], %62 {strides = array<i32>} : memref<1x1x32xf32, #tpu.memory_space<vmem>>, vector<1x1x32xf32>,
      %cst_60 = arith.constant 0.000000e+00 : f32
      %64 = vector.broadcast %cst_60 : f32 to vector<1x1x32xf32>
      %c0_61 = arith.constant 0 : index
      %c0_62 = arith.constant 0 : index
      %c0_63 = arith.constant 0 : index
      %65 = vector.load %arg7[%c0_61, %c0_62, %c0_63] : memref<1x1x32xf32, #tpu.memory_space<vmem>>, vector<1x1x32xf32>
      tpu.vector_store %arg7[%c0_61, %c0_62, %c0_63], %64 {strides = array<i32>} : memref<1x1x32xf32, #tpu.memory_space<vmem>>, vector<1x1x32xf32>,
    } else {
    }
    %c8_i32 = arith.constant 8 : i32
    %3 = arith.muli %arg1, %c8_i32 : i32
    %4 = tpu.assume_multiple %3, 8 : i32
    %5 = arith.index_cast %4 : i32 to index
    %c0 = arith.constant 0 : index
    %c0_1 = arith.constant 0 : index
    %6 = vector.load %arg8[%5, %c0, %c0_1] : memref<20x16x160xf32, #tpu.memory_space<vmem>>, vector<12x16x160xf32>
    %7 = vector.extract_strided_slice %6 {offsets = [0, 0, 0], sizes = [8, 16, 160], strides = [1, 1, 1]} : vector<12x16x160xf32> to vector<8x16x160xf32>
    %c0_2 = arith.constant 0 : index
    %c0_3 = arith.constant 0 : index
    %c0_4 = arith.constant 0 : index
    %8 = vector.load %arg3[%c0_2, %c0_3, %c0_4] : memref<5x160x32xf32, #tpu.memory_space<vmem>>, vector<1x160x32xf32>
    %9 = vector.shape_cast %8 : vector<1x160x32xf32> to vector<160x32xf32>
    %cst = arith.constant dense<0.000000e+00> : vector<8x16x32xf32>
    %10 = tpu.matmul %7, %9, %cst {dimension_numbers = #tpu.dot_dimension_numbers<[2], [0], [0, 1], [1], [0, 0, 0, 1, 1, 1], [], []>} : vector<8x16x160xf32>, vector<160x32xf32>, vector<8x16x32xf32> -> vector<8x16x32xf32>
    %11 = vector.extract_strided_slice %6 {offsets = [1, 0, 0], sizes = [8, 16, 160], strides = [1, 1, 1]} : vector<12x16x160xf32> to vector<8x16x160xf32>
    %c1 = arith.constant 1 : index
    %c0_5 = arith.constant 0 : index
    %c0_6 = arith.constant 0 : index
    %12 = vector.load %arg3[%c1, %c0_5, %c0_6] : memref<5x160x32xf32, #tpu.memory_space<vmem>>, vector<1x160x32xf32>
    %13 = vector.shape_cast %12 : vector<1x160x32xf32> to vector<160x32xf32>
    %cst_7 = arith.constant dense<0.000000e+00> : vector<8x16x32xf32>
    %14 = tpu.matmul %11, %13, %cst_7 {dimension_numbers = #tpu.dot_dimension_numbers<[2], [0], [0, 1], [1], [0, 0, 0, 1, 1, 1], [], []>} : vector<8x16x160xf32>, vector<160x32xf32>, vector<8x16x32xf32> -> vector<8x16x32xf32>
    %15 = arith.addf %10, %14 : vector<8x16x32xf32>
    %16 = vector.extract_strided_slice %6 {offsets = [2, 0, 0], sizes = [8, 16, 160], strides = [1, 1, 1]} : vector<12x16x160xf32> to vector<8x16x160xf32>
    %c2 = arith.constant 2 : index
    %c0_8 = arith.constant 0 : index
    %c0_9 = arith.constant 0 : index
    %17 = vector.load %arg3[%c2, %c0_8, %c0_9] : memref<5x160x32xf32, #tpu.memory_space<vmem>>, vector<1x160x32xf32>
    %18 = vector.shape_cast %17 : vector<1x160x32xf32> to vector<160x32xf32>
    %cst_10 = arith.constant dense<0.000000e+00> : vector<8x16x32xf32>
    %19 = tpu.matmul %16, %18, %cst_10 {dimension_numbers = #tpu.dot_dimension_numbers<[2], [0], [0, 1], [1], [0, 0, 0, 1, 1, 1], [], []>} : vector<8x16x160xf32>, vector<160x32xf32>, vector<8x16x32xf32> -> vector<8x16x32xf32>
    %20 = arith.addf %15, %19 : vector<8x16x32xf32>
    %21 = vector.extract_strided_slice %6 {offsets = [3, 0, 0], sizes = [8, 16, 160], strides = [1, 1, 1]} : vector<12x16x160xf32> to vector<8x16x160xf32>
    %c3 = arith.constant 3 : index
    %c0_11 = arith.constant 0 : index
    %c0_12 = arith.constant 0 : index
    %22 = vector.load %arg3[%c3, %c0_11, %c0_12] : memref<5x160x32xf32, #tpu.memory_space<vmem>>, vector<1x160x32xf32>
    %23 = vector.shape_cast %22 : vector<1x160x32xf32> to vector<160x32xf32>
    %cst_13 = arith.constant dense<0.000000e+00> : vector<8x16x32xf32>
    %24 = tpu.matmul %21, %23, %cst_13 {dimension_numbers = #tpu.dot_dimension_numbers<[2], [0], [0, 1], [1], [0, 0, 0, 1, 1, 1], [], []>} : vector<8x16x160xf32>, vector<160x32xf32>, vector<8x16x32xf32> -> vector<8x16x32xf32>
    %25 = arith.addf %20, %24 : vector<8x16x32xf32>
    %26 = vector.extract_strided_slice %6 {offsets = [4, 0, 0], sizes = [8, 16, 160], strides = [1, 1, 1]} : vector<12x16x160xf32> to vector<8x16x160xf32>
    %c4 = arith.constant 4 : index
    %c0_14 = arith.constant 0 : index
    %c0_15 = arith.constant 0 : index
    %27 = vector.load %arg3[%c4, %c0_14, %c0_15] : memref<5x160x32xf32, #tpu.memory_space<vmem>>, vector<1x160x32xf32>
    %28 = vector.shape_cast %27 : vector<1x160x32xf32> to vector<160x32xf32>
    %cst_16 = arith.constant dense<0.000000e+00> : vector<8x16x32xf32>
    %29 = tpu.matmul %26, %28, %cst_16 {dimension_numbers = #tpu.dot_dimension_numbers<[2], [0], [0, 1], [1], [0, 0, 0, 1, 1, 1], [], []>} : vector<8x16x160xf32>, vector<160x32xf32>, vector<8x16x32xf32> -> vector<8x16x32xf32>
    %30 = arith.addf %25, %29 : vector<8x16x32xf32>
    %c0_17 = arith.constant 0 : index
    %c0_18 = arith.constant 0 : index
    %31 = vector.load %arg4[%c0_17, %c0_18] : memref<1x32xf32, #tpu.memory_space<vmem>>, vector<1x32xf32>
    %32 = vector.shape_cast %31 : vector<1x32xf32> to vector<1x1x32xf32>
    %33 = vector.broadcast %32 : vector<1x1x32xf32> to vector<8x16x32xf32>
    %34 = arith.addf %30, %33 : vector<8x16x32xf32>
    %c0_19 = arith.constant 0 : index
    %c0_20 = arith.constant 0 : index
    %c0_21 = arith.constant 0 : index
    %35 = vector.load %arg6[%c0_19, %c0_20, %c0_21] : memref<1x1x32xf32, #tpu.memory_space<vmem>>, vector<1x1x32xf32>
    %cst_22 = arith.constant dense<0.000000e+00> : vector<32xf32>
    %36 = vector.multi_reduction <add>, %34, %cst_22 [0, 1] : vector<8x16x32xf32> to vector<32xf32>
    %37 = vector.shape_cast %36 : vector<32xf32> to vector<1x1x32xf32>
    %38 = arith.addf %35, %37 : vector<1x1x32xf32>
    %c0_23 = arith.constant 0 : index
    %c0_24 = arith.constant 0 : index
    %c0_25 = arith.constant 0 : index
    %39 = vector.load %arg6[%c0_23, %c0_24, %c0_25] : memref<1x1x32xf32, #tpu.memory_space<vmem>>, vector<1x1x32xf32>
    tpu.vector_store %arg6[%c0_23, %c0_24, %c0_25], %38 {strides = array<i32>} : memref<1x1x32xf32, #tpu.memory_space<vmem>>, vector<1x1x32xf32>,
    %c0_26 = arith.constant 0 : index
    %c0_27 = arith.constant 0 : index
    %c0_28 = arith.constant 0 : index
    %40 = vector.load %arg7[%c0_26, %c0_27, %c0_28] : memref<1x1x32xf32, #tpu.memory_space<vmem>>, vector<1x1x32xf32>
    %41 = arith.mulf %34, %34 : vector<8x16x32xf32>
    %cst_29 = arith.constant dense<0.000000e+00> : vector<32xf32>
    %42 = vector.multi_reduction <add>, %41, %cst_29 [0, 1] : vector<8x16x32xf32> to vector<32xf32>
    %43 = vector.shape_cast %42 : vector<32xf32> to vector<1x1x32xf32>
    %44 = arith.addf %40, %43 : vector<1x1x32xf32>
    %c0_30 = arith.constant 0 : index
    %c0_31 = arith.constant 0 : index
    %c0_32 = arith.constant 0 : index
    %45 = vector.load %arg7[%c0_30, %c0_31, %c0_32] : memref<1x1x32xf32, #tpu.memory_space<vmem>>, vector<1x1x32xf32>
    tpu.vector_store %arg7[%c0_30, %c0_31, %c0_32], %44 {strides = array<i32>} : memref<1x1x32xf32, #tpu.memory_space<vmem>>, vector<1x1x32xf32>,
    %c0_33 = arith.constant 0 : index
    %c0_34 = arith.constant 0 : index
    %c0_35 = arith.constant 0 : index
    %c0_36 = arith.constant 0 : index
    %46 = vector.load %arg5[%c0_33, %c0_34, %c0_35, %c0_36] : memref<1x8x16x32xf32, #tpu.memory_space<vmem>>, vector<1x8x16x32xf32>
    %47 = vector.shape_cast %46 : vector<1x8x16x32xf32> to vector<8x16x32xf32>
    %48 = vector.shape_cast %34 : vector<8x16x32xf32> to vector<1x8x16x32xf32>
    tpu.vector_store %arg5[%c0_33, %c0_34, %c0_35, %c0_36], %48 {strides = array<i32>} : memref<1x8x16x32xf32, #tpu.memory_space<vmem>>, vector<1x8x16x32xf32>,
    return
  }
  func.func @transform_0(%arg0: i32, %arg1: i32) -> (i32, i32, i32, i32) {
    %c0_i32 = arith.constant 0 : i32
    %c0_i32_0 = arith.constant 0 : i32
    %c0_i32_1 = arith.constant 0 : i32
    %c0_i32_2 = arith.constant 0 : i32
    return %arg0, %c0_i32, %c0_i32_0, %c0_i32_1 : i32, i32, i32, i32
  }
  func.func @transform_1(%arg0: i32, %arg1: i32) -> (i32, i32, i32) {
    %c0_i32 = arith.constant 0 : i32
    %c0_i32_0 = arith.constant 0 : i32
    %c0_i32_1 = arith.constant 0 : i32
    %c0_i32_2 = arith.constant 0 : i32
    return %c0_i32, %c0_i32_0, %c0_i32_1 : i32, i32, i32
  }
  func.func @transform_2(%arg0: i32, %arg1: i32) -> (i32, i32) {
    %c0_i32 = arith.constant 0 : i32
    %c0_i32_0 = arith.constant 0 : i32
    %c0_i32_1 = arith.constant 0 : i32
    return %c0_i32, %c0_i32_0 : i32, i32
  }
  func.func @transform_3(%arg0: i32, %arg1: i32) -> (i32, i32, i32, i32) {
    %c0_i32 = arith.constant 0 : i32
    %c0_i32_0 = arith.constant 0 : i32
    %c0_i32_1 = arith.constant 0 : i32
    return %arg0, %arg1, %c0_i32, %c0_i32_0 : i32, i32, i32, i32
  }
  func.func @transform_4(%arg0: i32, %arg1: i32) -> (i32, i32, i32) {
    %c0_i32 = arith.constant 0 : i32
    %c0_i32_0 = arith.constant 0 : i32
    %c0_i32_1 = arith.constant 0 : i32
    return %arg0, %c0_i32, %c0_i32_0 : i32, i32, i32
  }
  func.func @transform_5(%arg0: i32, %arg1: i32) -> (i32, i32, i32) {
    %c0_i32 = arith.constant 0 : i32
    %c0_i32_0 = arith.constant 0 : i32
    %c0_i32_1 = arith.constant 0 : i32
    return %arg0, %c0_i32, %c0_i32_0 : i32, i32, i32
  }
}

module attributes {stable_mosaic.version = 11 : i64} {
  func.func @_bn_act_conv2_kernel(%arg0: i32, %arg1: i32, %arg2: memref<1x16x16x32xf32, #tpu.memory_space<vmem>>, %arg3: memref<1x8x16x32xf32, #tpu.memory_space<vmem>>, %arg4: memref<1x32xf32, #tpu.memory_space<vmem>>, %arg5: memref<1x32xf32, #tpu.memory_space<vmem>>, %arg6: memref<1x32xf32, #tpu.memory_space<vmem>>, %arg7: memref<5x160x32xf32, #tpu.memory_space<vmem>>, %arg8: memref<1x32xf32, #tpu.memory_space<vmem>>, %arg9: memref<1x8x16x32xf32, #tpu.memory_space<vmem>>, %arg10: memref<20x16x160xf32, #tpu.memory_space<vmem>>) attributes {dimension_semantics = [#tpu.dimension_semantics<parallel>, #tpu.dimension_semantics<arbitrary>], iteration_bounds = array<i64: 2, 2>, scalar_prefetch = 0 : i64, scratch_operands = 1 : i64, tpu.core_type = #tpu.core_type<tc>, window_params = [{transform_indices = @transform_0, window_bounds = array<i64: 1, 16, 16, 32>}, {transform_indices = @transform_1, window_bounds = array<i64: 1, 8, 16, 32>}, {pipeline_mode = #tpu.pipeline_mode<synchronous>, transform_indices = @transform_2, window_bounds = array<i64: 1, 32>}, {pipeline_mode = #tpu.pipeline_mode<synchronous>, transform_indices = @transform_3, window_bounds = array<i64: 1, 32>}, {pipeline_mode = #tpu.pipeline_mode<synchronous>, transform_indices = @transform_4, window_bounds = array<i64: 1, 32>}, {pipeline_mode = #tpu.pipeline_mode<synchronous>, transform_indices = @transform_5, window_bounds = array<i64: 5, 160, 32>}, {pipeline_mode = #tpu.pipeline_mode<synchronous>, transform_indices = @transform_6, window_bounds = array<i64: 1, 32>}, {transform_indices = @transform_7, window_bounds = array<i64: 1, 8, 16, 32>}]} {
    %c0_i32 = arith.constant 0 : i32
    %0 = arith.cmpi eq, %arg1, %c0_i32 : i32
    %1 = arith.extui %0 : i1 to i32
    %c0_i32_0 = arith.constant 0 : i32
    %2 = arith.cmpi ne, %1, %c0_i32_0 : i32
    scf.if %2 {
      %c0_27 = arith.constant 0 : index
      %c0_28 = arith.constant 0 : index
      %c0_29 = arith.constant 0 : index
      %c0_30 = arith.constant 0 : index
      %41 = vector.load %arg2[%c0_27, %c0_28, %c0_29, %c0_30] : memref<1x16x16x32xf32, #tpu.memory_space<vmem>>, vector<1x16x16x32xf32>
      %42 = vector.shape_cast %41 : vector<1x16x16x32xf32> to vector<16x16x32xf32>
      %c0_31 = arith.constant 0 : index
      %c0_32 = arith.constant 0 : index
      %43 = vector.load %arg4[%c0_31, %c0_32] : memref<1x32xf32, #tpu.memory_space<vmem>>, vector<1x32xf32>
      %44 = vector.shape_cast %43 : vector<1x32xf32> to vector<1x1x32xf32>
      %45 = vector.broadcast %44 : vector<1x1x32xf32> to vector<16x16x32xf32>
      %46 = arith.mulf %42, %45 : vector<16x16x32xf32>
      %c0_33 = arith.constant 0 : index
      %c0_34 = arith.constant 0 : index
      %47 = vector.load %arg5[%c0_33, %c0_34] : memref<1x32xf32, #tpu.memory_space<vmem>>, vector<1x32xf32>
      %48 = vector.shape_cast %47 : vector<1x32xf32> to vector<1x1x32xf32>
      %49 = vector.broadcast %48 : vector<1x1x32xf32> to vector<16x16x32xf32>
      %50 = arith.addf %46, %49 : vector<16x16x32xf32>
      %cst_35 = arith.constant 0.000000e+00 : f32
      %51 = vector.broadcast %cst_35 : f32 to vector<16x16x32xf32>
      %52 = arith.cmpf ogt, %50, %51 : vector<16x16x32xf32>
      %c0_36 = arith.constant 0 : index
      %c0_37 = arith.constant 0 : index
      %53 = vector.load %arg6[%c0_36, %c0_37] : memref<1x32xf32, #tpu.memory_space<vmem>>, vector<1x32xf32>
      %54 = vector.shape_cast %53 : vector<1x32xf32> to vector<1x1x32xf32>
      %55 = vector.broadcast %54 : vector<1x1x32xf32> to vector<16x16x32xf32>
      %56 = arith.mulf %55, %50 : vector<16x16x32xf32>
      %57 = arith.select %52, %50, %56 : vector<16x16x32xi1>, vector<16x16x32xf32>
      %cst_38 = arith.constant 0.000000e+00 : f32
      %58 = vector.broadcast %cst_38 : f32 to vector<20x16x160xf32>
      %c0_39 = arith.constant 0 : index
      %c0_40 = arith.constant 0 : index
      %c0_41 = arith.constant 0 : index
      %59 = vector.load %arg10[%c0_39, %c0_40, %c0_41] : memref<20x16x160xf32, #tpu.memory_space<vmem>>, vector<20x16x160xf32>
      tpu.vector_store %arg10[%c0_39, %c0_40, %c0_41], %58 {strides = array<i32>} : memref<20x16x160xf32, #tpu.memory_space<vmem>>, vector<20x16x160xf32>,
      %60 = vector.extract_strided_slice %57 {offsets = [0, 0, 0], sizes = [16, 14, 32], strides = [1, 1, 1]} : vector<16x16x32xf32> to vector<16x14x32xf32>
      %c2_42 = arith.constant 2 : index
      %c2_43 = arith.constant 2 : index
      %c0_44 = arith.constant 0 : index
      %61 = vector.load %arg10[%c2_42, %c2_43, %c0_44] : memref<20x16x160xf32, #tpu.memory_space<vmem>>, vector<16x14x32xf32>
      tpu.vector_store %arg10[%c2_42, %c2_43, %c0_44], %60 {strides = array<i32>} : memref<20x16x160xf32, #tpu.memory_space<vmem>>, vector<16x14x32xf32>,
      %62 = vector.extract_strided_slice %57 {offsets = [0, 0, 0], sizes = [16, 15, 32], strides = [1, 1, 1]} : vector<16x16x32xf32> to vector<16x15x32xf32>
      %c2_45 = arith.constant 2 : index
      %c1_46 = arith.constant 1 : index
      %c32 = arith.constant 32 : index
      %63 = vector.load %arg10[%c2_45, %c1_46, %c32] : memref<20x16x160xf32, #tpu.memory_space<vmem>>, vector<16x15x32xf32>
      tpu.vector_store %arg10[%c2_45, %c1_46, %c32], %62 {strides = array<i32>} : memref<20x16x160xf32, #tpu.memory_space<vmem>>, vector<16x15x32xf32>,
      %c2_47 = arith.constant 2 : index
      %c0_48 = arith.constant 0 : index
      %c64 = arith.constant 64 : index
      %64 = vector.load %arg10[%c2_47, %c0_48, %c64] : memref<20x16x160xf32, #tpu.memory_space<vmem>>, vector<16x16x32xf32>
      tpu.vector_store %arg10[%c2_47, %c0_48, %c64], %57 {strides = array<i32>} : memref<20x16x160xf32, #tpu.memory_space<vmem>>, vector<16x16x32xf32>,
      %65 = vector.extract_strided_slice %57 {offsets = [0, 1, 0], sizes = [16, 15, 32], strides = [1, 1, 1]} : vector<16x16x32xf32> to vector<16x15x32xf32>
      %c2_49 = arith.constant 2 : index
      %c0_50 = arith.constant 0 : index
      %c96 = arith.constant 96 : index
      %66 = vector.load %arg10[%c2_49, %c0_50, %c96] : memref<20x16x160xf32, #tpu.memory_space<vmem>>, vector<16x15x32xf32>
      tpu.vector_store %arg10[%c2_49, %c0_50, %c96], %65 {strides = array<i32>} : memref<20x16x160xf32, #tpu.memory_space<vmem>>, vector<16x15x32xf32>,
      %67 = vector.extract_strided_slice %57 {offsets = [0, 2, 0], sizes = [16, 14, 32], strides = [1, 1, 1]} : vector<16x16x32xf32> to vector<16x14x32xf32>
      %c2_51 = arith.constant 2 : index
      %c0_52 = arith.constant 0 : index
      %c128 = arith.constant 128 : index
      %68 = vector.load %arg10[%c2_51, %c0_52, %c128] : memref<20x16x160xf32, #tpu.memory_space<vmem>>, vector<16x14x32xf32>
      tpu.vector_store %arg10[%c2_51, %c0_52, %c128], %67 {strides = array<i32>} : memref<20x16x160xf32, #tpu.memory_space<vmem>>, vector<16x14x32xf32>,
    } else {
    }
    %c8_i32 = arith.constant 8 : i32
    %3 = arith.muli %arg1, %c8_i32 : i32
    %4 = tpu.assume_multiple %3, 8 : i32
    %5 = arith.index_cast %4 : i32 to index
    %c0 = arith.constant 0 : index
    %c0_1 = arith.constant 0 : index
    %6 = vector.load %arg10[%5, %c0, %c0_1] : memref<20x16x160xf32, #tpu.memory_space<vmem>>, vector<12x16x160xf32>
    %7 = vector.extract_strided_slice %6 {offsets = [0, 0, 0], sizes = [8, 16, 160], strides = [1, 1, 1]} : vector<12x16x160xf32> to vector<8x16x160xf32>
    %c0_2 = arith.constant 0 : index
    %c0_3 = arith.constant 0 : index
    %c0_4 = arith.constant 0 : index
    %8 = vector.load %arg7[%c0_2, %c0_3, %c0_4] : memref<5x160x32xf32, #tpu.memory_space<vmem>>, vector<1x160x32xf32>
    %9 = vector.shape_cast %8 : vector<1x160x32xf32> to vector<160x32xf32>
    %cst = arith.constant dense<0.000000e+00> : vector<8x16x32xf32>
    %10 = tpu.matmul %7, %9, %cst {dimension_numbers = #tpu.dot_dimension_numbers<[2], [0], [0, 1], [1], [0, 0, 0, 1, 1, 1], [], []>} : vector<8x16x160xf32>, vector<160x32xf32>, vector<8x16x32xf32> -> vector<8x16x32xf32>
    %11 = vector.extract_strided_slice %6 {offsets = [1, 0, 0], sizes = [8, 16, 160], strides = [1, 1, 1]} : vector<12x16x160xf32> to vector<8x16x160xf32>
    %c1 = arith.constant 1 : index
    %c0_5 = arith.constant 0 : index
    %c0_6 = arith.constant 0 : index
    %12 = vector.load %arg7[%c1, %c0_5, %c0_6] : memref<5x160x32xf32, #tpu.memory_space<vmem>>, vector<1x160x32xf32>
    %13 = vector.shape_cast %12 : vector<1x160x32xf32> to vector<160x32xf32>
    %cst_7 = arith.constant dense<0.000000e+00> : vector<8x16x32xf32>
    %14 = tpu.matmul %11, %13, %cst_7 {dimension_numbers = #tpu.dot_dimension_numbers<[2], [0], [0, 1], [1], [0, 0, 0, 1, 1, 1], [], []>} : vector<8x16x160xf32>, vector<160x32xf32>, vector<8x16x32xf32> -> vector<8x16x32xf32>
    %15 = arith.addf %10, %14 : vector<8x16x32xf32>
    %16 = vector.extract_strided_slice %6 {offsets = [2, 0, 0], sizes = [8, 16, 160], strides = [1, 1, 1]} : vector<12x16x160xf32> to vector<8x16x160xf32>
    %c2 = arith.constant 2 : index
    %c0_8 = arith.constant 0 : index
    %c0_9 = arith.constant 0 : index
    %17 = vector.load %arg7[%c2, %c0_8, %c0_9] : memref<5x160x32xf32, #tpu.memory_space<vmem>>, vector<1x160x32xf32>
    %18 = vector.shape_cast %17 : vector<1x160x32xf32> to vector<160x32xf32>
    %cst_10 = arith.constant dense<0.000000e+00> : vector<8x16x32xf32>
    %19 = tpu.matmul %16, %18, %cst_10 {dimension_numbers = #tpu.dot_dimension_numbers<[2], [0], [0, 1], [1], [0, 0, 0, 1, 1, 1], [], []>} : vector<8x16x160xf32>, vector<160x32xf32>, vector<8x16x32xf32> -> vector<8x16x32xf32>
    %20 = arith.addf %15, %19 : vector<8x16x32xf32>
    %21 = vector.extract_strided_slice %6 {offsets = [3, 0, 0], sizes = [8, 16, 160], strides = [1, 1, 1]} : vector<12x16x160xf32> to vector<8x16x160xf32>
    %c3 = arith.constant 3 : index
    %c0_11 = arith.constant 0 : index
    %c0_12 = arith.constant 0 : index
    %22 = vector.load %arg7[%c3, %c0_11, %c0_12] : memref<5x160x32xf32, #tpu.memory_space<vmem>>, vector<1x160x32xf32>
    %23 = vector.shape_cast %22 : vector<1x160x32xf32> to vector<160x32xf32>
    %cst_13 = arith.constant dense<0.000000e+00> : vector<8x16x32xf32>
    %24 = tpu.matmul %21, %23, %cst_13 {dimension_numbers = #tpu.dot_dimension_numbers<[2], [0], [0, 1], [1], [0, 0, 0, 1, 1, 1], [], []>} : vector<8x16x160xf32>, vector<160x32xf32>, vector<8x16x32xf32> -> vector<8x16x32xf32>
    %25 = arith.addf %20, %24 : vector<8x16x32xf32>
    %26 = vector.extract_strided_slice %6 {offsets = [4, 0, 0], sizes = [8, 16, 160], strides = [1, 1, 1]} : vector<12x16x160xf32> to vector<8x16x160xf32>
    %c4 = arith.constant 4 : index
    %c0_14 = arith.constant 0 : index
    %c0_15 = arith.constant 0 : index
    %27 = vector.load %arg7[%c4, %c0_14, %c0_15] : memref<5x160x32xf32, #tpu.memory_space<vmem>>, vector<1x160x32xf32>
    %28 = vector.shape_cast %27 : vector<1x160x32xf32> to vector<160x32xf32>
    %cst_16 = arith.constant dense<0.000000e+00> : vector<8x16x32xf32>
    %29 = tpu.matmul %26, %28, %cst_16 {dimension_numbers = #tpu.dot_dimension_numbers<[2], [0], [0, 1], [1], [0, 0, 0, 1, 1, 1], [], []>} : vector<8x16x160xf32>, vector<160x32xf32>, vector<8x16x32xf32> -> vector<8x16x32xf32>
    %30 = arith.addf %25, %29 : vector<8x16x32xf32>
    %c0_17 = arith.constant 0 : index
    %c0_18 = arith.constant 0 : index
    %31 = vector.load %arg8[%c0_17, %c0_18] : memref<1x32xf32, #tpu.memory_space<vmem>>, vector<1x32xf32>
    %32 = vector.shape_cast %31 : vector<1x32xf32> to vector<1x1x32xf32>
    %33 = vector.broadcast %32 : vector<1x1x32xf32> to vector<8x16x32xf32>
    %34 = arith.addf %30, %33 : vector<8x16x32xf32>
    %c0_19 = arith.constant 0 : index
    %c0_20 = arith.constant 0 : index
    %c0_21 = arith.constant 0 : index
    %c0_22 = arith.constant 0 : index
    %35 = vector.load %arg3[%c0_19, %c0_20, %c0_21, %c0_22] : memref<1x8x16x32xf32, #tpu.memory_space<vmem>>, vector<1x8x16x32xf32>
    %36 = vector.shape_cast %35 : vector<1x8x16x32xf32> to vector<8x16x32xf32>
    %37 = arith.addf %34, %36 : vector<8x16x32xf32>
    %c0_23 = arith.constant 0 : index
    %c0_24 = arith.constant 0 : index
    %c0_25 = arith.constant 0 : index
    %c0_26 = arith.constant 0 : index
    %38 = vector.load %arg9[%c0_23, %c0_24, %c0_25, %c0_26] : memref<1x8x16x32xf32, #tpu.memory_space<vmem>>, vector<1x8x16x32xf32>
    %39 = vector.shape_cast %38 : vector<1x8x16x32xf32> to vector<8x16x32xf32>
    %40 = vector.shape_cast %37 : vector<8x16x32xf32> to vector<1x8x16x32xf32>
    tpu.vector_store %arg9[%c0_23, %c0_24, %c0_25, %c0_26], %40 {strides = array<i32>} : memref<1x8x16x32xf32, #tpu.memory_space<vmem>>, vector<1x8x16x32xf32>,
    return
  }
  func.func @transform_0(%arg0: i32, %arg1: i32) -> (i32, i32, i32, i32) {
    %c0_i32 = arith.constant 0 : i32
    %c0_i32_0 = arith.constant 0 : i32
    %c0_i32_1 = arith.constant 0 : i32
    %c0_i32_2 = arith.constant 0 : i32
    return %arg0, %c0_i32, %c0_i32_0, %c0_i32_1 : i32, i32, i32, i32
  }
  func.func @transform_1(%arg0: i32, %arg1: i32) -> (i32, i32, i32, i32) {
    %c0_i32 = arith.constant 0 : i32
    %c0_i32_0 = arith.constant 0 : i32
    %c0_i32_1 = arith.constant 0 : i32
    return %arg0, %arg1, %c0_i32, %c0_i32_0 : i32, i32, i32, i32
  }
  func.func @transform_2(%arg0: i32, %arg1: i32) -> (i32, i32) {
    %c0_i32 = arith.constant 0 : i32
    %c0_i32_0 = arith.constant 0 : i32
    %c0_i32_1 = arith.constant 0 : i32
    return %c0_i32, %c0_i32_0 : i32, i32
  }
  func.func @transform_3(%arg0: i32, %arg1: i32) -> (i32, i32) {
    %c0_i32 = arith.constant 0 : i32
    %c0_i32_0 = arith.constant 0 : i32
    %c0_i32_1 = arith.constant 0 : i32
    return %c0_i32, %c0_i32_0 : i32, i32
  }
  func.func @transform_4(%arg0: i32, %arg1: i32) -> (i32, i32) {
    %c0_i32 = arith.constant 0 : i32
    %c0_i32_0 = arith.constant 0 : i32
    %c0_i32_1 = arith.constant 0 : i32
    return %c0_i32, %c0_i32_0 : i32, i32
  }
  func.func @transform_5(%arg0: i32, %arg1: i32) -> (i32, i32, i32) {
    %c0_i32 = arith.constant 0 : i32
    %c0_i32_0 = arith.constant 0 : i32
    %c0_i32_1 = arith.constant 0 : i32
    %c0_i32_2 = arith.constant 0 : i32
    return %c0_i32, %c0_i32_0, %c0_i32_1 : i32, i32, i32
  }
  func.func @transform_6(%arg0: i32, %arg1: i32) -> (i32, i32) {
    %c0_i32 = arith.constant 0 : i32
    %c0_i32_0 = arith.constant 0 : i32
    %c0_i32_1 = arith.constant 0 : i32
    return %c0_i32, %c0_i32_0 : i32, i32
  }
  func.func @transform_7(%arg0: i32, %arg1: i32) -> (i32, i32, i32, i32) {
    %c0_i32 = arith.constant 0 : i32
    %c0_i32_0 = arith.constant 0 : i32
    %c0_i32_1 = arith.constant 0 : i32
    return %arg0, %arg1, %c0_i32, %c0_i32_0 : i32, i32, i32, i32
  }
}

</mosaic_0001>

<llo_original>
// kernel: res_block_forward.2
$region0: #{res_block_forward.2}
  #allocation0 [shape = 'u32[]', space=smem, size = 0x4, offset = 0x4, fixed_abs, tag = 'smem constant byte address 0x4 - core index']
  #allocation1 [shape = 'u32[144,128]{1,0:T(1,128)}', space=vmem, size = 0x12000, scoped, tag = 'internal scratch']
  #allocation2 [shape = 'f32[20,16,160]{2,1,0:T(8,128)}', space=vmem, size = 0x50000, scoped, tag = 'scratch operand']
  %s0 = inlined_call_operand.vmem [shape: f32[2,16,16,32], index: 0, kind: input, shape index: {}]
  %s1 = inlined_call_operand.vmem [shape: f32[5,160,32], index: 1, kind: input, shape index: {}]
  %s2 = inlined_call_operand.vmem [shape: f32[1,32], index: 2, kind: input, shape index: {}]
  %s3 = inlined_call_operand.vmem [shape: f32[2,16,16,32], index: 3, kind: output, shape index: {0}]
  %s4 = inlined_call_operand.vmem [shape: f32[2,1,32], index: 4, kind: output, shape index: {1}]
  %s5 = inlined_call_operand.vmem [shape: f32[2,1,32], index: 5, kind: output, shape index: {2}]
  %6 = xla_tuple %s3, %s4, %s5
  %s7 = sld [smem:[#allocation0]]
  $region65: #{res_block_forward.2} parent=0
    _
  %s9 = ssub.s32 1, %s7
  %s10 = scalar_select 0, %s9, %s7
  loop: start=0, step=1, limit=6
  $region2: #{res_block_forward.2} parent=0 // loop_pre_header
    _
  $region3: #{res_block_forward.2} parent=0 // loop_header
    %s12 = sphi 0, %s16
    %p13 = scmp.ge.s32.totalorder %s12, 6
    %s19 = sphi 0, %s31
    %s20 = sphi 0, %s27
    %s21 = sphi 0, %s19
    %s22 = sphi 0, %s20
    %s23 = sphi 0, %s21
    %s24 = sphi 0, %s22
    %s34 = sphi 0, %s36
    %s37 = sphi 0, %s34
    %s38 = sphi 0, %s37
    %s54 = sphi 0, %s38
    %s58 = sphi 0, %s58
    %s60 = sphi 0, %s58
    %s61 = sphi 0, %s60
    %s75 = sphi 0, %s61
    %s79 = sphi 0, %s79
    %s81 = sphi 0, %s79
    %s82 = sphi 0, %s81
    %s96 = sphi 0, %s82
    %s104 = sphi 0, %s106
    %s107 = sphi 0, %s104
    %s108 = sphi 0, %s107
    %s124 = sphi 0, %s108
    %s130 = sphi 0, %s132
    %s133 = sphi 0, %s130
    %s134 = sphi 0, %s133
    %s150 = sphi 0, %s134
    %s156 = sphi 0, %s158
    %s159 = sphi 0, %s156
    %s160 = sphi 0, %s159
    %s176 = sphi 0, %s160
  $region4: #{res_block_forward.2} parent=0 // loop_header_branch
    %15 = sbr.rel (%p13) target = $region8
  $region5: #{res_block_forward.2} parent=0 // loop_body
    %s17 = ssub.s32 %s12, 1
    %s18 = ssub.s32 %s12, 2
    %s25 = sadd.s32 1, %s20
    %p26 = scmp.ge.s32.totalorder %s25, 2
    %s27 = scalar_select %p26, 0, %s25
    %s28 = sadd.s32 1, %s19
    %s29 = scalar_select %p26, %s28, %s19
    %p30 = scmp.ge.s32.totalorder %s29, 2
    %s31 = scalar_select %p30, 0, %s29
    %s32 = ssub.s32 %s19, %s31
    %p33 = scmp.eq.s32.totalorder %s32, 0
    %s35 = sadd.s32 %s34, 1
    %s36 = scalar_select %p33, %s34, %s35
    %p39 = pneg %p33
    %p40 = scmp.eq.s32.totalorder %s12, 3
    %p41 = por %p39, %p40
    %p42 = scmp.ne.s32.totalorder %s34, %s37
    %p43 = scmp.eq.s32.totalorder %s12, 0
    %p44 = por %p42, %p43
    %p45 = scmp.ne.s32.totalorder %s34, %s37
    %p46 = scmp.eq.s32.totalorder %s17, 3
    %p47 = por %p45, %p46
    %p48 = scmp.ne.s32.totalorder %s37, %s38
    %p49 = scmp.eq.s32.totalorder %s17, 0
    %p50 = por %p48, %p49
    %p51 = scmp.ne.s32.totalorder %s37, %s38
    %p52 = scmp.eq.s32.totalorder %s18, 3
    %p53 = por %p51, %p52
    %p55 = scmp.ne.s32.totalorder %s38, %s54
    %p56 = scmp.eq.s32.totalorder %s18, 0
    %p57 = por %p55, %p56
    %s59 = sadd.s32 %s58, 1
    %p62 = scmp.eq.s32.totalorder %s12, 3
    %p63 = scmp.ne.s32.totalorder %s58, %s60
    %p64 = scmp.eq.s32.totalorder %s12, 0
    %p65 = por %p63, %p64
    %p66 = scmp.ne.s32.totalorder %s58, %s60
    %p67 = scmp.eq.s32.totalorder %s17, 3
    %p68 = por %p66, %p67
    %p69 = scmp.ne.s32.totalorder %s60, %s61
    %p70 = scmp.eq.s32.totalorder %s17, 0
    %p71 = por %p69, %p70
    %p72 = scmp.ne.s32.totalorder %s60, %s61
    %p73 = scmp.eq.s32.totalorder %s18, 3
    %p74 = por %p72, %p73
    %p76 = scmp.ne.s32.totalorder %s61, %s75
    %p77 = scmp.eq.s32.totalorder %s18, 0
    %p78 = por %p76, %p77
    %s80 = sadd.s32 %s79, 1
    %p83 = scmp.eq.s32.totalorder %s12, 3
    %p84 = scmp.ne.s32.totalorder %s79, %s81
    %p85 = scmp.eq.s32.totalorder %s12, 0
    %p86 = por %p84, %p85
    %p87 = scmp.ne.s32.totalorder %s79, %s81
    %p88 = scmp.eq.s32.totalorder %s17, 3
    %p89 = por %p87, %p88
    %p90 = scmp.ne.s32.totalorder %s81, %s82
    %p91 = scmp.eq.s32.totalorder %s17, 0
    %p92 = por %p90, %p91
    %p93 = scmp.ne.s32.totalorder %s81, %s82
    %p94 = scmp.eq.s32.totalorder %s18, 3
    %p95 = por %p93, %p94
    %p97 = scmp.ne.s32.totalorder %s82, %s96
    %p98 = scmp.eq.s32.totalorder %s18, 0
    %p99 = por %p97, %p98
    %s100 = ssub.s32 %s19, %s31
    %s101 = ssub.s32 %s20, %s27
    %s102 = sor.u32 %s100, %s101
    %p103 = scmp.eq.s32.totalorder %s102, 0
    %s105 = sadd.s32 %s104, 1
    %s106 = scalar_select %p103, %s104, %s105
    %p109 = pneg %p103
    %p110 = scmp.eq.s32.totalorder %s12, 3
    %p111 = por %p109, %p110
    %p112 = scmp.ne.s32.totalorder %s104, %s107
    %p113 = scmp.eq.s32.totalorder %s12, 0
    %p114 = por %p112, %p113
    %p115 = scmp.ne.s32.totalorder %s104, %s107
    %p116 = scmp.eq.s32.totalorder %s17, 3
    %p117 = por %p115, %p116
    %p118 = scmp.ne.s32.totalorder %s107, %s108
    %p119 = scmp.eq.s32.totalorder %s17, 0
    %p120 = por %p118, %p119
    %p121 = scmp.ne.s32.totalorder %s107, %s108
    %p122 = scmp.eq.s32.totalorder %s18, 3
    %p123 = por %p121, %p122
    %p125 = scmp.ne.s32.totalorder %s108, %s124
    %p126 = scmp.eq.s32.totalorder %s18, 0
    %p127 = por %p125, %p126
    %s128 = ssub.s32 %s19, %s31
    %p129 = scmp.eq.s32.totalorder %s128, 0
    %s131 = sadd.s32 %s130, 1
    %s132 = scalar_select %p129, %s130, %s131
    %p135 = pneg %p129
    %p136 = scmp.eq.s32.totalorder %s12, 3
    %p137 = por %p135, %p136
    %p138 = scmp.ne.s32.totalorder %s130, %s133
    %p139 = scmp.eq.s32.totalorder %s12, 0
    %p140 = por %p138, %p139
    %p141 = scmp.ne.s32.totalorder %s130, %s133
    %p142 = scmp.eq.s32.totalorder %s17, 3
    %p143 = por %p141, %p142
    %p144 = scmp.ne.s32.totalorder %s133, %s134
    %p145 = scmp.eq.s32.totalorder %s17, 0
    %p146 = por %p144, %p145
    %p147 = scmp.ne.s32.totalorder %s133, %s134
    %p148 = scmp.eq.s32.totalorder %s18, 3
    %p149 = por %p147, %p148
    %p151 = scmp.ne.s32.totalorder %s134, %s150
    %p152 = scmp.eq.s32.totalorder %s18, 0
    %p153 = por %p151, %p152
    %s154 = ssub.s32 %s19, %s31
    %p155 = scmp.eq.s32.totalorder %s154, 0
    %s157 = sadd.s32 %s156, 1
    %s158 = scalar_select %p155, %s156, %s157
    %p161 = pneg %p155
    %p162 = scmp.eq.s32.totalorder %s12, 3
    %p163 = por %p161, %p162
    %p164 = scmp.ne.s32.totalorder %s156, %s159
    %p165 = scmp.eq.s32.totalorder %s12, 0
    %p166 = por %p164, %p165
    %p167 = scmp.ne.s32.totalorder %s156, %s159
    %p168 = scmp.eq.s32.totalorder %s17, 3
    %p169 = por %p167, %p168
    %p170 = scmp.ne.s32.totalorder %s159, %s160
    %p171 = scmp.eq.s32.totalorder %s17, 0
    %p172 = por %p170, %p171
    %p173 = scmp.ne.s32.totalorder %s159, %s160
    %p174 = scmp.eq.s32.totalorder %s18, 3
    %p175 = por %p173, %p174
    %p177 = scmp.ne.s32.totalorder %s160, %s176
    %p178 = scmp.eq.s32.totalorder %s18, 0
    %p179 = por %p177, %p178
    %p180 = scmp.le.s32.totalorder 1, %s12
    %p181 = scmp.lt.s32.totalorder %s12, 5
    %p182 = pnand %p180, %p181
    %p183 = pneg %p182
    // Predicated region
    $region9: #{res_block_forward.2} parent=5 // pred_check
      _
    $region10: #{res_block_forward.2} parent=5 // pred_check_branch
      %185 = sbr.rel (%p182) target = $region12
    $region11: #{res_block_forward.2} parent=5 // pred_region
      %s186 = ssub.s32 %s12, 1
      // Predicated region
      $region13: #{res_block_forward.2} parent=11 // pred_check
        %p187 = pneg %p71
      $region14: #{res_block_forward.2} parent=11 // pred_check_branch
        %189 = sbr.rel (%p187) target = $region16
      $region15: #{res_block_forward.2} parent=11 // pred_region
        _
      $region16: #{res_block_forward.2} parent=11 // pred_fallthru
        _
      // Predicated region
      $region17: #{res_block_forward.2} parent=11 // pred_check
        %p190 = pneg %p92
      $region18: #{res_block_forward.2} parent=11 // pred_check_branch
        %192 = sbr.rel (%p190) target = $region20
      $region19: #{res_block_forward.2} parent=11 // pred_region
        _
      $region20: #{res_block_forward.2} parent=11 // pred_fallthru
        _
    $region12: #{res_block_forward.2} parent=5 // pred_fallthru
      _
    %p193 = scmp.lt.s32.totalorder %s12, 4
    // Predicated region
    $region21: #{res_block_forward.2} parent=5 // pred_check
      %p194 = pneg %p193
    $region22: #{res_block_forward.2} parent=5 // pred_check_branch
      %196 = sbr.rel (%p194) target = $region24
    $region23: #{res_block_forward.2} parent=5 // pred_region
      // Predicated region
      $region25: #{res_block_forward.2} parent=23 // pred_check
        %p197 = pneg %p44
      $region26: #{res_block_forward.2} parent=23 // pred_check_branch
        %199 = sbr.rel (%p197) target = $region28
      $region27: #{res_block_forward.2} parent=23 // pred_region
        %p200 = scmp.lt.s32.totalorder %s19, 1
        %s201 = scalar_select %p200, %s19, 1
        %s202 = smul.addr %s201, 32
        %s203 = smul.addr %s202, 8
        %s204 = scalar_lea.vmem %s0, %s203
      $region28: #{res_block_forward.2} parent=23 // pred_fallthru
        _
    $region24: #{res_block_forward.2} parent=5 // pred_fallthru
      _
    %p205 = scmp.le.s32.totalorder 1, %s12
    %p206 = scmp.lt.s32.totalorder %s12, 5
    %p207 = pnand %p205, %p206
    %p208 = pneg %p207
    // Predicated region
    $region29: #{res_block_forward.2} parent=5 // pred_check
      _
    $region30: #{res_block_forward.2} parent=5 // pred_check_branch
      %210 = sbr.rel (%p207) target = $region32
    $region31: #{res_block_forward.2} parent=5 // pred_region
      %s211 = ssub.s32 %s12, 1
      %p212 = scmp.lt.s32.totalorder %s21, 1
      %s213 = scalar_select %p212, %s21, 1
      %s214 = smul.addr %s213, 32
      %s215 = smul.addr %s214, 8
      %s216 = scalar_lea.vmem %s0, %s215
      %p217 = pneg %p50
      %p218 = pneg %p47
      %p219 = pneg %p71
      %p220 = pneg %p68
      %p221 = pneg %p92
      %p222 = pneg %p89
      %p223 = pneg %p120
      %p224 = pneg %p117
      %s225 = smul.u32 8, %s22
      %p226 = scmp.lt.s32.totalorder %s21, 1
      %s227 = scalar_select %p226, %s21, 1
      %p228 = scmp.lt.s32.totalorder %s225, 15
      %s229 = scalar_select %p228, %s225, 15
      %s230 = smul.addr %s229, 2
      %s231 = smul.addr %s227, 32
      %s232 = sadd.s32 %s230, %s231
      %s233 = smul.addr %s232, 8
      %s234 = scalar_lea.vmem %s3, %s233
      %p235 = pneg %p146
      %p236 = pneg %p143
      %p237 = scmp.lt.s32.totalorder %s21, 1
      %s238 = scalar_select %p237, %s21, 1
      %s239 = scalar_lea.vmem %s4, %s238
      %p240 = pneg %p172
      %p241 = pneg %p169
      %p242 = scmp.lt.s32.totalorder %s21, 1
      %s243 = scalar_select %p242, %s21, 1
      %s244 = scalar_lea.vmem %s5, %s243
      %p245 = scmp.lt.s32.totalorder %s21, 1
      %s246 = scalar_select %p245, %s21, 1
      %s247 = smul.addr %s246, 32
      %s248 = smul.addr %s247, 8
      %s249 = scalar_lea.vmem %s0, %s248
      %s250 = smul.u32 8, %s22
      %p251 = scmp.lt.s32.totalorder %s21, 1
      %s252 = scalar_select %p251, %s21, 1
      %p253 = scmp.lt.s32.totalorder %s250, 15
      %s254 = scalar_select %p253, %s250, 15
      %s255 = smul.addr %s254, 2
      %s256 = smul.addr %s252, 32
      %s257 = sadd.s32 %s255, %s256
      %s258 = smul.addr %s257, 8
      %s259 = scalar_lea.vmem %s3, %s258
      %s260 = smul.u32 8, %s22
      %p261 = scmp.lt.s32.totalorder %s21, 1
      %s262 = scalar_select %p261, %s21, 1
      %s263 = scalar_lea.vmem %s4, %s262
      %p264 = scmp.lt.s32.totalorder %s21, 1
      %s265 = scalar_select %p264, %s21, 1
      %s266 = scalar_lea.vmem %s5, %s265
      %p267 = scmp.eq.s32.totalorder %s22, 0
      // Predicated region
      $region33: #{res_block_forward.2} parent=31 // pred_check
        %p268 = pneg %p267
      $region34: #{res_block_forward.2} parent=31 // pred_check_branch
        %270 = sbr.rel (%p268) target = $region36
      $region35: #{res_block_forward.2} parent=31 // pred_region
        %271 = vst [vmem:[#allocation2] sm:$0xff] 0.0
        %vm272 = vcmask 261120
        %273 = vst.msk [vmem:[#allocation2 + $0x8] sm:$0xff] %vm272, 0.0
        %274 = vst [vmem:[#allocation2 + $0x10] sm:$0xff] 0.0
        %275 = vst.msk [vmem:[#allocation2 + $0x18] sm:$0xff] %vm272, 0.0
        %276 = vst [vmem:[#allocation2 + $0x20] sm:$0xff] 0.0
        %277 = vst.msk [vmem:[#allocation2 + $0x28] sm:$0xff] %vm272, 0.0
        %278 = vst [vmem:[#allocation2 + $0x30] sm:$0xff] 0.0
        %279 = vst.msk [vmem:[#allocation2 + $0x38] sm:$0xff] %vm272, 0.0
        %280 = vst [vmem:[#allocation2 + $0x40] sm:$0xff] 0.0
        %281 = vst.msk [vmem:[#allocation2 + $0x48] sm:$0xff] %vm272, 0.0
        %282 = vst [vmem:[#allocation2 + $0x50] sm:$0xff] 0.0
        %283 = vst.msk [vmem:[#allocation2 + $0x58] sm:$0xff] %vm272, 0.0
        %284 = vst [vmem:[#allocation2 + $0x60] sm:$0xff] 0.0
        %285 = vst.msk [vmem:[#allocation2 + $0x68] sm:$0xff] %vm272, 0.0
        %286 = vst [vmem:[#allocation2 + $0x70] sm:$0xff] 0.0
        %287 = vst.msk [vmem:[#allocation2 + $0x78] sm:$0xff] %vm272, 0.0
        %288 = vst [vmem:[#allocation2 + $0x80] sm:$0xff] 0.0
        %289 = vst.msk [vmem:[#allocation2 + $0x88] sm:$0xff] %vm272, 0.0
        %290 = vst [vmem:[#allocation2 + $0x90] sm:$0xff] 0.0
        %291 = vst.msk [vmem:[#allocation2 + $0x98] sm:$0xff] %vm272, 0.0
        %292 = vst [vmem:[#allocation2 + $0xa0] sm:$0xff] 0.0
        %293 = vst.msk [vmem:[#allocation2 + $0xa8] sm:$0xff] %vm272, 0.0
        %294 = vst [vmem:[#allocation2 + $0xb0] sm:$0xff] 0.0
        %295 = vst.msk [vmem:[#allocation2 + $0xb8] sm:$0xff] %vm272, 0.0
        %296 = vst [vmem:[#allocation2 + $0xc0] sm:$0xff] 0.0
        %297 = vst.msk [vmem:[#allocation2 + $0xc8] sm:$0xff] %vm272, 0.0
        %298 = vst [vmem:[#allocation2 + $0xd0] sm:$0xff] 0.0
        %299 = vst.msk [vmem:[#allocation2 + $0xd8] sm:$0xff] %vm272, 0.0
        %300 = vst [vmem:[#allocation2 + $0xe0] sm:$0xff] 0.0
        %301 = vst.msk [vmem:[#allocation2 + $0xe8] sm:$0xff] %vm272, 0.0
        %302 = vst [vmem:[#allocation2 + $0xf0] sm:$0xff] 0.0
        %303 = vst.msk [vmem:[#allocation2 + $0xf8] sm:$0xff] %vm272, 0.0
        %304 = vst [vmem:[#allocation2 + $0x100] sm:$0xff] 0.0
        %305 = vst.msk [vmem:[#allocation2 + $0x108] sm:$0xff] %vm272, 0.0
        %306 = vst [vmem:[#allocation2 + $0x110] sm:$0xff] 0.0
        %307 = vst.msk [vmem:[#allocation2 + $0x118] sm:$0xff] %vm272, 0.0
        %308 = vst [vmem:[#allocation2 + $0x120] sm:$0xff] 0.0
        %309 = vst.msk [vmem:[#allocation2 + $0x128] sm:$0xff] %vm272, 0.0
        %310 = vst [vmem:[#allocation2 + $0x130] sm:$0xff] 0.0
        %311 = vst.msk [vmem:[#allocation2 + $0x138] sm:$0xff] %vm272, 0.0
        %312 = vst [vmem:[#allocation2 + $0x140] sm:$0xff] 0.0
        %313 = vst.msk [vmem:[#allocation2 + $0x148] sm:$0xff] %vm272, 0.0
        %314 = vst [vmem:[#allocation2 + $0x150] sm:$0xff] 0.0
        %315 = vst.msk [vmem:[#allocation2 + $0x158] sm:$0xff] %vm272, 0.0
        %316 = vst [vmem:[#allocation2 + $0x160] sm:$0xff] 0.0
        %317 = vst.msk [vmem:[#allocation2 + $0x168] sm:$0xff] %vm272, 0.0
        %318 = vst [vmem:[#allocation2 + $0x170] sm:$0xff] 0.0
        %319 = vst.msk [vmem:[#allocation2 + $0x178] sm:$0xff] %vm272, 0.0
        %320 = vst [vmem:[#allocation2 + $0x180] sm:$0xff] 0.0
        %321 = vst.msk [vmem:[#allocation2 + $0x188] sm:$0xff] %vm272, 0.0
        %322 = vst [vmem:[#allocation2 + $0x190] sm:$0xff] 0.0
        %323 = vst.msk [vmem:[#allocation2 + $0x198] sm:$0xff] %vm272, 0.0
        %324 = vst [vmem:[#allocation2 + $0x1a0] sm:$0xff] 0.0
        %325 = vst.msk [vmem:[#allocation2 + $0x1a8] sm:$0xff] %vm272, 0.0
        %326 = vst [vmem:[#allocation2 + $0x1b0] sm:$0xff] 0.0
        %327 = vst.msk [vmem:[#allocation2 + $0x1b8] sm:$0xff] %vm272, 0.0
        %328 = vst [vmem:[#allocation2 + $0x1c0] sm:$0xff] 0.0
        %329 = vst.msk [vmem:[#allocation2 + $0x1c8] sm:$0xff] %vm272, 0.0
        %330 = vst [vmem:[#allocation2 + $0x1d0] sm:$0xff] 0.0
        %331 = vst.msk [vmem:[#allocation2 + $0x1d8] sm:$0xff] %vm272, 0.0
        %332 = vst [vmem:[#allocation2 + $0x1e0] sm:$0xff] 0.0
        %333 = vst.msk [vmem:[#allocation2 + $0x1e8] sm:$0xff] %vm272, 0.0
        %334 = vst [vmem:[#allocation2 + $0x1f0] sm:$0xff] 0.0
        %335 = vst.msk [vmem:[#allocation2 + $0x1f8] sm:$0xff] %vm272, 0.0
        %336 = vst [vmem:[#allocation2 + $0x200] sm:$0xff] 0.0
        %337 = vst.msk [vmem:[#allocation2 + $0x208] sm:$0xff] %vm272, 0.0
        %338 = vst [vmem:[#allocation2 + $0x210] sm:$0xff] 0.0
        %339 = vst.msk [vmem:[#allocation2 + $0x218] sm:$0xff] %vm272, 0.0
        %340 = vst [vmem:[#allocation2 + $0x220] sm:$0xff] 0.0
        %341 = vst.msk [vmem:[#allocation2 + $0x228] sm:$0xff] %vm272, 0.0
        %342 = vst [vmem:[#allocation2 + $0x230] sm:$0xff] 0.0
        %343 = vst.msk [vmem:[#allocation2 + $0x238] sm:$0xff] %vm272, 0.0
        %344 = vst [vmem:[#allocation2 + $0x240] sm:$0xff] 0.0
        %345 = vst.msk [vmem:[#allocation2 + $0x248] sm:$0xff] %vm272, 0.0
        %346 = vst [vmem:[#allocation2 + $0x250] sm:$0xff] 0.0
        %347 = vst.msk [vmem:[#allocation2 + $0x258] sm:$0xff] %vm272, 0.0
        %348 = vst [vmem:[#allocation2 + $0x260] sm:$0xff] 0.0
        %349 = vst.msk [vmem:[#allocation2 + $0x268] sm:$0xff] %vm272, 0.0
        %350 = vst [vmem:[#allocation2 + $0x270] sm:$0xff] 0.0
        %351 = vst.msk [vmem:[#allocation2 + $0x278] sm:$0xff] %vm272, 0.0
        %v352 = vld [vmem:[%s249] sm:$0xff]
        %v353 = vld [vmem:[%s249 + $0x8] sm:$0xff]
        %v354 = vld [vmem:[%s249 + $0x10] sm:$0xff]
        %v355 = vld [vmem:[%s249 + $0x18] sm:$0xff]
        %v356 = vld [vmem:[%s249 + $0x20] sm:$0xff]
        %v357 = vld [vmem:[%s249 + $0x28] sm:$0xff]
        %v358 = vld [vmem:[%s249 + $0x30] sm:$0xff]
        %v359 = vld [vmem:[%s249 + $0x38] sm:$0xff]
        %v360 = vld [vmem:[%s249 + $0x40] sm:$0xff]
        %v361 = vld [vmem:[%s249 + $0x48] sm:$0xff]
        %v362 = vld [vmem:[%s249 + $0x50] sm:$0xff]
        %v363 = vld [vmem:[%s249 + $0x58] sm:$0xff]
        %v364 = vld [vmem:[%s249 + $0x60] sm:$0xff]
        %v365 = vld [vmem:[%s249 + $0x68] sm:$0xff]
        %v366 = vld [vmem:[%s249 + $0x70] sm:$0xff]
        %v367 = vld [vmem:[%s249 + $0x78] sm:$0xff]
        %v368 = vld [vmem:[%s249 + $0x80] sm:$0xff]
        %v369 = vld [vmem:[%s249 + $0x88] sm:$0xff]
        %v370 = vld [vmem:[%s249 + $0x90] sm:$0xff]
        %v371 = vld [vmem:[%s249 + $0x98] sm:$0xff]
        %v372 = vld [vmem:[%s249 + $0xa0] sm:$0xff]
        %v373 = vld [vmem:[%s249 + $0xa8] sm:$0xff]
        %v374 = vld [vmem:[%s249 + $0xb0] sm:$0xff]
        %v375 = vld [vmem:[%s249 + $0xb8] sm:$0xff]
        %v376 = vld [vmem:[%s249 + $0xc0] sm:$0xff]
        %v377 = vld [vmem:[%s249 + $0xc8] sm:$0xff]
        %v378 = vld [vmem:[%s249 + $0xd0] sm:$0xff]
        %v379 = vld [vmem:[%s249 + $0xd8] sm:$0xff]
        %v380 = vld [vmem:[%s249 + $0xe0] sm:$0xff]
        %v381 = vld [vmem:[%s249 + $0xe8] sm:$0xff]
        %v382 = vld [vmem:[%s249 + $0xf0] sm:$0xff]
        %v383 = vld [vmem:[%s249 + $0xf8] sm:$0xff]
        %vm416 = vcmask 1041408
        %v417 = vrot.slane %v352, 6
        %v418 = vrot.slane %v353, 6
        %v419 = vsel %vm416, %v417, %v418
        %v420 = vrot.slane %v354, 6
        %v421 = vrot.slane %v355, 6
        %v422 = vsel %vm416, %v420, %v421
        %v423 = vrot.slane %v356, 6
        %v424 = vrot.slane %v357, 6
        %v425 = vsel %vm416, %v423, %v424
        %v426 = vrot.slane %v358, 6
        %v427 = vrot.slane %v359, 6
        %v428 = vsel %vm416, %v426, %v427
        %v429 = vrot.slane %v360, 6
        %v430 = vrot.slane %v361, 6
        %v431 = vsel %vm416, %v429, %v430
        %v432 = vrot.slane %v362, 6
        %v433 = vrot.slane %v363, 6
        %v434 = vsel %vm416, %v432, %v433
        %v435 = vrot.slane %v364, 6
        %v436 = vrot.slane %v365, 6
        %v437 = vsel %vm416, %v435, %v436
        %v438 = vrot.slane %v366, 6
        %v439 = vrot.slane %v367, 6
        %v440 = vsel %vm416, %v438, %v439
        %v441 = vrot.slane %v368, 6
        %v442 = vrot.slane %v369, 6
        %v443 = vsel %vm416, %v441, %v442
        %v444 = vrot.slane %v370, 6
        %v445 = vrot.slane %v371, 6
        %v446 = vsel %vm416, %v444, %v445
        %v447 = vrot.slane %v372, 6
        %v448 = vrot.slane %v373, 6
        %v449 = vsel %vm416, %v447, %v448
        %v450 = vrot.slane %v374, 6
        %v451 = vrot.slane %v375, 6
        %v452 = vsel %vm416, %v450, %v451
        %v453 = vrot.slane %v376, 6
        %v454 = vrot.slane %v377, 6
        %v455 = vsel %vm416, %v453, %v454
        %v456 = vrot.slane %v378, 6
        %v457 = vrot.slane %v379, 6
        %v458 = vsel %vm416, %v456, %v457
        %v459 = vrot.slane %v380, 6
        %v460 = vrot.slane %v381, 6
        %v461 = vsel %vm416, %v459, %v460
        %v462 = vrot.slane %v382, 6
        %v463 = vrot.slane %v383, 6
        %v464 = vsel %vm416, %v462, %v463
        %s497 = scalar_lea.vmem [#allocation2], 64
        %vm498 = vcmask 261122
        %499 = vst.msk [vmem:[%s497] sm:$0xfc] %vm498, %v417
        %500 = vst.msk [vmem:[%s497 + $0x10] sm:$0xff] %vm272, %v419
        %501 = vst.msk [vmem:[%s497 + $0x20] sm:$0xfc] %vm498, %v420
        %502 = vst.msk [vmem:[%s497 + $0x30] sm:$0xff] %vm272, %v422
        %503 = vst.msk [vmem:[%s497 + $0x40] sm:$0xfc] %vm498, %v423
        %504 = vst.msk [vmem:[%s497 + $0x50] sm:$0xff] %vm272, %v425
        %505 = vst.msk [vmem:[%s497 + $0x60] sm:$0xfc] %vm498, %v426
        %506 = vst.msk [vmem:[%s497 + $0x70] sm:$0xff] %vm272, %v428
        %507 = vst.msk [vmem:[%s497 + $0x80] sm:$0xfc] %vm498, %v429
        %508 = vst.msk [vmem:[%s497 + $0x90] sm:$0xff] %vm272, %v431
        %509 = vst.msk [vmem:[%s497 + $0xa0] sm:$0xfc] %vm498, %v432
        %510 = vst.msk [vmem:[%s497 + $0xb0] sm:$0xff] %vm272, %v434
        %511 = vst.msk [vmem:[%s497 + $0xc0] sm:$0xfc] %vm498, %v435
        %512 = vst.msk [vmem:[%s497 + $0xd0] sm:$0xff] %vm272, %v437
        %513 = vst.msk [vmem:[%s497 + $0xe0] sm:$0xfc] %vm498, %v438
        %514 = vst.msk [vmem:[%s497 + $0xf0] sm:$0xff] %vm272, %v440
        %515 = vst.msk [vmem:[%s497 + $0x100] sm:$0xfc] %vm498, %v441
        %516 = vst.msk [vmem:[%s497 + $0x110] sm:$0xff] %vm272, %v443
        %517 = vst.msk [vmem:[%s497 + $0x120] sm:$0xfc] %vm498, %v444
        %518 = vst.msk [vmem:[%s497 + $0x130] sm:$0xff] %vm272, %v446
        %519 = vst.msk [vmem:[%s497 + $0x140] sm:$0xfc] %vm498, %v447
        %520 = vst.msk [vmem:[%s497 + $0x150] sm:$0xff] %vm272, %v449
        %521 = vst.msk [vmem:[%s497 + $0x160] sm:$0xfc] %vm498, %v450
        %522 = vst.msk [vmem:[%s497 + $0x170] sm:$0xff] %vm272, %v452
        %523 = vst.msk [vmem:[%s497 + $0x180] sm:$0xfc] %vm498, %v453
        %524 = vst.msk [vmem:[%s497 + $0x190] sm:$0xff] %vm272, %v455
        %525 = vst.msk [vmem:[%s497 + $0x1a0] sm:$0xfc] %vm498, %v456
        %526 = vst.msk [vmem:[%s497 + $0x1b0] sm:$0xff] %vm272, %v458
        %527 = vst.msk [vmem:[%s497 + $0x1c0] sm:$0xfc] %vm498, %v459
        %528 = vst.msk [vmem:[%s497 + $0x1d0] sm:$0xff] %vm272, %v461
        %529 = vst.msk [vmem:[%s497 + $0x1e0] sm:$0xfc] %vm498, %v462
        %530 = vst.msk [vmem:[%s497 + $0x1f0] sm:$0xff] %vm272, %v464
        %vm531 = vcmask 1040384
        %v532 = vrot.slane %v352, 7
        %v533 = vrot.slane %v353, 7
        %v534 = vsel %vm531, %v532, %v533
        %v535 = vrot.slane %v354, 7
        %v536 = vrot.slane %v355, 7
        %v537 = vsel %vm531, %v535, %v536
        %v538 = vrot.slane %v356, 7
        %v539 = vrot.slane %v357, 7
        %v540 = vsel %vm531, %v538, %v539
        %v541 = vrot.slane %v358, 7
        %v542 = vrot.slane %v359, 7
        %v543 = vsel %vm531, %v541, %v542
        %v544 = vrot.slane %v360, 7
        %v545 = vrot.slane %v361, 7
        %v546 = vsel %vm531, %v544, %v545
        %v547 = vrot.slane %v362, 7
        %v548 = vrot.slane %v363, 7
        %v549 = vsel %vm531, %v547, %v548
        %v550 = vrot.slane %v364, 7
        %v551 = vrot.slane %v365, 7
        %v552 = vsel %vm531, %v550, %v551
        %v553 = vrot.slane %v366, 7
        %v554 = vrot.slane %v367, 7
        %v555 = vsel %vm531, %v553, %v554
        %v556 = vrot.slane %v368, 7
        %v557 = vrot.slane %v369, 7
        %v558 = vsel %vm531, %v556, %v557
        %v559 = vrot.slane %v370, 7
        %v560 = vrot.slane %v371, 7
        %v561 = vsel %vm531, %v559, %v560
        %v562 = vrot.slane %v372, 7
        %v563 = vrot.slane %v373, 7
        %v564 = vsel %vm531, %v562, %v563
        %v565 = vrot.slane %v374, 7
        %v566 = vrot.slane %v375, 7
        %v567 = vsel %vm531, %v565, %v566
        %v568 = vrot.slane %v376, 7
        %v569 = vrot.slane %v377, 7
        %v570 = vsel %vm531, %v568, %v569
        %v571 = vrot.slane %v378, 7
        %v572 = vrot.slane %v379, 7
        %v573 = vsel %vm531, %v571, %v572
        %v574 = vrot.slane %v380, 7
        %v575 = vrot.slane %v381, 7
        %v576 = vsel %vm531, %v574, %v575
        %v577 = vrot.slane %v382, 7
        %v578 = vrot.slane %v383, 7
        %v579 = vsel %vm531, %v577, %v578
        %580 = vrot.lane.b32.xlu0 %v532, 32
        %v581 = vpop.permute.xlu0 %580
        %582 = vrot.lane.b32.xlu0 %v534, 32
        %v583 = vpop.permute.xlu0 %582
        %584 = vrot.lane.b32.xlu0 %v535, 32
        %v585 = vpop.permute.xlu0 %584
        %586 = vrot.lane.b32.xlu0 %v537, 32
        %v587 = vpop.permute.xlu0 %586
        %588 = vrot.lane.b32.xlu0 %v538, 32
        %v589 = vpop.permute.xlu0 %588
        %590 = vrot.lane.b32.xlu0 %v540, 32
        %v591 = vpop.permute.xlu0 %590
        %592 = vrot.lane.b32.xlu0 %v541, 32
        %v593 = vpop.permute.xlu0 %592
        %594 = vrot.lane.b32.xlu0 %v543, 32
        %v595 = vpop.permute.xlu0 %594
        %596 = vrot.lane.b32.xlu0 %v544, 32
        %v597 = vpop.permute.xlu0 %596
        %598 = vrot.lane.b32.xlu0 %v546, 32
        %v599 = vpop.permute.xlu0 %598
        %600 = vrot.lane.b32.xlu0 %v547, 32
        %v601 = vpop.permute.xlu0 %600
        %602 = vrot.lane.b32.xlu0 %v549, 32
        %v603 = vpop.permute.xlu0 %602
        %604 = vrot.lane.b32.xlu0 %v550, 32
        %v605 = vpop.permute.xlu0 %604
        %606 = vrot.lane.b32.xlu0 %v552, 32
        %v607 = vpop.permute.xlu0 %606
        %608 = vrot.lane.b32.xlu0 %v553, 32
        %v609 = vpop.permute.xlu0 %608
        %610 = vrot.lane.b32.xlu0 %v555, 32
        %v611 = vpop.permute.xlu0 %610
        %612 = vrot.lane.b32.xlu0 %v556, 32
        %v613 = vpop.permute.xlu0 %612
        %614 = vrot.lane.b32.xlu0 %v558, 32
        %v615 = vpop.permute.xlu0 %614
        %616 = vrot.lane.b32.xlu0 %v559, 32
        %v617 = vpop.permute.xlu0 %616
        %618 = vrot.lane.b32.xlu0 %v561, 32
        %v619 = vpop.permute.xlu0 %618
        %620 = vrot.lane.b32.xlu0 %v562, 32
        %v621 = vpop.permute.xlu0 %620
        %622 = vrot.lane.b32.xlu0 %v564, 32
        %v623 = vpop.permute.xlu0 %622
        %624 = vrot.lane.b32.xlu0 %v565, 32
        %v625 = vpop.permute.xlu0 %624
        %626 = vrot.lane.b32.xlu0 %v567, 32
        %v627 = vpop.permute.xlu0 %626
        %628 = vrot.lane.b32.xlu0 %v568, 32
        %v629 = vpop.permute.xlu0 %628
        %630 = vrot.lane.b32.xlu0 %v570, 32
        %v631 = vpop.permute.xlu0 %630
        %632 = vrot.lane.b32.xlu0 %v571, 32
        %v633 = vpop.permute.xlu0 %632
        %634 = vrot.lane.b32.xlu0 %v573, 32
        %v635 = vpop.permute.xlu0 %634
        %636 = vrot.lane.b32.xlu0 %v574, 32
        %v637 = vpop.permute.xlu0 %636
        %638 = vrot.lane.b32.xlu0 %v576, 32
        %v639 = vpop.permute.xlu0 %638
        %640 = vrot.lane.b32.xlu0 %v577, 32
        %v641 = vpop.permute.xlu0 %640
        %642 = vrot.lane.b32.xlu0 %v579, 32
        %v643 = vpop.permute.xlu0 %642
        %vm676 = vcmask 523521
        %677 = vst.msk [vmem:[%s497] sm:$0xfe] %vm676, %v581
        %vm678 = vcmask 523520
        %679 = vst.msk [vmem:[%s497 + $0x10] sm:$0xff] %vm678, %v583
        %680 = vst.msk [vmem:[%s497 + $0x20] sm:$0xfe] %vm676, %v585
        %681 = vst.msk [vmem:[%s497 + $0x30] sm:$0xff] %vm678, %v587
        %682 = vst.msk [vmem:[%s497 + $0x40] sm:$0xfe] %vm676, %v589
        %683 = vst.msk [vmem:[%s497 + $0x50] sm:$0xff] %vm678, %v591
        %684 = vst.msk [vmem:[%s497 + $0x60] sm:$0xfe] %vm676, %v593
        %685 = vst.msk [vmem:[%s497 + $0x70] sm:$0xff] %vm678, %v595
        %686 = vst.msk [vmem:[%s497 + $0x80] sm:$0xfe] %vm676, %v597
        %687 = vst.msk [vmem:[%s497 + $0x90] sm:$0xff] %vm678, %v599
        %688 = vst.msk [vmem:[%s497 + $0xa0] sm:$0xfe] %vm676, %v601
        %689 = vst.msk [vmem:[%s497 + $0xb0] sm:$0xff] %vm678, %v603
        %690 = vst.msk [vmem:[%s497 + $0xc0] sm:$0xfe] %vm676, %v605
        %691 = vst.msk [vmem:[%s497 + $0xd0] sm:$0xff] %vm678, %v607
        %692 = vst.msk [vmem:[%s497 + $0xe0] sm:$0xfe] %vm676, %v609
        %693 = vst.msk [vmem:[%s497 + $0xf0] sm:$0xff] %vm678, %v611
        %694 = vst.msk [vmem:[%s497 + $0x100] sm:$0xfe] %vm676, %v613
        %695 = vst.msk [vmem:[%s497 + $0x110] sm:$0xff] %vm678, %v615
        %696 = vst.msk [vmem:[%s497 + $0x120] sm:$0xfe] %vm676, %v617
        %697 = vst.msk [vmem:[%s497 + $0x130] sm:$0xff] %vm678, %v619
        %698 = vst.msk [vmem:[%s497 + $0x140] sm:$0xfe] %vm676, %v621
        %699 = vst.msk [vmem:[%s497 + $0x150] sm:$0xff] %vm678, %v623
        %700 = vst.msk [vmem:[%s497 + $0x160] sm:$0xfe] %vm676, %v625
        %701 = vst.msk [vmem:[%s497 + $0x170] sm:$0xff] %vm678, %v627
        %702 = vst.msk [vmem:[%s497 + $0x180] sm:$0xfe] %vm676, %v629
        %703 = vst.msk [vmem:[%s497 + $0x190] sm:$0xff] %vm678, %v631
        %704 = vst.msk [vmem:[%s497 + $0x1a0] sm:$0xfe] %vm676, %v633
        %705 = vst.msk [vmem:[%s497 + $0x1b0] sm:$0xff] %vm678, %v635
        %706 = vst.msk [vmem:[%s497 + $0x1c0] sm:$0xfe] %vm676, %v637
        %707 = vst.msk [vmem:[%s497 + $0x1d0] sm:$0xff] %vm678, %v639
        %708 = vst.msk [vmem:[%s497 + $0x1e0] sm:$0xfe] %vm676, %v641
        %709 = vst.msk [vmem:[%s497 + $0x1f0] sm:$0xff] %vm678, %v643
        %710 = vrot.lane.b32.xlu0 %v352, 64
        %v711 = vpop.permute.xlu0 %710
        %712 = vrot.lane.b32.xlu0 %v353, 64
        %v713 = vpop.permute.xlu0 %712
        %714 = vrot.lane.b32.xlu0 %v354, 64
        %v715 = vpop.permute.xlu0 %714
        %716 = vrot.lane.b32.xlu0 %v355, 64
        %v717 = vpop.permute.xlu0 %716
        %718 = vrot.lane.b32.xlu0 %v356, 64
        %v719 = vpop.permute.xlu0 %718
        %720 = vrot.lane.b32.xlu0 %v357, 64
        %v721 = vpop.permute.xlu0 %720
        %722 = vrot.lane.b32.xlu0 %v358, 64
        %v723 = vpop.permute.xlu0 %722
        %724 = vrot.lane.b32.xlu0 %v359, 64
        %v725 = vpop.permute.xlu0 %724
        %726 = vrot.lane.b32.xlu0 %v360, 64
        %v727 = vpop.permute.xlu0 %726
        %728 = vrot.lane.b32.xlu0 %v361, 64
        %v729 = vpop.permute.xlu0 %728
        %730 = vrot.lane.b32.xlu0 %v362, 64
        %v731 = vpop.permute.xlu0 %730
        %732 = vrot.lane.b32.xlu0 %v363, 64
        %v733 = vpop.permute.xlu0 %732
        %734 = vrot.lane.b32.xlu0 %v364, 64
        %v735 = vpop.permute.xlu0 %734
        %736 = vrot.lane.b32.xlu0 %v365, 64
        %v737 = vpop.permute.xlu0 %736
        %738 = vrot.lane.b32.xlu0 %v366, 64
        %v739 = vpop.permute.xlu0 %738
        %740 = vrot.lane.b32.xlu0 %v367, 64
        %v741 = vpop.permute.xlu0 %740
        %742 = vrot.lane.b32.xlu0 %v368, 64
        %v743 = vpop.permute.xlu0 %742
        %744 = vrot.lane.b32.xlu0 %v369, 64
        %v745 = vpop.permute.xlu0 %744
        %746 = vrot.lane.b32.xlu0 %v370, 64
        %v747 = vpop.permute.xlu0 %746
        %748 = vrot.lane.b32.xlu0 %v371, 64
        %v749 = vpop.permute.xlu0 %748
        %750 = vrot.lane.b32.xlu0 %v372, 64
        %v751 = vpop.permute.xlu0 %750
        %752 = vrot.lane.b32.xlu0 %v373, 64
        %v753 = vpop.permute.xlu0 %752
        %754 = vrot.lane.b32.xlu0 %v374, 64
        %v755 = vpop.permute.xlu0 %754
        %756 = vrot.lane.b32.xlu0 %v375, 64
        %v757 = vpop.permute.xlu0 %756
        %758 = vrot.lane.b32.xlu0 %v376, 64
        %v759 = vpop.permute.xlu0 %758
        %760 = vrot.lane.b32.xlu0 %v377, 64
        %v761 = vpop.permute.xlu0 %760
        %762 = vrot.lane.b32.xlu0 %v378, 64
        %v763 = vpop.permute.xlu0 %762
        %764 = vrot.lane.b32.xlu0 %v379, 64
        %v765 = vpop.permute.xlu0 %764
        %766 = vrot.lane.b32.xlu0 %v380, 64
        %v767 = vpop.permute.xlu0 %766
        %768 = vrot.lane.b32.xlu0 %v381, 64
        %v769 = vpop.permute.xlu0 %768
        %770 = vrot.lane.b32.xlu0 %v382, 64
        %v771 = vpop.permute.xlu0 %770
        %772 = vrot.lane.b32.xlu0 %v383, 64
        %v773 = vpop.permute.xlu0 %772
        %vm806 = vcmask 785920
        %807 = vst.msk [vmem:[%s497] sm:$0xff] %vm806, %v711
        %808 = vst.msk [vmem:[%s497 + $0x10] sm:$0xff] %vm806, %v713
        %809 = vst.msk [vmem:[%s497 + $0x20] sm:$0xff] %vm806, %v715
        %810 = vst.msk [vmem:[%s497 + $0x30] sm:$0xff] %vm806, %v717
        %811 = vst.msk [vmem:[%s497 + $0x40] sm:$0xff] %vm806, %v719
        %812 = vst.msk [vmem:[%s497 + $0x50] sm:$0xff] %vm806, %v721
        %813 = vst.msk [vmem:[%s497 + $0x60] sm:$0xff] %vm806, %v723
        %814 = vst.msk [vmem:[%s497 + $0x70] sm:$0xff] %vm806, %v725
        %815 = vst.msk [vmem:[%s497 + $0x80] sm:$0xff] %vm806, %v727
        %816 = vst.msk [vmem:[%s497 + $0x90] sm:$0xff] %vm806, %v729
        %817 = vst.msk [vmem:[%s497 + $0xa0] sm:$0xff] %vm806, %v731
        %818 = vst.msk [vmem:[%s497 + $0xb0] sm:$0xff] %vm806, %v733
        %819 = vst.msk [vmem:[%s497 + $0xc0] sm:$0xff] %vm806, %v735
        %820 = vst.msk [vmem:[%s497 + $0xd0] sm:$0xff] %vm806, %v737
        %821 = vst.msk [vmem:[%s497 + $0xe0] sm:$0xff] %vm806, %v739
        %822 = vst.msk [vmem:[%s497 + $0xf0] sm:$0xff] %vm806, %v741
        %823 = vst.msk [vmem:[%s497 + $0x100] sm:$0xff] %vm806, %v743
        %824 = vst.msk [vmem:[%s497 + $0x110] sm:$0xff] %vm806, %v745
        %825 = vst.msk [vmem:[%s497 + $0x120] sm:$0xff] %vm806, %v747
        %826 = vst.msk [vmem:[%s497 + $0x130] sm:$0xff] %vm806, %v749
        %827 = vst.msk [vmem:[%s497 + $0x140] sm:$0xff] %vm806, %v751
        %828 = vst.msk [vmem:[%s497 + $0x150] sm:$0xff] %vm806, %v753
        %829 = vst.msk [vmem:[%s497 + $0x160] sm:$0xff] %vm806, %v755
        %830 = vst.msk [vmem:[%s497 + $0x170] sm:$0xff] %vm806, %v757
        %831 = vst.msk [vmem:[%s497 + $0x180] sm:$0xff] %vm806, %v759
        %832 = vst.msk [vmem:[%s497 + $0x190] sm:$0xff] %vm806, %v761
        %833 = vst.msk [vmem:[%s497 + $0x1a0] sm:$0xff] %vm806, %v763
        %834 = vst.msk [vmem:[%s497 + $0x1b0] sm:$0xff] %vm806, %v765
        %835 = vst.msk [vmem:[%s497 + $0x1c0] sm:$0xff] %vm806, %v767
        %836 = vst.msk [vmem:[%s497 + $0x1d0] sm:$0xff] %vm806, %v769
        %837 = vst.msk [vmem:[%s497 + $0x1e0] sm:$0xff] %vm806, %v771
        %838 = vst.msk [vmem:[%s497 + $0x1f0] sm:$0xff] %vm806, %v773
        %vm839 = vcmask 1046528
        %v840 = vrot.slane %v352, 1
        %v841 = vrot.slane %v353, 1
        %v842 = vsel %vm839, %v840, %v841
        %v843 = vrot.slane %v354, 1
        %v844 = vrot.slane %v355, 1
        %v845 = vsel %vm839, %v843, %v844
        %v846 = vrot.slane %v356, 1
        %v847 = vrot.slane %v357, 1
        %v848 = vsel %vm839, %v846, %v847
        %v849 = vrot.slane %v358, 1
        %v850 = vrot.slane %v359, 1
        %v851 = vsel %vm839, %v849, %v850
        %v852 = vrot.slane %v360, 1
        %v853 = vrot.slane %v361, 1
        %v854 = vsel %vm839, %v852, %v853
        %v855 = vrot.slane %v362, 1
        %v856 = vrot.slane %v363, 1
        %v857 = vsel %vm839, %v855, %v856
        %v858 = vrot.slane %v364, 1
        %v859 = vrot.slane %v365, 1
        %v860 = vsel %vm839, %v858, %v859
        %v861 = vrot.slane %v366, 1
        %v862 = vrot.slane %v367, 1
        %v863 = vsel %vm839, %v861, %v862
        %v864 = vrot.slane %v368, 1
        %v865 = vrot.slane %v369, 1
        %v866 = vsel %vm839, %v864, %v865
        %v867 = vrot.slane %v370, 1
        %v868 = vrot.slane %v371, 1
        %v869 = vsel %vm839, %v867, %v868
        %v870 = vrot.slane %v372, 1
        %v871 = vrot.slane %v373, 1
        %v872 = vsel %vm839, %v870, %v871
        %v873 = vrot.slane %v374, 1
        %v874 = vrot.slane %v375, 1
        %v875 = vsel %vm839, %v873, %v874
        %v876 = vrot.slane %v376, 1
        %v877 = vrot.slane %v377, 1
        %v878 = vsel %vm839, %v876, %v877
        %v879 = vrot.slane %v378, 1
        %v880 = vrot.slane %v379, 1
        %v881 = vsel %vm839, %v879, %v880
        %v882 = vrot.slane %v380, 1
        %v883 = vrot.slane %v381, 1
        %v884 = vsel %vm839, %v882, %v883
        %v885 = vrot.slane %v382, 1
        %v886 = vrot.slane %v383, 1
        %v887 = vsel %vm839, %v885, %v886
        %888 = vrot.lane.b32.xlu0 %v842, 96
        %v889 = vpop.permute.xlu0 %888
        %890 = vrot.lane.b32.xlu0 %v841, 96
        %v891 = vpop.permute.xlu0 %890
        %892 = vrot.lane.b32.xlu0 %v845, 96
        %v893 = vpop.permute.xlu0 %892
        %894 = vrot.lane.b32.xlu0 %v844, 96
        %v895 = vpop.permute.xlu0 %894
        %896 = vrot.lane.b32.xlu0 %v848, 96
        %v897 = vpop.permute.xlu0 %896
        %898 = vrot.lane.b32.xlu0 %v847, 96
        %v899 = vpop.permute.xlu0 %898
        %900 = vrot.lane.b32.xlu0 %v851, 96
        %v901 = vpop.permute.xlu0 %900
        %902 = vrot.lane.b32.xlu0 %v850, 96
        %v903 = vpop.permute.xlu0 %902
        %904 = vrot.lane.b32.xlu0 %v854, 96
        %v905 = vpop.permute.xlu0 %904
        %906 = vrot.lane.b32.xlu0 %v853, 96
        %v907 = vpop.permute.xlu0 %906
        %908 = vrot.lane.b32.xlu0 %v857, 96
        %v909 = vpop.permute.xlu0 %908
        %910 = vrot.lane.b32.xlu0 %v856, 96
        %v911 = vpop.permute.xlu0 %910
        %912 = vrot.lane.b32.xlu0 %v860, 96
        %v913 = vpop.permute.xlu0 %912
        %914 = vrot.lane.b32.xlu0 %v859, 96
        %v915 = vpop.permute.xlu0 %914
        %916 = vrot.lane.b32.xlu0 %v863, 96
        %v917 = vpop.permute.xlu0 %916
        %918 = vrot.lane.b32.xlu0 %v862, 96
        %v919 = vpop.permute.xlu0 %918
        %920 = vrot.lane.b32.xlu0 %v866, 96
        %v921 = vpop.permute.xlu0 %920
        %922 = vrot.lane.b32.xlu0 %v865, 96
        %v923 = vpop.permute.xlu0 %922
        %924 = vrot.lane.b32.xlu0 %v869, 96
        %v925 = vpop.permute.xlu0 %924
        %926 = vrot.lane.b32.xlu0 %v868, 96
        %v927 = vpop.permute.xlu0 %926
        %928 = vrot.lane.b32.xlu0 %v872, 96
        %v929 = vpop.permute.xlu0 %928
        %930 = vrot.lane.b32.xlu0 %v871, 96
        %v931 = vpop.permute.xlu0 %930
        %932 = vrot.lane.b32.xlu0 %v875, 96
        %v933 = vpop.permute.xlu0 %932
        %934 = vrot.lane.b32.xlu0 %v874, 96
        %v935 = vpop.permute.xlu0 %934
        %936 = vrot.lane.b32.xlu0 %v878, 96
        %v937 = vpop.permute.xlu0 %936
        %938 = vrot.lane.b32.xlu0 %v877, 96
        %v939 = vpop.permute.xlu0 %938
        %940 = vrot.lane.b32.xlu0 %v881, 96
        %v941 = vpop.permute.xlu0 %940
        %942 = vrot.lane.b32.xlu0 %v880, 96
        %v943 = vpop.permute.xlu0 %942
        %944 = vrot.lane.b32.xlu0 %v884, 96
        %v945 = vpop.permute.xlu0 %944
        %946 = vrot.lane.b32.xlu0 %v883, 96
        %v947 = vpop.permute.xlu0 %946
        %948 = vrot.lane.b32.xlu0 %v887, 96
        %v949 = vpop.permute.xlu0 %948
        %950 = vrot.lane.b32.xlu0 %v886, 96
        %v951 = vpop.permute.xlu0 %950
        %vm984 = vcmask 1048320
        %985 = vst.msk [vmem:[%s497] sm:$0xff] %vm984, %v889
        %vm986 = vcmask 1047296
        %987 = vst.msk [vmem:[%s497 + $0x10] sm:$0x7f] %vm986, %v891
        %988 = vst.msk [vmem:[%s497 + $0x20] sm:$0xff] %vm984, %v893
        %989 = vst.msk [vmem:[%s497 + $0x30] sm:$0x7f] %vm986, %v895
        %990 = vst.msk [vmem:[%s497 + $0x40] sm:$0xff] %vm984, %v897
        %991 = vst.msk [vmem:[%s497 + $0x50] sm:$0x7f] %vm986, %v899
        %992 = vst.msk [vmem:[%s497 + $0x60] sm:$0xff] %vm984, %v901
        %993 = vst.msk [vmem:[%s497 + $0x70] sm:$0x7f] %vm986, %v903
        %994 = vst.msk [vmem:[%s497 + $0x80] sm:$0xff] %vm984, %v905
        %995 = vst.msk [vmem:[%s497 + $0x90] sm:$0x7f] %vm986, %v907
        %996 = vst.msk [vmem:[%s497 + $0xa0] sm:$0xff] %vm984, %v909
        %997 = vst.msk [vmem:[%s497 + $0xb0] sm:$0x7f] %vm986, %v911
        %998 = vst.msk [vmem:[%s497 + $0xc0] sm:$0xff] %vm984, %v913
        %999 = vst.msk [vmem:[%s497 + $0xd0] sm:$0x7f] %vm986, %v915
        %1000 = vst.msk [vmem:[%s497 + $0xe0] sm:$0xff] %vm984, %v917
        %1001 = vst.msk [vmem:[%s497 + $0xf0] sm:$0x7f] %vm986, %v919
        %1002 = vst.msk [vmem:[%s497 + $0x100] sm:$0xff] %vm984, %v921
        %1003 = vst.msk [vmem:[%s497 + $0x110] sm:$0x7f] %vm986, %v923
        %1004 = vst.msk [vmem:[%s497 + $0x120] sm:$0xff] %vm984, %v925
        %1005 = vst.msk [vmem:[%s497 + $0x130] sm:$0x7f] %vm986, %v927
        %1006 = vst.msk [vmem:[%s497 + $0x140] sm:$0xff] %vm984, %v929
        %1007 = vst.msk [vmem:[%s497 + $0x150] sm:$0x7f] %vm986, %v931
        %1008 = vst.msk [vmem:[%s497 + $0x160] sm:$0xff] %vm984, %v933
        %1009 = vst.msk [vmem:[%s497 + $0x170] sm:$0x7f] %vm986, %v935
        %1010 = vst.msk [vmem:[%s497 + $0x180] sm:$0xff] %vm984, %v937
        %1011 = vst.msk [vmem:[%s497 + $0x190] sm:$0x7f] %vm986, %v939
        %1012 = vst.msk [vmem:[%s497 + $0x1a0] sm:$0xff] %vm984, %v941
        %1013 = vst.msk [vmem:[%s497 + $0x1b0] sm:$0x7f] %vm986, %v943
        %1014 = vst.msk [vmem:[%s497 + $0x1c0] sm:$0xff] %vm984, %v945
        %1015 = vst.msk [vmem:[%s497 + $0x1d0] sm:$0x7f] %vm986, %v947
        %1016 = vst.msk [vmem:[%s497 + $0x1e0] sm:$0xff] %vm984, %v949
        %1017 = vst.msk [vmem:[%s497 + $0x1f0] sm:$0x7f] %vm986, %v951
        %vm1018 = vcmask 1045504
        %v1019 = vrot.slane %v352, 2
        %v1020 = vrot.slane %v353, 2
        %v1021 = vsel %vm1018, %v1019, %v1020
        %v1022 = vrot.slane %v354, 2
        %v1023 = vrot.slane %v355, 2
        %v1024 = vsel %vm1018, %v1022, %v1023
        %v1025 = vrot.slane %v356, 2
        %v1026 = vrot.slane %v357, 2
        %v1027 = vsel %vm1018, %v1025, %v1026
        %v1028 = vrot.slane %v358, 2
        %v1029 = vrot.slane %v359, 2
        %v1030 = vsel %vm1018, %v1028, %v1029
        %v1031 = vrot.slane %v360, 2
        %v1032 = vrot.slane %v361, 2
        %v1033 = vsel %vm1018, %v1031, %v1032
        %v1034 = vrot.slane %v362, 2
        %v1035 = vrot.slane %v363, 2
        %v1036 = vsel %vm1018, %v1034, %v1035
        %v1037 = vrot.slane %v364, 2
        %v1038 = vrot.slane %v365, 2
        %v1039 = vsel %vm1018, %v1037, %v1038
        %v1040 = vrot.slane %v366, 2
        %v1041 = vrot.slane %v367, 2
        %v1042 = vsel %vm1018, %v1040, %v1041
        %v1043 = vrot.slane %v368, 2
        %v1044 = vrot.slane %v369, 2
        %v1045 = vsel %vm1018, %v1043, %v1044
        %v1046 = vrot.slane %v370, 2
        %v1047 = vrot.slane %v371, 2
        %v1048 = vsel %vm1018, %v1046, %v1047
        %v1049 = vrot.slane %v372, 2
        %v1050 = vrot.slane %v373, 2
        %v1051 = vsel %vm1018, %v1049, %v1050
        %v1052 = vrot.slane %v374, 2
        %v1053 = vrot.slane %v375, 2
        %v1054 = vsel %vm1018, %v1052, %v1053
        %v1055 = vrot.slane %v376, 2
        %v1056 = vrot.slane %v377, 2
        %v1057 = vsel %vm1018, %v1055, %v1056
        %v1058 = vrot.slane %v378, 2
        %v1059 = vrot.slane %v379, 2
        %v1060 = vsel %vm1018, %v1058, %v1059
        %v1061 = vrot.slane %v380, 2
        %v1062 = vrot.slane %v381, 2
        %v1063 = vsel %vm1018, %v1061, %v1062
        %v1064 = vrot.slane %v382, 2
        %v1065 = vrot.slane %v383, 2
        %v1066 = vsel %vm1018, %v1064, %v1065
        %1099 = vst.msk [vmem:[%s497 + $0x8] sm:$0xff] %vm272, %v1021
        %vm1100 = vcmask 259072
        %1101 = vst.msk [vmem:[%s497 + $0x18] sm:$0x3f] %vm1100, %v1020
        %1102 = vst.msk [vmem:[%s497 + $0x28] sm:$0xff] %vm272, %v1024
        %1103 = vst.msk [vmem:[%s497 + $0x38] sm:$0x3f] %vm1100, %v1023
        %1104 = vst.msk [vmem:[%s497 + $0x48] sm:$0xff] %vm272, %v1027
        %1105 = vst.msk [vmem:[%s497 + $0x58] sm:$0x3f] %vm1100, %v1026
        %1106 = vst.msk [vmem:[%s497 + $0x68] sm:$0xff] %vm272, %v1030
        %1107 = vst.msk [vmem:[%s497 + $0x78] sm:$0x3f] %vm1100, %v1029
        %1108 = vst.msk [vmem:[%s497 + $0x88] sm:$0xff] %vm272, %v1033
        %1109 = vst.msk [vmem:[%s497 + $0x98] sm:$0x3f] %vm1100, %v1032
        %1110 = vst.msk [vmem:[%s497 + $0xa8] sm:$0xff] %vm272, %v1036
        %1111 = vst.msk [vmem:[%s497 + $0xb8] sm:$0x3f] %vm1100, %v1035
        %1112 = vst.msk [vmem:[%s497 + $0xc8] sm:$0xff] %vm272, %v1039
        %1113 = vst.msk [vmem:[%s497 + $0xd8] sm:$0x3f] %vm1100, %v1038
        %1114 = vst.msk [vmem:[%s497 + $0xe8] sm:$0xff] %vm272, %v1042
        %1115 = vst.msk [vmem:[%s497 + $0xf8] sm:$0x3f] %vm1100, %v1041
        %1116 = vst.msk [vmem:[%s497 + $0x108] sm:$0xff] %vm272, %v1045
        %1117 = vst.msk [vmem:[%s497 + $0x118] sm:$0x3f] %vm1100, %v1044
        %1118 = vst.msk [vmem:[%s497 + $0x128] sm:$0xff] %vm272, %v1048
        %1119 = vst.msk [vmem:[%s497 + $0x138] sm:$0x3f] %vm1100, %v1047
        %1120 = vst.msk [vmem:[%s497 + $0x148] sm:$0xff] %vm272, %v1051
        %1121 = vst.msk [vmem:[%s497 + $0x158] sm:$0x3f] %vm1100, %v1050
        %1122 = vst.msk [vmem:[%s497 + $0x168] sm:$0xff] %vm272, %v1054
        %1123 = vst.msk [vmem:[%s497 + $0x178] sm:$0x3f] %vm1100, %v1053
        %1124 = vst.msk [vmem:[%s497 + $0x188] sm:$0xff] %vm272, %v1057
        %1125 = vst.msk [vmem:[%s497 + $0x198] sm:$0x3f] %vm1100, %v1056
        %1126 = vst.msk [vmem:[%s497 + $0x1a8] sm:$0xff] %vm272, %v1060
        %1127 = vst.msk [vmem:[%s497 + $0x1b8] sm:$0x3f] %vm1100, %v1059
        %1128 = vst.msk [vmem:[%s497 + $0x1c8] sm:$0xff] %vm272, %v1063
        %1129 = vst.msk [vmem:[%s497 + $0x1d8] sm:$0x3f] %vm1100, %v1062
        %1130 = vst.msk [vmem:[%s497 + $0x1e8] sm:$0xff] %vm272, %v1066
        %1131 = vst.msk [vmem:[%s497 + $0x1f8] sm:$0x3f] %vm1100, %v1065
        %vm1132 = vcmask 253952
        %1133 = vst.msk [vmem:[%s263] sm:$0x1] %vm1132, 0.0
        %1134 = vst.msk [vmem:[%s266] sm:$0x1] %vm1132, 0.0
      $region36: #{res_block_forward.2} parent=31 // pred_fallthru
        _
      %s1135 = smul.u32 %s22, 8
      %s1136 = smul.u32 %s1135, 4
      %s1137 = smul.addr %s1136, 8
      %s1138 = scalar_lea.vmem [#allocation2], %s1137
      %v1139 = vld [vmem:[%s1138] sm:$0xff]
      %v1140 = vld [vmem:[%s1138 + $0x8] sm:$0xff]
      %v1141 = vld [vmem:[%s1138 + $0x10] sm:$0xff]
      %v1142 = vld [vmem:[%s1138 + $0x18] sm:$0xff]
      %v1143 = vld [vmem:[%s1138 + $0x20] sm:$0xff]
      %v1144 = vld [vmem:[%s1138 + $0x28] sm:$0xff]
      %v1145 = vld [vmem:[%s1138 + $0x30] sm:$0xff]
      %v1146 = vld [vmem:[%s1138 + $0x38] sm:$0xff]
      %v1147 = vld [vmem:[%s1138 + $0x40] sm:$0xff]
      %v1148 = vld [vmem:[%s1138 + $0x48] sm:$0xff]
      %v1149 = vld [vmem:[%s1138 + $0x50] sm:$0xff]
      %v1150 = vld [vmem:[%s1138 + $0x58] sm:$0xff]
      %v1151 = vld [vmem:[%s1138 + $0x60] sm:$0xff]
      %v1152 = vld [vmem:[%s1138 + $0x68] sm:$0xff]
      %v1153 = vld [vmem:[%s1138 + $0x70] sm:$0xff]
      %v1154 = vld [vmem:[%s1138 + $0x78] sm:$0xff]
      %v1155 = vld [vmem:[%s1138 + $0x80] sm:$0xff]
      %v1156 = vld [vmem:[%s1138 + $0x88] sm:$0xff]
      %v1157 = vld [vmem:[%s1138 + $0x90] sm:$0xff]
      %v1158 = vld [vmem:[%s1138 + $0x98] sm:$0xff]
      %v1159 = vld [vmem:[%s1138 + $0xa0] sm:$0xff]
      %v1160 = vld [vmem:[%s1138 + $0xa8] sm:$0xff]
      %v1161 = vld [vmem:[%s1138 + $0xb0] sm:$0xff]
      %v1162 = vld [vmem:[%s1138 + $0xb8] sm:$0xff]
      %v1163 = vld [vmem:[%s1138 + $0xc0] sm:$0xff]
      %v1164 = vld [vmem:[%s1138 + $0xc8] sm:$0xff]
      %v1165 = vld [vmem:[%s1138 + $0xd0] sm:$0xff]
      %v1166 = vld [vmem:[%s1138 + $0xd8] sm:$0xff]
      %v1167 = vld [vmem:[%s1138 + $0xe0] sm:$0xff]
      %v1168 = vld [vmem:[%s1138 + $0xe8] sm:$0xff]
      %v1169 = vld [vmem:[%s1138 + $0xf0] sm:$0xff]
      %v1170 = vld [vmem:[%s1138 + $0xf8] sm:$0xff]
      %v1171 = vld [vmem:[%s1138 + $0x100] sm:$0xff]
      %v1172 = vld [vmem:[%s1138 + $0x108] sm:$0xff]
      %v1173 = vld [vmem:[%s1138 + $0x110] sm:$0xff]
      %v1174 = vld [vmem:[%s1138 + $0x118] sm:$0xff]
      %v1175 = vld [vmem:[%s1138 + $0x120] sm:$0xff]
      %v1176 = vld [vmem:[%s1138 + $0x128] sm:$0xff]
      %v1177 = vld [vmem:[%s1138 + $0x130] sm:$0xff]
      %v1178 = vld [vmem:[%s1138 + $0x138] sm:$0xff]
      %v1179 = vld [vmem:[%s1138 + $0x140] sm:$0xff]
      %v1180 = vld [vmem:[%s1138 + $0x148] sm:$0xff]
      %v1181 = vld [vmem:[%s1138 + $0x150] sm:$0xff]
      %v1182 = vld [vmem:[%s1138 + $0x158] sm:$0xff]
      %v1183 = vld [vmem:[%s1138 + $0x160] sm:$0xff]
      %v1184 = vld [vmem:[%s1138 + $0x168] sm:$0xff]
      %v1185 = vld [vmem:[%s1138 + $0x170] sm:$0xff]
      %v1186 = vld [vmem:[%s1138 + $0x178] sm:$0xff]
      %v1187 = vld [vmem:[%s1] sm:$0xff]
      %v1188 = vld [vmem:[%s1 + $0x8] sm:$0xff]
      %v1189 = vld [vmem:[%s1 + $0x10] sm:$0xff]
      %v1190 = vld [vmem:[%s1 + $0x18] sm:$0xff]
      %v1191 = vld [vmem:[%s1 + $0x20] sm:$0xff]
      %v1192 = vld [vmem:[%s1 + $0x28] sm:$0xff]
      %v1193 = vld [vmem:[%s1 + $0x30] sm:$0xff]
      %v1194 = vld [vmem:[%s1 + $0x38] sm:$0xff]
      %v1195 = vld [vmem:[%s1 + $0x40] sm:$0xff]
      %v1196 = vld [vmem:[%s1 + $0x48] sm:$0xff]
      %v1197 = vld [vmem:[%s1 + $0x50] sm:$0xff]
      %v1198 = vld [vmem:[%s1 + $0x58] sm:$0xff]
      %v1199 = vld [vmem:[%s1 + $0x60] sm:$0xff]
      %v1200 = vld [vmem:[%s1 + $0x68] sm:$0xff]
      %v1201 = vld [vmem:[%s1 + $0x70] sm:$0xff]
      %v1202 = vld [vmem:[%s1 + $0x78] sm:$0xff]
      %v1203 = vld [vmem:[%s1 + $0x80] sm:$0xff]
      %v1204 = vld [vmem:[%s1 + $0x88] sm:$0xff]
      %v1205 = vld [vmem:[%s1 + $0x90] sm:$0xff]
      %v1206 = vld [vmem:[%s1 + $0x98] sm:$0xff]
      %s1207 = scalar_lea.vmem %s1, 160
      %v1208 = vld [vmem:[%s1207] sm:$0xff]
      %v1209 = vld [vmem:[%s1207 + $0x8] sm:$0xff]
      %v1210 = vld [vmem:[%s1207 + $0x10] sm:$0xff]
      %v1211 = vld [vmem:[%s1207 + $0x18] sm:$0xff]
      %v1212 = vld [vmem:[%s1207 + $0x20] sm:$0xff]
      %v1213 = vld [vmem:[%s1207 + $0x28] sm:$0xff]
      %v1214 = vld [vmem:[%s1207 + $0x30] sm:$0xff]
      %v1215 = vld [vmem:[%s1207 + $0x38] sm:$0xff]
      %v1216 = vld [vmem:[%s1207 + $0x40] sm:$0xff]
      %v1217 = vld [vmem:[%s1207 + $0x48] sm:$0xff]
      %v1218 = vld [vmem:[%s1207 + $0x50] sm:$0xff]
      %v1219 = vld [vmem:[%s1207 + $0x58] sm:$0xff]
      %v1220 = vld [vmem:[%s1207 + $0x60] sm:$0xff]
      %v1221 = vld [vmem:[%s1207 + $0x68] sm:$0xff]
      %v1222 = vld [vmem:[%s1207 + $0x70] sm:$0xff]
      %v1223 = vld [vmem:[%s1207 + $0x78] sm:$0xff]
      %v1224 = vld [vmem:[%s1207 + $0x80] sm:$0xff]
      %v1225 = vld [vmem:[%s1207 + $0x88] sm:$0xff]
      %v1226 = vld [vmem:[%s1207 + $0x90] sm:$0xff]
      %v1227 = vld [vmem:[%s1207 + $0x98] sm:$0xff]
      %vm1228 = vcmask 261120
      %v1230 = vsel %vm1228, %v1144, 0
      %v1233 = vsel %vm1228, %v1146, 0
      %v1236 = vsel %vm1228, %v1148, 0
      %v1239 = vsel %vm1228, %v1150, 0
      %v1242 = vsel %vm1228, %v1152, 0
      %v1245 = vsel %vm1228, %v1154, 0
      %v1248 = vsel %vm1228, %v1156, 0
      %v1251 = vsel %vm1228, %v1158, 0
      %v1254 = vsel %vm1228, %v1160, 0
      %v1257 = vsel %vm1228, %v1162, 0
      %v1260 = vsel %vm1228, %v1164, 0
      %v1263 = vsel %vm1228, %v1166, 0
      %v1266 = vsel %vm1228, %v1168, 0
      %v1269 = vsel %vm1228, %v1170, 0
      %v1272 = vsel %vm1228, %v1172, 0
      %v1275 = vsel %vm1228, %v1174, 0
      %1277 = vmatprep.subr.mxu0 0.0
      %1278 = vmatpush1.msra.mxu0 %v1208
      %1279 = vmatprep.subr.mxu0 0.0
      %1280 = vmatpush1.msra.mxu0 %v1209
      %1281 = vmatprep.subr.mxu0 0.0
      %1282 = vmatpush1.msra.mxu0 %v1210
      %1283 = vmatprep.subr.mxu0 0.0
      %1284 = vmatpush1.msra.mxu0 %v1211
      %1285 = vmatprep.subr.mxu0 0.0
      %1286 = vmatpush1.msra.mxu0 %v1212
      %1287 = vmatprep.subr.mxu0 0.0
      %1288 = vmatpush1.msra.mxu0 %v1213
      %1289 = vmatprep.subr.mxu0 0.0
      %1290 = vmatpush1.msra.mxu0 %v1214
      %1291 = vmatprep.subr.mxu0 0.0
      %1292 = vmatpush1.msra.mxu0 %v1215
      %1293 = vmatprep.subr.mxu0 0.0
      %1294 = vmatpush1.msra.mxu0 %v1216
      %1295 = vmatprep.subr.mxu0 0.0
      %1296 = vmatpush1.msra.mxu0 %v1217
      %1297 = vmatprep.subr.mxu0 0.0
      %1298 = vmatpush1.msra.mxu0 %v1218
      %1299 = vmatprep.subr.mxu0 0.0
      %1300 = vmatpush1.msra.mxu0 %v1219
      %1301 = vmatprep.subr.mxu0 0.0
      %1302 = vmatpush1.msra.mxu0 %v1220
      %1303 = vmatprep.subr.mxu0 0.0
      %1304 = vmatpush1.msra.mxu0 %v1221
      %1305 = vmatprep.subr.mxu0 0.0
      %1306 = vmatpush1.msra.mxu0 %v1222
      %1307 = vmatprep.subr.mxu0 0.0
      %1308 = vmatpush1.msra.mxu0 %v1223
      %1309 = vmatprep.subr.mxu0 0.0
      %1310 = vmatpush1.msra.mxu0 %v1224
      %1311 = vmatprep.subr.mxu0 0.0
      %1312 = vmatpush1.msra.mxu0 %v1225
      %1313 = vmatprep.subr.mxu0 0.0
      %1314 = vmatpush1.msra.mxu0 %v1226
      %1315 = vmatprep.subr.mxu0 0.0
      %1316 = vmatpush1.msra.mxu0 %v1227
      %1317 = vmatprep.subr.mxu0 0.0
      %1318 = vmatpush1.msra.mxu0 0.0
      %1319 = vmatprep.subr.mxu0 0.0
      %1320 = vmatpush1.msra.mxu0 0.0
      %1321 = vmatprep.subr.mxu0 0.0
      %1322 = vmatpush1.msra.mxu0 0.0
      %1323 = vmatprep.subr.mxu0 0.0
      %1324 = vmatpush1.msra.mxu0 0.0
      %1325 = vmatprep.subr.mxu0 0.0
      %1326 = vmatpush1.msra.mxu0 0.0
      %1327 = vmatprep.subr.mxu0 0.0
      %1328 = vmatpush1.msra.mxu0 0.0
      %1329 = vmatprep.subr.mxu0 0.0
      %1330 = vmatpush1.msra.mxu0 0.0
      %1331 = vmatprep.subr.mxu0 0.0
      %1332 = vmatpush1.msra.mxu0 0.0
      %1333 = vmatprep.subr.mxu0 0.0
      %1334 = vmatpush1.msra.mxu0 0.0
      %1335 = vmatprep.subr.mxu0 0.0
      %1336 = vmatpush1.msra.mxu0 0.0
      %1337 = vmatprep.subr.mxu0 0.0
      %1338 = vmatpush1.msra.mxu0 0.0
      %1339 = vmatprep.subr.mxu0 0.0
      %1340 = vmatpush1.msra.mxu0 0.0
      %1341 = vmatprep.mubr.f32.mxu0 %v1230
      %1342 = vmatmul.mubr.f32.gmra.mrb[0].mxu0 %v1143
      %v1343 = vpop.f32.mrb[0].mxu0
      %v1344 = vadd.f32 0.0, %v1343
      %v1345 = vpop.f32.mrb[0].mxu0
      %1346 = vmatprep.mubr.f32.mxu0 %v1233
      %1347 = vmatmul.mubr.f32.gmra.mrb[0].mxu0 %v1145
      %v1348 = vpop.f32.mrb[0].mxu0
      %v1349 = vadd.f32 0.0, %v1348
      %v1350 = vpop.f32.mrb[0].mxu0
      %1351 = vmatprep.mubr.f32.mxu0 %v1236
      %1352 = vmatmul.mubr.f32.gmra.mrb[0].mxu0 %v1147
      %v1353 = vpop.f32.mrb[0].mxu0
      %v1354 = vadd.f32 0.0, %v1353
      %v1355 = vpop.f32.mrb[0].mxu0
      %1356 = vmatprep.mubr.f32.mxu0 %v1239
      %1357 = vmatmul.mubr.f32.gmra.mrb[0].mxu0 %v1149
      %v1358 = vpop.f32.mrb[0].mxu0
      %v1359 = vadd.f32 0.0, %v1358
      %v1360 = vpop.f32.mrb[0].mxu0
      %1361 = vmatprep.mubr.f32.mxu0 %v1242
      %1362 = vmatmul.mubr.f32.gmra.mrb[0].mxu0 %v1151
      %v1363 = vpop.f32.mrb[0].mxu0
      %v1364 = vadd.f32 0.0, %v1363
      %v1365 = vpop.f32.mrb[0].mxu0
      %1366 = vmatprep.mubr.f32.mxu0 %v1245
      %1367 = vmatmul.mubr.f32.gmra.mrb[0].mxu0 %v1153
      %v1368 = vpop.f32.mrb[0].mxu0
      %v1369 = vadd.f32 0.0, %v1368
      %v1370 = vpop.f32.mrb[0].mxu0
      %1371 = vmatprep.mubr.f32.mxu0 %v1248
      %1372 = vmatmul.mubr.f32.gmra.mrb[0].mxu0 %v1155
      %v1373 = vpop.f32.mrb[0].mxu0
      %v1374 = vadd.f32 0.0, %v1373
      %v1375 = vpop.f32.mrb[0].mxu0
      %1376 = vmatprep.mubr.f32.mxu0 %v1251
      %1377 = vmatmul.mubr.f32.gmra.mrb[0].mxu0 %v1157
      %v1378 = vpop.f32.mrb[0].mxu0
      %v1379 = vadd.f32 0.0, %v1378
      %v1380 = vpop.f32.mrb[0].mxu0
      %1381 = vmatprep.mubr.f32.mxu0 %v1254
      %1382 = vmatmul.mubr.f32.gmra.mrb[0].mxu0 %v1159
      %v1383 = vpop.f32.mrb[0].mxu0
      %v1384 = vadd.f32 0.0, %v1383
      %v1385 = vpop.f32.mrb[0].mxu0
      %1386 = vmatprep.mubr.f32.mxu0 %v1257
      %1387 = vmatmul.mubr.f32.gmra.mrb[0].mxu0 %v1161
      %v1388 = vpop.f32.mrb[0].mxu0
      %v1389 = vadd.f32 0.0, %v1388
      %v1390 = vpop.f32.mrb[0].mxu0
      %1391 = vmatprep.mubr.f32.mxu0 %v1260
      %1392 = vmatmul.mubr.f32.gmra.mrb[0].mxu0 %v1163
      %v1393 = vpop.f32.mrb[0].mxu0
      %v1394 = vadd.f32 0.0, %v1393
      %v1395 = vpop.f32.mrb[0].mxu0
      %1396 = vmatprep.mubr.f32.mxu0 %v1263
      %1397 = vmatmul.mubr.f32.gmra.mrb[0].mxu0 %v1165
      %v1398 = vpop.f32.mrb[0].mxu0
      %v1399 = vadd.f32 0.0, %v1398
      %v1400 = vpop.f32.mrb[0].mxu0
      %1401 = vmatprep.mubr.f32.mxu0 %v1266
      %1402 = vmatmul.mubr.f32.gmra.mrb[0].mxu0 %v1167
      %v1403 = vpop.f32.mrb[0].mxu0
      %v1404 = vadd.f32 0.0, %v1403
      %v1405 = vpop.f32.mrb[0].mxu0
      %1406 = vmatprep.mubr.f32.mxu0 %v1269
      %1407 = vmatmul.mubr.f32.gmra.mrb[0].mxu0 %v1169
      %v1408 = vpop.f32.mrb[0].mxu0
      %v1409 = vadd.f32 0.0, %v1408
      %v1410 = vpop.f32.mrb[0].mxu0
      %1411 = vmatprep.mubr.f32.mxu0 %v1272
      %1412 = vmatmul.mubr.f32.gmra.mrb[0].mxu0 %v1171
      %v1413 = vpop.f32.mrb[0].mxu0
      %v1414 = vadd.f32 0.0, %v1413
      %v1415 = vpop.f32.mrb[0].mxu0
      %1416 = vmatprep.mubr.f32.mxu0 %v1275
      %1417 = vmatmul.mubr.f32.gmra.mrb[0].mxu0 %v1173
      %v1418 = vpop.f32.mrb[0].mxu0
      %v1419 = vadd.f32 0.0, %v1418
      %v1420 = vpop.f32.mrb[0].mxu0
      %1421 = vdwg.mxu0
      %v1423 = vsel %vm1228, %v1140, 0
      %v1426 = vsel %vm1228, %v1142, 0
      %1428 = vmatprep.subr.mxu0 0.0
      %1429 = vmatpush1.msra.mxu0 %v1187
      %1430 = vmatprep.subr.mxu0 0.0
      %1431 = vmatpush1.msra.mxu0 %v1188
      %1432 = vmatprep.subr.mxu0 0.0
      %1433 = vmatpush1.msra.mxu0 %v1189
      %1434 = vmatprep.subr.mxu0 0.0
      %1435 = vmatpush1.msra.mxu0 %v1190
      %1436 = vmatprep.subr.mxu0 0.0
      %1437 = vmatpush1.msra.mxu0 %v1191
      %1438 = vmatprep.subr.mxu0 0.0
      %1439 = vmatpush1.msra.mxu0 %v1192
      %1440 = vmatprep.subr.mxu0 0.0
      %1441 = vmatpush1.msra.mxu0 %v1193
      %1442 = vmatprep.subr.mxu0 0.0
      %1443 = vmatpush1.msra.mxu0 %v1194
      %1444 = vmatprep.subr.mxu0 0.0
      %1445 = vmatpush1.msra.mxu0 %v1195
      %1446 = vmatprep.subr.mxu0 0.0
      %1447 = vmatpush1.msra.mxu0 %v1196
      %1448 = vmatprep.subr.mxu0 0.0
      %1449 = vmatpush1.msra.mxu0 %v1197
      %1450 = vmatprep.subr.mxu0 0.0
      %1451 = vmatpush1.msra.mxu0 %v1198
      %1452 = vmatprep.subr.mxu0 0.0
      %1453 = vmatpush1.msra.mxu0 %v1199
      %1454 = vmatprep.subr.mxu0 0.0
      %1455 = vmatpush1.msra.mxu0 %v1200
      %1456 = vmatprep.subr.mxu0 0.0
      %1457 = vmatpush1.msra.mxu0 %v1201
      %1458 = vmatprep.subr.mxu0 0.0
      %1459 = vmatpush1.msra.mxu0 %v1202
      %1460 = vmatprep.subr.mxu0 0.0
      %1461 = vmatpush1.msra.mxu0 %v1203
      %1462 = vmatprep.subr.mxu0 0.0
      %1463 = vmatpush1.msra.mxu0 %v1204
      %1464 = vmatprep.subr.mxu0 0.0
      %1465 = vmatpush1.msra.mxu0 %v1205
      %1466 = vmatprep.subr.mxu0 0.0
      %1467 = vmatpush1.msra.mxu0 %v1206
      %1468 = vmatprep.subr.mxu0 0.0
      %1469 = vmatpush1.msra.mxu0 0.0
      %1470 = vmatprep.subr.mxu0 0.0
      %1471 = vmatpush1.msra.mxu0 0.0
      %1472 = vmatprep.subr.mxu0 0.0
      %1473 = vmatpush1.msra.mxu0 0.0
      %1474 = vmatprep.subr.mxu0 0.0
      %1475 = vmatpush1.msra.mxu0 0.0
      %1476 = vmatprep.subr.mxu0 0.0
      %1477 = vmatpush1.msra.mxu0 0.0
      %1478 = vmatprep.subr.mxu0 0.0
      %1479 = vmatpush1.msra.mxu0 0.0
      %1480 = vmatprep.subr.mxu0 0.0
      %1481 = vmatpush1.msra.mxu0 0.0
      %1482 = vmatprep.subr.mxu0 0.0
      %1483 = vmatpush1.msra.mxu0 0.0
      %1484 = vmatprep.subr.mxu0 0.0
      %1485 = vmatpush1.msra.mxu0 0.0
      %1486 = vmatprep.subr.mxu0 0.0
      %1487 = vmatpush1.msra.mxu0 0.0
      %1488 = vmatprep.subr.mxu0 0.0
      %1489 = vmatpush1.msra.mxu0 0.0
      %1490 = vmatprep.subr.mxu0 0.0
      %1491 = vmatpush1.msra.mxu0 0.0
      %1492 = vmatprep.mubr.f32.mxu0 %v1423
      %1493 = vmatmul.mubr.f32.gmra.mrb[0].mxu0 %v1139
      %v1494 = vpop.f32.mrb[0].mxu0
      %v1495 = vadd.f32 %v1344, %v1494
      %v1496 = vpop.f32.mrb[0].mxu0
      %1497 = vmatprep.mubr.f32.mxu0 %v1426
      %1498 = vmatmul.mubr.f32.gmra.mrb[0].mxu0 %v1141
      %v1499 = vpop.f32.mrb[0].mxu0
      %v1500 = vadd.f32 %v1349, %v1499
      %v1501 = vpop.f32.mrb[0].mxu0
      %1502 = vmatprep.mubr.f32.mxu0 %v1230
      %1503 = vmatmul.mubr.f32.gmra.mrb[0].mxu0 %v1143
      %v1504 = vpop.f32.mrb[0].mxu0
      %v1505 = vadd.f32 %v1354, %v1504
      %v1506 = vpop.f32.mrb[0].mxu0
      %1507 = vmatprep.mubr.f32.mxu0 %v1233
      %1508 = vmatmul.mubr.f32.gmra.mrb[0].mxu0 %v1145
      %v1509 = vpop.f32.mrb[0].mxu0
      %v1510 = vadd.f32 %v1359, %v1509
      %v1511 = vpop.f32.mrb[0].mxu0
      %1512 = vmatprep.mubr.f32.mxu0 %v1236
      %1513 = vmatmul.mubr.f32.gmra.mrb[0].mxu0 %v1147
      %v1514 = vpop.f32.mrb[0].mxu0
      %v1515 = vadd.f32 %v1364, %v1514
      %v1516 = vpop.f32.mrb[0].mxu0
      %1517 = vmatprep.mubr.f32.mxu0 %v1239
      %1518 = vmatmul.mubr.f32.gmra.mrb[0].mxu0 %v1149
      %v1519 = vpop.f32.mrb[0].mxu0
      %v1520 = vadd.f32 %v1369, %v1519
      %v1521 = vpop.f32.mrb[0].mxu0
      %1522 = vmatprep.mubr.f32.mxu0 %v1242
      %1523 = vmatmul.mubr.f32.gmra.mrb[0].mxu0 %v1151
      %v1524 = vpop.f32.mrb[0].mxu0
      %v1525 = vadd.f32 %v1374, %v1524
      %v1526 = vpop.f32.mrb[0].mxu0
      %1527 = vmatprep.mubr.f32.mxu0 %v1245
      %1528 = vmatmul.mubr.f32.gmra.mrb[0].mxu0 %v1153
      %v1529 = vpop.f32.mrb[0].mxu0
      %v1530 = vadd.f32 %v1379, %v1529
      %v1531 = vpop.f32.mrb[0].mxu0
      %1532 = vmatprep.mubr.f32.mxu0 %v1248
      %1533 = vmatmul.mubr.f32.gmra.mrb[0].mxu0 %v1155
      %v1534 = vpop.f32.mrb[0].mxu0
      %v1535 = vadd.f32 %v1384, %v1534
      %v1536 = vpop.f32.mrb[0].mxu0
      %1537 = vmatprep.mubr.f32.mxu0 %v1251
      %1538 = vmatmul.mubr.f32.gmra.mrb[0].mxu0 %v1157
      %v1539 = vpop.f32.mrb[0].mxu0
      %v1540 = vadd.f32 %v1389, %v1539
      %v1541 = vpop.f32.mrb[0].mxu0
      %1542 = vmatprep.mubr.f32.mxu0 %v1254
      %1543 = vmatmul.mubr.f32.gmra.mrb[0].mxu0 %v1159
      %v1544 = vpop.f32.mrb[0].mxu0
      %v1545 = vadd.f32 %v1394, %v1544
      %v1546 = vpop.f32.mrb[0].mxu0
      %1547 = vmatprep.mubr.f32.mxu0 %v1257
      %1548 = vmatmul.mubr.f32.gmra.mrb[0].mxu0 %v1161
      %v1549 = vpop.f32.mrb[0].mxu0
      %v1550 = vadd.f32 %v1399, %v1549
      %v1551 = vpop.f32.mrb[0].mxu0
      %1552 = vmatprep.mubr.f32.mxu0 %v1260
      %1553 = vmatmul.mubr.f32.gmra.mrb[0].mxu0 %v1163
      %v1554 = vpop.f32.mrb[0].mxu0
      %v1555 = vadd.f32 %v1404, %v1554
      %v1556 = vpop.f32.mrb[0].mxu0
      %1557 = vmatprep.mubr.f32.mxu0 %v1263
      %1558 = vmatmul.mubr.f32.gmra.mrb[0].mxu0 %v1165
      %v1559 = vpop.f32.mrb[0].mxu0
      %v1560 = vadd.f32 %v1409, %v1559
      %v1561 = vpop.f32.mrb[0].mxu0
      %1562 = vmatprep.mubr.f32.mxu0 %v1266
      %1563 = vmatmul.mubr.f32.gmra.mrb[0].mxu0 %v1167
      %v1564 = vpop.f32.mrb[0].mxu0
      %v1565 = vadd.f32 %v1414, %v1564
      %v1566 = vpop.f32.mrb[0].mxu0
      %1567 = vmatprep.mubr.f32.mxu0 %v1269
      %1568 = vmatmul.mubr.f32.gmra.mrb[0].mxu0 %v1169
      %v1569 = vpop.f32.mrb[0].mxu0
      %v1570 = vadd.f32 %v1419, %v1569
      %v1571 = vpop.f32.mrb[0].mxu0
      %1572 = vdwg.mxu0
      %s1573 = scalar_lea.vmem %s1, 320
      %v1574 = vld [vmem:[%s1573] sm:$0xff]
      %v1575 = vld [vmem:[%s1573 + $0x8] sm:$0xff]
      %v1576 = vld [vmem:[%s1573 + $0x10] sm:$0xff]
      %v1577 = vld [vmem:[%s1573 + $0x18] sm:$0xff]
      %v1578 = vld [vmem:[%s1573 + $0x20] sm:$0xff]
      %v1579 = vld [vmem:[%s1573 + $0x28] sm:$0xff]
      %v1580 = vld [vmem:[%s1573 + $0x30] sm:$0xff]
      %v1581 = vld [vmem:[%s1573 + $0x38] sm:$0xff]
      %v1582 = vld [vmem:[%s1573 + $0x40] sm:$0xff]
      %v1583 = vld [vmem:[%s1573 + $0x48] sm:$0xff]
      %v1584 = vld [vmem:[%s1573 + $0x50] sm:$0xff]
      %v1585 = vld [vmem:[%s1573 + $0x58] sm:$0xff]
      %v1586 = vld [vmem:[%s1573 + $0x60] sm:$0xff]
      %v1587 = vld [vmem:[%s1573 + $0x68] sm:$0xff]
      %v1588 = vld [vmem:[%s1573 + $0x70] sm:$0xff]
      %v1589 = vld [vmem:[%s1573 + $0x78] sm:$0xff]
      %v1590 = vld [vmem:[%s1573 + $0x80] sm:$0xff]
      %v1591 = vld [vmem:[%s1573 + $0x88] sm:$0xff]
      %v1592 = vld [vmem:[%s1573 + $0x90] sm:$0xff]
      %v1593 = vld [vmem:[%s1573 + $0x98] sm:$0xff]
      %v1595 = vsel %vm1228, %v1176, 0
      %v1598 = vsel %vm1228, %v1178, 0
      %1600 = vmatprep.subr.mxu0 0.0
      %1601 = vmatpush1.msra.mxu0 %v1574
      %1602 = vmatprep.subr.mxu0 0.0
      %1603 = vmatpush1.msra.mxu0 %v1575
      %1604 = vmatprep.subr.mxu0 0.0
      %1605 = vmatpush1.msra.mxu0 %v1576
      %1606 = vmatprep.subr.mxu0 0.0
      %1607 = vmatpush1.msra.mxu0 %v1577
      %1608 = vmatprep.subr.mxu0 0.0
      %1609 = vmatpush1.msra.mxu0 %v1578
      %1610 = vmatprep.subr.mxu0 0.0
      %1611 = vmatpush1.msra.mxu0 %v1579
      %1612 = vmatprep.subr.mxu0 0.0
      %1613 = vmatpush1.msra.mxu0 %v1580
      %1614 = vmatprep.subr.mxu0 0.0
      %1615 = vmatpush1.msra.mxu0 %v1581
      %1616 = vmatprep.subr.mxu0 0.0
      %1617 = vmatpush1.msra.mxu0 %v1582
      %1618 = vmatprep.subr.mxu0 0.0
      %1619 = vmatpush1.msra.mxu0 %v1583
      %1620 = vmatprep.subr.mxu0 0.0
      %1621 = vmatpush1.msra.mxu0 %v1584
      %1622 = vmatprep.subr.mxu0 0.0
      %1623 = vmatpush1.msra.mxu0 %v1585
      %1624 = vmatprep.subr.mxu0 0.0
      %1625 = vmatpush1.msra.mxu0 %v1586
      %1626 = vmatprep.subr.mxu0 0.0
      %1627 = vmatpush1.msra.mxu0 %v1587
      %1628 = vmatprep.subr.mxu0 0.0
      %1629 = vmatpush1.msra.mxu0 %v1588
      %1630 = vmatprep.subr.mxu0 0.0
      %1631 = vmatpush1.msra.mxu0 %v1589
      %1632 = vmatprep.subr.mxu0 0.0
      %1633 = vmatpush1.msra.mxu0 %v1590
      %1634 = vmatprep.subr.mxu0 0.0
      %1635 = vmatpush1.msra.mxu0 %v1591
      %1636 = vmatprep.subr.mxu0 0.0
      %1637 = vmatpush1.msra.mxu0 %v1592
      %1638 = vmatprep.subr.mxu0 0.0
      %1639 = vmatpush1.msra.mxu0 %v1593
      %1640 = vmatprep.subr.mxu0 0.0
      %1641 = vmatpush1.msra.mxu0 0.0
      %1642 = vmatprep.subr.mxu0 0.0
      %1643 = vmatpush1.msra.mxu0 0.0
      %1644 = vmatprep.subr.mxu0 0.0
      %1645 = vmatpush1.msra.mxu0 0.0
      %1646 = vmatprep.subr.mxu0 0.0
      %1647 = vmatpush1.msra.mxu0 0.0
      %1648 = vmatprep.subr.mxu0 0.0
      %1649 = vmatpush1.msra.mxu0 0.0
      %1650 = vmatprep.subr.mxu0 0.0
      %1651 = vmatpush1.msra.mxu0 0.0
      %1652 = vmatprep.subr.mxu0 0.0
      %1653 = vmatpush1.msra.mxu0 0.0
      %1654 = vmatprep.subr.mxu0 0.0
      %1655 = vmatpush1.msra.mxu0 0.0
      %1656 = vmatprep.subr.mxu0 0.0
      %1657 = vmatpush1.msra.mxu0 0.0
      %1658 = vmatprep.subr.mxu0 0.0
      %1659 = vmatpush1.msra.mxu0 0.0
      %1660 = vmatprep.subr.mxu0 0.0
      %1661 = vmatpush1.msra.mxu0 0.0
      %1662 = vmatprep.subr.mxu0 0.0
      %1663 = vmatpush1.msra.mxu0 0.0
      %1664 = vmatprep.mubr.f32.mxu0 %v1236
      %1665 = vmatmul.mubr.f32.gmra.mrb[0].mxu0 %v1147
      %v1666 = vpop.f32.mrb[0].mxu0
      %v1667 = vadd.f32 0.0, %v1666
      %v1668 = vpop.f32.mrb[0].mxu0
      %1669 = vmatprep.mubr.f32.mxu0 %v1239
      %1670 = vmatmul.mubr.f32.gmra.mrb[0].mxu0 %v1149
      %v1671 = vpop.f32.mrb[0].mxu0
      %v1672 = vadd.f32 0.0, %v1671
      %v1673 = vpop.f32.mrb[0].mxu0
      %1674 = vmatprep.mubr.f32.mxu0 %v1242
      %1675 = vmatmul.mubr.f32.gmra.mrb[0].mxu0 %v1151
      %v1676 = vpop.f32.mrb[0].mxu0
      %v1677 = vadd.f32 0.0, %v1676
      %v1678 = vpop.f32.mrb[0].mxu0
      %1679 = vmatprep.mubr.f32.mxu0 %v1245
      %1680 = vmatmul.mubr.f32.gmra.mrb[0].mxu0 %v1153
      %v1681 = vpop.f32.mrb[0].mxu0
      %v1682 = vadd.f32 0.0, %v1681
      %v1683 = vpop.f32.mrb[0].mxu0
      %1684 = vmatprep.mubr.f32.mxu0 %v1248
      %1685 = vmatmul.mubr.f32.gmra.mrb[0].mxu0 %v1155
      %v1686 = vpop.f32.mrb[0].mxu0
      %v1687 = vadd.f32 0.0, %v1686
      %v1688 = vpop.f32.mrb[0].mxu0
      %1689 = vmatprep.mubr.f32.mxu0 %v1251
      %1690 = vmatmul.mubr.f32.gmra.mrb[0].mxu0 %v1157
      %v1691 = vpop.f32.mrb[0].mxu0
      %v1692 = vadd.f32 0.0, %v1691
      %v1693 = vpop.f32.mrb[0].mxu0
      %1694 = vmatprep.mubr.f32.mxu0 %v1254
      %1695 = vmatmul.mubr.f32.gmra.mrb[0].mxu0 %v1159
      %v1696 = vpop.f32.mrb[0].mxu0
      %v1697 = vadd.f32 0.0, %v1696
      %v1698 = vpop.f32.mrb[0].mxu0
      %1699 = vmatprep.mubr.f32.mxu0 %v1257
      %1700 = vmatmul.mubr.f32.gmra.mrb[0].mxu0 %v1161
      %v1701 = vpop.f32.mrb[0].mxu0
      %v1702 = vadd.f32 0.0, %v1701
      %v1703 = vpop.f32.mrb[0].mxu0
      %1704 = vmatprep.mubr.f32.mxu0 %v1260
      %1705 = vmatmul.mubr.f32.gmra.mrb[0].mxu0 %v1163
      %v1706 = vpop.f32.mrb[0].mxu0
      %v1707 = vadd.f32 0.0, %v1706
      %v1708 = vpop.f32.mrb[0].mxu0
      %1709 = vmatprep.mubr.f32.mxu0 %v1263
      %1710 = vmatmul.mubr.f32.gmra.mrb[0].mxu0 %v1165
      %v1711 = vpop.f32.mrb[0].mxu0
      %v1712 = vadd.f32 0.0, %v1711
      %v1713 = vpop.f32.mrb[0].mxu0
      %1714 = vmatprep.mubr.f32.mxu0 %v1266
      %1715 = vmatmul.mubr.f32.gmra.mrb[0].mxu0 %v1167
      %v1716 = vpop.f32.mrb[0].mxu0
      %v1717 = vadd.f32 0.0, %v1716
      %v1718 = vpop.f32.mrb[0].mxu0
      %1719 = vmatprep.mubr.f32.mxu0 %v1269
      %1720 = vmatmul.mubr.f32.gmra.mrb[0].mxu0 %v1169
      %v1721 = vpop.f32.mrb[0].mxu0
      %v1722 = vadd.f32 0.0, %v1721
      %v1723 = vpop.f32.mrb[0].mxu0
      %1724 = vmatprep.mubr.f32.mxu0 %v1272
      %1725 = vmatmul.mubr.f32.gmra.mrb[0].mxu0 %v1171
      %v1726 = vpop.f32.mrb[0].mxu0
      %v1727 = vadd.f32 0.0, %v1726
      %v1728 = vpop.f32.mrb[0].mxu0
      %1729 = vmatprep.mubr.f32.mxu0 %v1275
      %1730 = vmatmul.mubr.f32.gmra.mrb[0].mxu0 %v1173
      %v1731 = vpop.f32.mrb[0].mxu0
      %v1732 = vadd.f32 0.0, %v1731
      %v1733 = vpop.f32.mrb[0].mxu0
      %1734 = vmatprep.mubr.f32.mxu0 %v1595
      %1735 = vmatmul.mubr.f32.gmra.mrb[0].mxu0 %v1175
      %v1736 = vpop.f32.mrb[0].mxu0
      %v1737 = vadd.f32 0.0, %v1736
      %v1738 = vpop.f32.mrb[0].mxu0
      %1739 = vmatprep.mubr.f32.mxu0 %v1598
      %1740 = vmatmul.mubr.f32.gmra.mrb[0].mxu0 %v1177
      %v1741 = vpop.f32.mrb[0].mxu0
      %v1742 = vadd.f32 0.0, %v1741
      %v1743 = vpop.f32.mrb[0].mxu0
      %1744 = vdwg.mxu0
      %v1745 = vadd.f32 %v1495, %v1667
      %v1746 = vadd.f32 %v1500, %v1672
      %v1747 = vadd.f32 %v1505, %v1677
      %v1748 = vadd.f32 %v1510, %v1682
      %v1749 = vadd.f32 %v1515, %v1687
      %v1750 = vadd.f32 %v1520, %v1692
      %v1751 = vadd.f32 %v1525, %v1697
      %v1752 = vadd.f32 %v1530, %v1702
      %v1753 = vadd.f32 %v1535, %v1707
      %v1754 = vadd.f32 %v1540, %v1712
      %v1755 = vadd.f32 %v1545, %v1717
      %v1756 = vadd.f32 %v1550, %v1722
      %v1757 = vadd.f32 %v1555, %v1727
      %v1758 = vadd.f32 %v1560, %v1732
      %v1759 = vadd.f32 %v1565, %v1737
      %v1760 = vadd.f32 %v1570, %v1742
      %s1761 = scalar_lea.vmem %s1, 480
      %v1762 = vld [vmem:[%s1761] sm:$0xff]
      %v1763 = vld [vmem:[%s1761 + $0x8] sm:$0xff]
      %v1764 = vld [vmem:[%s1761 + $0x10] sm:$0xff]
      %v1765 = vld [vmem:[%s1761 + $0x18] sm:$0xff]
      %v1766 = vld [vmem:[%s1761 + $0x20] sm:$0xff]
      %v1767 = vld [vmem:[%s1761 + $0x28] sm:$0xff]
      %v1768 = vld [vmem:[%s1761 + $0x30] sm:$0xff]
      %v1769 = vld [vmem:[%s1761 + $0x38] sm:$0xff]
      %v1770 = vld [vmem:[%s1761 + $0x40] sm:$0xff]
      %v1771 = vld [vmem:[%s1761 + $0x48] sm:$0xff]
      %v1772 = vld [vmem:[%s1761 + $0x50] sm:$0xff]
      %v1773 = vld [vmem:[%s1761 + $0x58] sm:$0xff]
      %v1774 = vld [vmem:[%s1761 + $0x60] sm:$0xff]
      %v1775 = vld [vmem:[%s1761 + $0x68] sm:$0xff]
      %v1776 = vld [vmem:[%s1761 + $0x70] sm:$0xff]
      %v1777 = vld [vmem:[%s1761 + $0x78] sm:$0xff]
      %v1778 = vld [vmem:[%s1761 + $0x80] sm:$0xff]
      %v1779 = vld [vmem:[%s1761 + $0x88] sm:$0xff]
      %v1780 = vld [vmem:[%s1761 + $0x90] sm:$0xff]
      %v1781 = vld [vmem:[%s1761 + $0x98] sm:$0xff]
      %v1783 = vsel %vm1228, %v1180, 0
      %v1786 = vsel %vm1228, %v1182, 0
      %1788 = vmatprep.subr.mxu0 0.0
      %1789 = vmatpush1.msra.mxu0 %v1762
      %1790 = vmatprep.subr.mxu0 0.0
      %1791 = vmatpush1.msra.mxu0 %v1763
      %1792 = vmatprep.subr.mxu0 0.0
      %1793 = vmatpush1.msra.mxu0 %v1764
      %1794 = vmatprep.subr.mxu0 0.0
      %1795 = vmatpush1.msra.mxu0 %v1765
      %1796 = vmatprep.subr.mxu0 0.0
      %1797 = vmatpush1.msra.mxu0 %v1766
      %1798 = vmatprep.subr.mxu0 0.0
      %1799 = vmatpush1.msra.mxu0 %v1767
      %1800 = vmatprep.subr.mxu0 0.0
      %1801 = vmatpush1.msra.mxu0 %v1768
      %1802 = vmatprep.subr.mxu0 0.0
      %1803 = vmatpush1.msra.mxu0 %v1769
      %1804 = vmatprep.subr.mxu0 0.0
      %1805 = vmatpush1.msra.mxu0 %v1770
      %1806 = vmatprep.subr.mxu0 0.0
      %1807 = vmatpush1.msra.mxu0 %v1771
      %1808 = vmatprep.subr.mxu0 0.0
      %1809 = vmatpush1.msra.mxu0 %v1772
      %1810 = vmatprep.subr.mxu0 0.0
      %1811 = vmatpush1.msra.mxu0 %v1773
      %1812 = vmatprep.subr.mxu0 0.0
      %1813 = vmatpush1.msra.mxu0 %v1774
      %1814 = vmatprep.subr.mxu0 0.0
      %1815 = vmatpush1.msra.mxu0 %v1775
      %1816 = vmatprep.subr.mxu0 0.0
      %1817 = vmatpush1.msra.mxu0 %v1776
      %1818 = vmatprep.subr.mxu0 0.0
      %1819 = vmatpush1.msra.mxu0 %v1777
      %1820 = vmatprep.subr.mxu0 0.0
      %1821 = vmatpush1.msra.mxu0 %v1778
      %1822 = vmatprep.subr.mxu0 0.0
      %1823 = vmatpush1.msra.mxu0 %v1779
      %1824 = vmatprep.subr.mxu0 0.0
      %1825 = vmatpush1.msra.mxu0 %v1780
      %1826 = vmatprep.subr.mxu0 0.0
      %1827 = vmatpush1.msra.mxu0 %v1781
      %1828 = vmatprep.subr.mxu0 0.0
      %1829 = vmatpush1.msra.mxu0 0.0
      %1830 = vmatprep.subr.mxu0 0.0
      %1831 = vmatpush1.msra.mxu0 0.0
      %1832 = vmatprep.subr.mxu0 0.0
      %1833 = vmatpush1.msra.mxu0 0.0
      %1834 = vmatprep.subr.mxu0 0.0
      %1835 = vmatpush1.msra.mxu0 0.0
      %1836 = vmatprep.subr.mxu0 0.0
      %1837 = vmatpush1.msra.mxu0 0.0
      %1838 = vmatprep.subr.mxu0 0.0
      %1839 = vmatpush1.msra.mxu0 0.0
      %1840 = vmatprep.subr.mxu0 0.0
      %1841 = vmatpush1.msra.mxu0 0.0
      %1842 = vmatprep.subr.mxu0 0.0
      %1843 = vmatpush1.msra.mxu0 0.0
      %1844 = vmatprep.subr.mxu0 0.0
      %1845 = vmatpush1.msra.mxu0 0.0
      %1846 = vmatprep.subr.mxu0 0.0
      %1847 = vmatpush1.msra.mxu0 0.0
      %1848 = vmatprep.subr.mxu0 0.0
      %1849 = vmatpush1.msra.mxu0 0.0
      %1850 = vmatprep.subr.mxu0 0.0
      %1851 = vmatpush1.msra.mxu0 0.0
      %1852 = vmatprep.mubr.f32.mxu0 %v1242
      %1853 = vmatmul.mubr.f32.gmra.mrb[0].mxu0 %v1151
      %v1854 = vpop.f32.mrb[0].mxu0
      %v1855 = vadd.f32 0.0, %v1854
      %v1856 = vpop.f32.mrb[0].mxu0
      %1857 = vmatprep.mubr.f32.mxu0 %v1245
      %1858 = vmatmul.mubr.f32.gmra.mrb[0].mxu0 %v1153
      %v1859 = vpop.f32.mrb[0].mxu0
      %v1860 = vadd.f32 0.0, %v1859
      %v1861 = vpop.f32.mrb[0].mxu0
      %1862 = vmatprep.mubr.f32.mxu0 %v1248
      %1863 = vmatmul.mubr.f32.gmra.mrb[0].mxu0 %v1155
      %v1864 = vpop.f32.mrb[0].mxu0
      %v1865 = vadd.f32 0.0, %v1864
      %v1866 = vpop.f32.mrb[0].mxu0
      %1867 = vmatprep.mubr.f32.mxu0 %v1251
      %1868 = vmatmul.mubr.f32.gmra.mrb[0].mxu0 %v1157
      %v1869 = vpop.f32.mrb[0].mxu0
      %v1870 = vadd.f32 0.0, %v1869
      %v1871 = vpop.f32.mrb[0].mxu0
      %1872 = vmatprep.mubr.f32.mxu0 %v1254
      %1873 = vmatmul.mubr.f32.gmra.mrb[0].mxu0 %v1159
      %v1874 = vpop.f32.mrb[0].mxu0
      %v1875 = vadd.f32 0.0, %v1874
      %v1876 = vpop.f32.mrb[0].mxu0
      %1877 = vmatprep.mubr.f32.mxu0 %v1257
      %1878 = vmatmul.mubr.f32.gmra.mrb[0].mxu0 %v1161
      %v1879 = vpop.f32.mrb[0].mxu0
      %v1880 = vadd.f32 0.0, %v1879
      %v1881 = vpop.f32.mrb[0].mxu0
      %1882 = vmatprep.mubr.f32.mxu0 %v1260
      %1883 = vmatmul.mubr.f32.gmra.mrb[0].mxu0 %v1163
      %v1884 = vpop.f32.mrb[0].mxu0
      %v1885 = vadd.f32 0.0, %v1884
      %v1886 = vpop.f32.mrb[0].mxu0
      %1887 = vmatprep.mubr.f32.mxu0 %v1263
      %1888 = vmatmul.mubr.f32.gmra.mrb[0].mxu0 %v1165
      %v1889 = vpop.f32.mrb[0].mxu0
      %v1890 = vadd.f32 0.0, %v1889
      %v1891 = vpop.f32.mrb[0].mxu0
      %1892 = vmatprep.mubr.f32.mxu0 %v1266
      %1893 = vmatmul.mubr.f32.gmra.mrb[0].mxu0 %v1167
      %v1894 = vpop.f32.mrb[0].mxu0
      %v1895 = vadd.f32 0.0, %v1894
      %v1896 = vpop.f32.mrb[0].mxu0
      %1897 = vmatprep.mubr.f32.mxu0 %v1269
      %1898 = vmatmul.mubr.f32.gmra.mrb[0].mxu0 %v1169
      %v1899 = vpop.f32.mrb[0].mxu0
      %v1900 = vadd.f32 0.0, %v1899
      %v1901 = vpop.f32.mrb[0].mxu0
      %1902 = vmatprep.mubr.f32.mxu0 %v1272
      %1903 = vmatmul.mubr.f32.gmra.mrb[0].mxu0 %v1171
      %v1904 = vpop.f32.mrb[0].mxu0
      %v1905 = vadd.f32 0.0, %v1904
      %v1906 = vpop.f32.mrb[0].mxu0
      %1907 = vmatprep.mubr.f32.mxu0 %v1275
      %1908 = vmatmul.mubr.f32.gmra.mrb[0].mxu0 %v1173
      %v1909 = vpop.f32.mrb[0].mxu0
      %v1910 = vadd.f32 0.0, %v1909
      %v1911 = vpop.f32.mrb[0].mxu0
      %1912 = vmatprep.mubr.f32.mxu0 %v1595
      %1913 = vmatmul.mubr.f32.gmra.mrb[0].mxu0 %v1175
      %v1914 = vpop.f32.mrb[0].mxu0
      %v1915 = vadd.f32 0.0, %v1914
      %v1916 = vpop.f32.mrb[0].mxu0
      %1917 = vmatprep.mubr.f32.mxu0 %v1598
      %1918 = vmatmul.mubr.f32.gmra.mrb[0].mxu0 %v1177
      %v1919 = vpop.f32.mrb[0].mxu0
      %v1920 = vadd.f32 0.0, %v1919
      %v1921 = vpop.f32.mrb[0].mxu0
      %1922 = vmatprep.mubr.f32.mxu0 %v1783
      %1923 = vmatmul.mubr.f32.gmra.mrb[0].mxu0 %v1179
      %v1924 = vpop.f32.mrb[0].mxu0
      %v1925 = vadd.f32 0.0, %v1924
      %v1926 = vpop.f32.mrb[0].mxu0
      %1927 = vmatprep.mubr.f32.mxu0 %v1786
      %1928 = vmatmul.mubr.f32.gmra.mrb[0].mxu0 %v1181
      %v1929 = vpop.f32.mrb[0].mxu0
      %v1930 = vadd.f32 0.0, %v1929
      %v1931 = vpop.f32.mrb[0].mxu0
      %1932 = vdwg.mxu0
      %v1933 = vadd.f32 %v1745, %v1855
      %v1934 = vadd.f32 %v1746, %v1860
      %v1935 = vadd.f32 %v1747, %v1865
      %v1936 = vadd.f32 %v1748, %v1870
      %v1937 = vadd.f32 %v1749, %v1875
      %v1938 = vadd.f32 %v1750, %v1880
      %v1939 = vadd.f32 %v1751, %v1885
      %v1940 = vadd.f32 %v1752, %v1890
      %v1941 = vadd.f32 %v1753, %v1895
      %v1942 = vadd.f32 %v1754, %v1900
      %v1943 = vadd.f32 %v1755, %v1905
      %v1944 = vadd.f32 %v1756, %v1910
      %v1945 = vadd.f32 %v1757, %v1915
      %v1946 = vadd.f32 %v1758, %v1920
      %v1947 = vadd.f32 %v1759, %v1925
      %v1948 = vadd.f32 %v1760, %v1930
      %s1949 = scalar_lea.vmem %s1, 640
      %v1950 = vld [vmem:[%s1949] sm:$0xff]
      %v1951 = vld [vmem:[%s1949 + $0x8] sm:$0xff]
      %v1952 = vld [vmem:[%s1949 + $0x10] sm:$0xff]
      %v1953 = vld [vmem:[%s1949 + $0x18] sm:$0xff]
      %v1954 = vld [vmem:[%s1949 + $0x20] sm:$0xff]
      %v1955 = vld [vmem:[%s1949 + $0x28] sm:$0xff]
      %v1956 = vld [vmem:[%s1949 + $0x30] sm:$0xff]
      %v1957 = vld [vmem:[%s1949 + $0x38] sm:$0xff]
      %v1958 = vld [vmem:[%s1949 + $0x40] sm:$0xff]
      %v1959 = vld [vmem:[%s1949 + $0x48] sm:$0xff]
      %v1960 = vld [vmem:[%s1949 + $0x50] sm:$0xff]
      %v1961 = vld [vmem:[%s1949 + $0x58] sm:$0xff]
      %v1962 = vld [vmem:[%s1949 + $0x60] sm:$0xff]
      %v1963 = vld [vmem:[%s1949 + $0x68] sm:$0xff]
      %v1964 = vld [vmem:[%s1949 + $0x70] sm:$0xff]
      %v1965 = vld [vmem:[%s1949 + $0x78] sm:$0xff]
      %v1966 = vld [vmem:[%s1949 + $0x80] sm:$0xff]
      %v1967 = vld [vmem:[%s1949 + $0x88] sm:$0xff]
      %v1968 = vld [vmem:[%s1949 + $0x90] sm:$0xff]
      %v1969 = vld [vmem:[%s1949 + $0x98] sm:$0xff]
      %v1971 = vsel %vm1228, %v1184, 0
      %v1974 = vsel %vm1228, %v1186, 0
      %1976 = vmatprep.subr.mxu0 0.0
      %1977 = vmatpush1.msra.mxu0 %v1950
      %1978 = vmatprep.subr.mxu0 0.0
      %1979 = vmatpush1.msra.mxu0 %v1951
      %1980 = vmatprep.subr.mxu0 0.0
      %1981 = vmatpush1.msra.mxu0 %v1952
      %1982 = vmatprep.subr.mxu0 0.0
      %1983 = vmatpush1.msra.mxu0 %v1953
      %1984 = vmatprep.subr.mxu0 0.0
      %1985 = vmatpush1.msra.mxu0 %v1954
      %1986 = vmatprep.subr.mxu0 0.0
      %1987 = vmatpush1.msra.mxu0 %v1955
      %1988 = vmatprep.subr.mxu0 0.0
      %1989 = vmatpush1.msra.mxu0 %v1956
      %1990 = vmatprep.subr.mxu0 0.0
      %1991 = vmatpush1.msra.mxu0 %v1957
      %1992 = vmatprep.subr.mxu0 0.0
      %1993 = vmatpush1.msra.mxu0 %v1958
      %1994 = vmatprep.subr.mxu0 0.0
      %1995 = vmatpush1.msra.mxu0 %v1959
      %1996 = vmatprep.subr.mxu0 0.0
      %1997 = vmatpush1.msra.mxu0 %v1960
      %1998 = vmatprep.subr.mxu0 0.0
      %1999 = vmatpush1.msra.mxu0 %v1961
      %2000 = vmatprep.subr.mxu0 0.0
      %2001 = vmatpush1.msra.mxu0 %v1962
      %2002 = vmatprep.subr.mxu0 0.0
      %2003 = vmatpush1.msra.mxu0 %v1963
      %2004 = vmatprep.subr.mxu0 0.0
      %2005 = vmatpush1.msra.mxu0 %v1964
      %2006 = vmatprep.subr.mxu0 0.0
      %2007 = vmatpush1.msra.mxu0 %v1965
      %2008 = vmatprep.subr.mxu0 0.0
      %2009 = vmatpush1.msra.mxu0 %v1966
      %2010 = vmatprep.subr.mxu0 0.0
      %2011 = vmatpush1.msra.mxu0 %v1967
      %2012 = vmatprep.subr.mxu0 0.0
      %2013 = vmatpush1.msra.mxu0 %v1968
      %2014 = vmatprep.subr.mxu0 0.0
      %2015 = vmatpush1.msra.mxu0 %v1969
      %2016 = vmatprep.subr.mxu0 0.0
      %2017 = vmatpush1.msra.mxu0 0.0
      %2018 = vmatprep.subr.mxu0 0.0
      %2019 = vmatpush1.msra.mxu0 0.0
      %2020 = vmatprep.subr.mxu0 0.0
      %2021 = vmatpush1.msra.mxu0 0.0
      %2022 = vmatprep.subr.mxu0 0.0
      %2023 = vmatpush1.msra.mxu0 0.0
      %2024 = vmatprep.subr.mxu0 0.0
      %2025 = vmatpush1.msra.mxu0 0.0
      %2026 = vmatprep.subr.mxu0 0.0
      %2027 = vmatpush1.msra.mxu0 0.0
      %2028 = vmatprep.subr.mxu0 0.0
      %2029 = vmatpush1.msra.mxu0 0.0
      %2030 = vmatprep.subr.mxu0 0.0
      %2031 = vmatpush1.msra.mxu0 0.0
      %2032 = vmatprep.subr.mxu0 0.0
      %2033 = vmatpush1.msra.mxu0 0.0
      %2034 = vmatprep.subr.mxu0 0.0
      %2035 = vmatpush1.msra.mxu0 0.0
      %2036 = vmatprep.subr.mxu0 0.0
      %2037 = vmatpush1.msra.mxu0 0.0
      %2038 = vmatprep.subr.mxu0 0.0
      %2039 = vmatpush1.msra.mxu0 0.0
      %2040 = vmatprep.mubr.f32.mxu0 %v1248
      %2041 = vmatmul.mubr.f32.gmra.mrb[0].mxu0 %v1155
      %v2042 = vpop.f32.mrb[0].mxu0
      %v2043 = vadd.f32 0.0, %v2042
      %v2044 = vpop.f32.mrb[0].mxu0
      %2045 = vmatprep.mubr.f32.mxu0 %v1251
      %2046 = vmatmul.mubr.f32.gmra.mrb[0].mxu0 %v1157
      %v2047 = vpop.f32.mrb[0].mxu0
      %v2048 = vadd.f32 0.0, %v2047
      %v2049 = vpop.f32.mrb[0].mxu0
      %2050 = vmatprep.mubr.f32.mxu0 %v1254
      %2051 = vmatmul.mubr.f32.gmra.mrb[0].mxu0 %v1159
      %v2052 = vpop.f32.mrb[0].mxu0
      %v2053 = vadd.f32 0.0, %v2052
      %v2054 = vpop.f32.mrb[0].mxu0
      %2055 = vmatprep.mubr.f32.mxu0 %v1257
      %2056 = vmatmul.mubr.f32.gmra.mrb[0].mxu0 %v1161
      %v2057 = vpop.f32.mrb[0].mxu0
      %v2058 = vadd.f32 0.0, %v2057
      %v2059 = vpop.f32.mrb[0].mxu0
      %2060 = vmatprep.mubr.f32.mxu0 %v1260
      %2061 = vmatmul.mubr.f32.gmra.mrb[0].mxu0 %v1163
      %v2062 = vpop.f32.mrb[0].mxu0
      %v2063 = vadd.f32 0.0, %v2062
      %v2064 = vpop.f32.mrb[0].mxu0
      %2065 = vmatprep.mubr.f32.mxu0 %v1263
      %2066 = vmatmul.mubr.f32.gmra.mrb[0].mxu0 %v1165
      %v2067 = vpop.f32.mrb[0].mxu0
      %v2068 = vadd.f32 0.0, %v2067
      %v2069 = vpop.f32.mrb[0].mxu0
      %2070 = vmatprep.mubr.f32.mxu0 %v1266
      %2071 = vmatmul.mubr.f32.gmra.mrb[0].mxu0 %v1167
      %v2072 = vpop.f32.mrb[0].mxu0
      %v2073 = vadd.f32 0.0, %v2072
      %v2074 = vpop.f32.mrb[0].mxu0
      %2075 = vmatprep.mubr.f32.mxu0 %v1269
      %2076 = vmatmul.mubr.f32.gmra.mrb[0].mxu0 %v1169
      %v2077 = vpop.f32.mrb[0].mxu0
      %v2078 = vadd.f32 0.0, %v2077
      %v2079 = vpop.f32.mrb[0].mxu0
      %2080 = vmatprep.mubr.f32.mxu0 %v1272
      %2081 = vmatmul.mubr.f32.gmra.mrb[0].mxu0 %v1171
      %v2082 = vpop.f32.mrb[0].mxu0
      %v2083 = vadd.f32 0.0, %v2082
      %v2084 = vpop.f32.mrb[0].mxu0
      %2085 = vmatprep.mubr.f32.mxu0 %v1275
      %2086 = vmatmul.mubr.f32.gmra.mrb[0].mxu0 %v1173
      %v2087 = vpop.f32.mrb[0].mxu0
      %v2088 = vadd.f32 0.0, %v2087
      %v2089 = vpop.f32.mrb[0].mxu0
      %2090 = vmatprep.mubr.f32.mxu0 %v1595
      %2091 = vmatmul.mubr.f32.gmra.mrb[0].mxu0 %v1175
      %v2092 = vpop.f32.mrb[0].mxu0
      %v2093 = vadd.f32 0.0, %v2092
      %v2094 = vpop.f32.mrb[0].mxu0
      %2095 = vmatprep.mubr.f32.mxu0 %v1598
      %2096 = vmatmul.mubr.f32.gmra.mrb[0].mxu0 %v1177
      %v2097 = vpop.f32.mrb[0].mxu0
      %v2098 = vadd.f32 0.0, %v2097
      %v2099 = vpop.f32.mrb[0].mxu0
      %2100 = vmatprep.mubr.f32.mxu0 %v1783
      %2101 = vmatmul.mubr.f32.gmra.mrb[0].mxu0 %v1179
      %v2102 = vpop.f32.mrb[0].mxu0
      %v2103 = vadd.f32 0.0, %v2102
      %v2104 = vpop.f32.mrb[0].mxu0
      %2105 = vmatprep.mubr.f32.mxu0 %v1786
      %2106 = vmatmul.mubr.f32.gmra.mrb[0].mxu0 %v1181
      %v2107 = vpop.f32.mrb[0].mxu0
      %v2108 = vadd.f32 0.0, %v2107
      %v2109 = vpop.f32.mrb[0].mxu0
      %2110 = vmatprep.mubr.f32.mxu0 %v1971
      %2111 = vmatmul.mubr.f32.gmra.mrb[0].mxu0 %v1183
      %v2112 = vpop.f32.mrb[0].mxu0
      %v2113 = vadd.f32 0.0, %v2112
      %v2114 = vpop.f32.mrb[0].mxu0
      %2115 = vmatprep.mubr.f32.mxu0 %v1974
      %2116 = vmatmul.mubr.f32.gmra.mrb[0].mxu0 %v1185
      %v2117 = vpop.f32.mrb[0].mxu0
      %v2118 = vadd.f32 0.0, %v2117
      %v2119 = vpop.f32.mrb[0].mxu0
      %2120 = vdwg.mxu0
      %v2121 = vadd.f32 %v1933, %v2043
      %v2122 = vadd.f32 %v1934, %v2048
      %v2123 = vadd.f32 %v1935, %v2053
      %v2124 = vadd.f32 %v1936, %v2058
      %v2125 = vadd.f32 %v1937, %v2063
      %v2126 = vadd.f32 %v1938, %v2068
      %v2127 = vadd.f32 %v1939, %v2073
      %v2128 = vadd.f32 %v1940, %v2078
      %v2129 = vadd.f32 %v1941, %v2083
      %v2130 = vadd.f32 %v1942, %v2088
      %v2131 = vadd.f32 %v1943, %v2093
      %v2132 = vadd.f32 %v1944, %v2098
      %v2133 = vadd.f32 %v1945, %v2103
      %v2134 = vadd.f32 %v1946, %v2108
      %v2135 = vadd.f32 %v1947, %v2113
      %v2136 = vadd.f32 %v1948, %v2118
      %v2137 = vld [vmem:[%s2] sm:$0x1]
      %v2139 = vlaneseq
      %v2140 = vshrl.u32 %v2139, 7
      %v2141 = vsub.s32 0, %v2140
      %v2142 = vrot.slane %v2137, %v2141
      %v2144 = vadd.f32 %v2121, %v2142
      %v2145 = vadd.f32 %v2122, %v2142
      %v2146 = vadd.f32 %v2123, %v2142
      %v2147 = vadd.f32 %v2124, %v2142
      %v2148 = vadd.f32 %v2125, %v2142
      %v2149 = vadd.f32 %v2126, %v2142
      %v2150 = vadd.f32 %v2127, %v2142
      %v2151 = vadd.f32 %v2128, %v2142
      %v2152 = vadd.f32 %v2129, %v2142
      %v2153 = vadd.f32 %v2130, %v2142
      %v2154 = vadd.f32 %v2131, %v2142
      %v2155 = vadd.f32 %v2132, %v2142
      %v2156 = vadd.f32 %v2133, %v2142
      %v2157 = vadd.f32 %v2134, %v2142
      %v2158 = vadd.f32 %v2135, %v2142
      %v2159 = vadd.f32 %v2136, %v2142
      %v2160 = vld [vmem:[%s263] sm:$0x1]
      %v2161 = vsel %vm1228, %v2144, 0.0
      %v2162 = vsel %vm1228, %v2145, 0.0
      %v2163 = vadd.f32 %v2161, %v2162
      %v2164 = vsel %vm1228, %v2146, 0.0
      %v2165 = vadd.f32 %v2163, %v2164
      %v2166 = vsel %vm1228, %v2147, 0.0
      %v2167 = vadd.f32 %v2165, %v2166
      %v2168 = vsel %vm1228, %v2148, 0.0
      %v2169 = vadd.f32 %v2167, %v2168
      %v2170 = vsel %vm1228, %v2149, 0.0
      %v2171 = vadd.f32 %v2169, %v2170
      %v2172 = vsel %vm1228, %v2150, 0.0
      %v2173 = vadd.f32 %v2171, %v2172
      %v2174 = vsel %vm1228, %v2151, 0.0
      %v2175 = vadd.f32 %v2173, %v2174
      %v2176 = vsel %vm1228, %v2152, 0.0
      %v2177 = vadd.f32 %v2175, %v2176
      %v2178 = vsel %vm1228, %v2153, 0.0
      %v2179 = vadd.f32 %v2177, %v2178
      %v2180 = vsel %vm1228, %v2154, 0.0
      %v2181 = vadd.f32 %v2179, %v2180
      %v2182 = vsel %vm1228, %v2155, 0.0
      %v2183 = vadd.f32 %v2181, %v2182
      %v2184 = vsel %vm1228, %v2156, 0.0
      %v2185 = vadd.f32 %v2183, %v2184
      %v2186 = vsel %vm1228, %v2157, 0.0
      %v2187 = vadd.f32 %v2185, %v2186
      %v2188 = vsel %vm1228, %v2158, 0.0
      %v2189 = vadd.f32 %v2187, %v2188
      %v2190 = vsel %vm1228, %v2159, 0.0
      %v2191 = vadd.f32 %v2189, %v2190
      %v2192 = vrot.slane %v2191, 4
      %v2193 = vadd.f32 %v2191, %v2192
      %v2194 = vrot.slane %v2193, 2
      %v2195 = vadd.f32 %v2193, %v2194
      %v2196 = vrot.slane %v2195, 1
      %v2197 = vadd.f32 %v2195, %v2196
      %v2198 = vadd.f32 %v2160, %v2197
      %vm2199 = vcmask 253952
      %2200 = vst.msk [vmem:[%s263] sm:$0x1] %vm2199, %v2198
      %v2201 = vld [vmem:[%s266] sm:$0x1]
      %v2202 = vmul.f32 %v2144, %v2144
      %v2203 = vmul.f32 %v2145, %v2145
      %v2204 = vmul.f32 %v2146, %v2146
      %v2205 = vmul.f32 %v2147, %v2147
      %v2206 = vmul.f32 %v2148, %v2148
      %v2207 = vmul.f32 %v2149, %v2149
      %v2208 = vmul.f32 %v2150, %v2150
      %v2209 = vmul.f32 %v2151, %v2151
      %v2210 = vmul.f32 %v2152, %v2152
      %v2211 = vmul.f32 %v2153, %v2153
      %v2212 = vmul.f32 %v2154, %v2154
      %v2213 = vmul.f32 %v2155, %v2155
      %v2214 = vmul.f32 %v2156, %v2156
      %v2215 = vmul.f32 %v2157, %v2157
      %v2216 = vmul.f32 %v2158, %v2158
      %v2217 = vmul.f32 %v2159, %v2159
      %v2218 = vsel %vm1228, %v2202, 0.0
      %v2219 = vsel %vm1228, %v2203, 0.0
      %v2220 = vadd.f32 %v2218, %v2219
      %v2221 = vsel %vm1228, %v2204, 0.0
      %v2222 = vadd.f32 %v2220, %v2221
      %v2223 = vsel %vm1228, %v2205, 0.0
      %v2224 = vadd.f32 %v2222, %v2223
      %v2225 = vsel %vm1228, %v2206, 0.0
      %v2226 = vadd.f32 %v2224, %v2225
      %v2227 = vsel %vm1228, %v2207, 0.0
      %v2228 = vadd.f32 %v2226, %v2227
      %v2229 = vsel %vm1228, %v2208, 0.0
      %v2230 = vadd.f32 %v2228, %v2229
      %v2231 = vsel %vm1228, %v2209, 0.0
      %v2232 = vadd.f32 %v2230, %v2231
      %v2233 = vsel %vm1228, %v2210, 0.0
      %v2234 = vadd.f32 %v2232, %v2233
      %v2235 = vsel %vm1228, %v2211, 0.0
      %v2236 = vadd.f32 %v2234, %v2235
      %v2237 = vsel %vm1228, %v2212, 0.0
      %v2238 = vadd.f32 %v2236, %v2237
      %v2239 = vsel %vm1228, %v2213, 0.0
      %v2240 = vadd.f32 %v2238, %v2239
      %v2241 = vsel %vm1228, %v2214, 0.0
      %v2242 = vadd.f32 %v2240, %v2241
      %v2243 = vsel %vm1228, %v2215, 0.0
      %v2244 = vadd.f32 %v2242, %v2243
      %v2245 = vsel %vm1228, %v2216, 0.0
      %v2246 = vadd.f32 %v2244, %v2245
      %v2247 = vsel %vm1228, %v2217, 0.0
      %v2248 = vadd.f32 %v2246, %v2247
      %v2249 = vrot.slane %v2248, 4
      %v2250 = vadd.f32 %v2248, %v2249
      %v2251 = vrot.slane %v2250, 2
      %v2252 = vadd.f32 %v2250, %v2251
      %v2253 = vrot.slane %v2252, 1
      %v2254 = vadd.f32 %v2252, %v2253
      %v2255 = vadd.f32 %v2201, %v2254
      %2256 = vst.msk [vmem:[%s266] sm:$0x1] %vm2199, %v2255
      %2257 = vst.msk [vmem:[%s259] sm:$0xff] %vm1228, %v2144
      %2258 = vst.msk [vmem:[%s259 + $0x8] sm:$0xff] %vm1228, %v2145
      %2259 = vst.msk [vmem:[%s259 + $0x10] sm:$0xff] %vm1228, %v2146
      %2260 = vst.msk [vmem:[%s259 + $0x18] sm:$0xff] %vm1228, %v2147
      %2261 = vst.msk [vmem:[%s259 + $0x20] sm:$0xff] %vm1228, %v2148
      %2262 = vst.msk [vmem:[%s259 + $0x28] sm:$0xff] %vm1228, %v2149
      %2263 = vst.msk [vmem:[%s259 + $0x30] sm:$0xff] %vm1228, %v2150
      %2264 = vst.msk [vmem:[%s259 + $0x38] sm:$0xff] %vm1228, %v2151
      %2265 = vst.msk [vmem:[%s259 + $0x40] sm:$0xff] %vm1228, %v2152
      %2266 = vst.msk [vmem:[%s259 + $0x48] sm:$0xff] %vm1228, %v2153
      %2267 = vst.msk [vmem:[%s259 + $0x50] sm:$0xff] %vm1228, %v2154
      %2268 = vst.msk [vmem:[%s259 + $0x58] sm:$0xff] %vm1228, %v2155
      %2269 = vst.msk [vmem:[%s259 + $0x60] sm:$0xff] %vm1228, %v2156
      %2270 = vst.msk [vmem:[%s259 + $0x68] sm:$0xff] %vm1228, %v2157
      %2271 = vst.msk [vmem:[%s259 + $0x70] sm:$0xff] %vm1228, %v2158
      %2272 = vst.msk [vmem:[%s259 + $0x78] sm:$0xff] %vm1228, %v2159
      %s2273 = smul.u32 8, %s22
      %p2274 = scmp.lt.s32.totalorder %s21, 1
      %s2275 = scalar_select %p2274, %s21, 1
      %p2276 = scmp.lt.s32.totalorder %s2273, 15
      %s2277 = scalar_select %p2276, %s2273, 15
      %s2278 = smul.addr %s2277, 2
      %s2279 = smul.addr %s2275, 32
      %s2280 = sadd.s32 %s2278, %s2279
      %s2281 = smul.addr %s2280, 8
      %s2282 = scalar_lea.vmem %s3, %s2281
      %p2283 = scmp.lt.s32.totalorder %s21, 1
      %s2284 = scalar_select %p2283, %s21, 1
      %s2285 = scalar_lea.vmem %s4, %s2284
      %p2286 = scmp.lt.s32.totalorder %s21, 1
      %s2287 = scalar_select %p2286, %s21, 1
      %s2288 = scalar_lea.vmem %s5, %s2287
      // Predicated region
      $region37: #{res_block_forward.2} parent=31 // pred_check
        %p2289 = pneg %p117
      $region38: #{res_block_forward.2} parent=31 // pred_check_branch
        %2291 = sbr.rel (%p2289) target = $region40
      $region39: #{res_block_forward.2} parent=31 // pred_region
        %s2292 = smul.u32 8, %s22
      $region40: #{res_block_forward.2} parent=31 // pred_fallthru
        _
      // Predicated region
      $region41: #{res_block_forward.2} parent=31 // pred_check
        %p2293 = pneg %p143
      $region42: #{res_block_forward.2} parent=31 // pred_check_branch
        %2295 = sbr.rel (%p2293) target = $region44
      $region43: #{res_block_forward.2} parent=31 // pred_region
        _
      $region44: #{res_block_forward.2} parent=31 // pred_fallthru
        _
      // Predicated region
      $region45: #{res_block_forward.2} parent=31 // pred_check
        %p2296 = pneg %p169
      $region46: #{res_block_forward.2} parent=31 // pred_check_branch
        %2298 = sbr.rel (%p2296) target = $region48
      $region47: #{res_block_forward.2} parent=31 // pred_region
        _
      $region48: #{res_block_forward.2} parent=31 // pred_fallthru
        _
    $region32: #{res_block_forward.2} parent=5 // pred_fallthru
      _
    %p2299 = scmp.le.s32.totalorder 2, %s12
    // Predicated region
    $region49: #{res_block_forward.2} parent=5 // pred_check
      %p2300 = pneg %p2299
    $region50: #{res_block_forward.2} parent=5 // pred_check_branch
      %2302 = sbr.rel (%p2300) target = $region52
    $region51: #{res_block_forward.2} parent=5 // pred_region
      %s2303 = ssub.s32 %s12, 2
      // Predicated region
      $region53: #{res_block_forward.2} parent=51 // pred_check
        %p2304 = pneg %p123
      $region54: #{res_block_forward.2} parent=51 // pred_check_branch
        %2306 = sbr.rel (%p2304) target = $region56
      $region55: #{res_block_forward.2} parent=51 // pred_region
        %s2307 = smul.u32 8, %s24
        %p2308 = scmp.lt.s32.totalorder %s23, 1
        %s2309 = scalar_select %p2308, %s23, 1
        %p2310 = scmp.lt.s32.totalorder %s2307, 15
        %s2311 = scalar_select %p2310, %s2307, 15
        %s2312 = smul.addr %s2311, 2
        %s2313 = smul.addr %s2309, 32
        %s2314 = sadd.s32 %s2312, %s2313
        %s2315 = smul.addr %s2314, 8
        %s2316 = scalar_lea.vmem %s3, %s2315
      $region56: #{res_block_forward.2} parent=51 // pred_fallthru
        _
      // Predicated region
      $region57: #{res_block_forward.2} parent=51 // pred_check
        %p2317 = pneg %p149
      $region58: #{res_block_forward.2} parent=51 // pred_check_branch
        %2319 = sbr.rel (%p2317) target = $region60
      $region59: #{res_block_forward.2} parent=51 // pred_region
        %p2320 = scmp.lt.s32.totalorder %s23, 1
        %s2321 = scalar_select %p2320, %s23, 1
        %s2322 = scalar_lea.vmem %s4, %s2321
      $region60: #{res_block_forward.2} parent=51 // pred_fallthru
        _
      // Predicated region
      $region61: #{res_block_forward.2} parent=51 // pred_check
        %p2323 = pneg %p175
      $region62: #{res_block_forward.2} parent=51 // pred_check_branch
        %2325 = sbr.rel (%p2323) target = $region64
      $region63: #{res_block_forward.2} parent=51 // pred_region
        %p2326 = scmp.lt.s32.totalorder %s23, 1
        %s2327 = scalar_select %p2326, %s23, 1
        %s2328 = scalar_lea.vmem %s5, %s2327
      $region64: #{res_block_forward.2} parent=51 // pred_fallthru
        _
    $region52: #{res_block_forward.2} parent=5 // pred_fallthru
      _
  $region6: #{res_block_forward.2} parent=0 // loop_footer
    %s16 = sadd.s32 1, %s12
  $region7: #{res_block_forward.2} parent=0 // loop_footer_branch
    %11 = sbr.rel target = $region3
  $region8: #{res_block_forward.2} parent=0 // loop_exit
    _

// kernel: res_block_forward.3
$region0: #{res_block_forward.3}
  #allocation0 [shape = 'u32[]', space=smem, size = 0x4, offset = 0x4, fixed_abs, tag = 'smem constant byte address 0x4 - core index']
  #allocation1 [shape = 'u32[144,128]{1,0:T(1,128)}', space=vmem, size = 0x12000, scoped, tag = 'internal scratch']
  #allocation2 [shape = 'f32[20,16,160]{2,1,0:T(8,128)}', space=vmem, size = 0x50000, scoped, tag = 'scratch operand']
  %s0 = inlined_call_operand.vmem [shape: f32[2,16,16,32], index: 0, kind: input, shape index: {}]
  %s1 = inlined_call_operand.vmem [shape: f32[2,16,16,32], index: 1, kind: input, shape index: {}]
  %s2 = inlined_call_operand.vmem [shape: f32[1,32], index: 2, kind: input, shape index: {}]
  %s3 = inlined_call_operand.vmem [shape: f32[1,32], index: 3, kind: input, shape index: {}]
  %s4 = inlined_call_operand.vmem [shape: f32[1,32], index: 4, kind: input, shape index: {}]
  %s5 = inlined_call_operand.vmem [shape: f32[5,160,32], index: 5, kind: input, shape index: {}]
  %s6 = inlined_call_operand.vmem [shape: f32[1,32], index: 6, kind: input, shape index: {}]
  %s7 = inlined_call_operand.hbm [shape: f32[2,16,16,32], index: 7, kind: output, shape index: {}]
  %s8 = sld [smem:[#allocation0]]
  $region65: #{res_block_forward.3} parent=0
    _
  %s10 = ssub.s32 1, %s8
  %s11 = scalar_select 0, %s10, %s8
  $region1: #{res_block_forward.3} parent=0
    #allocation3 [shape = 'u8[131072]{0}', space=vmem, size = 0x20000, scoped, tag = 'output window, operand 0']
    #allocation4 [shape = 's32[2]{0}', space=sflag, size = 0x8, scoped, tag = 'scoped memory for res_block_forward.3']
    %12 = vsyncpa [#allocation4], 0
    %s13 = scalar_lea.sflag [#allocation4], 1
    %14 = vsyncpa %s13, 0
    loop: start=0, step=1, limit=6
    $region2: #{res_block_forward.3} parent=1 // loop_pre_header
      _
    $region3: #{res_block_forward.3} parent=1 // loop_header
      %s16 = sphi 0, %s20
      %p17 = scmp.ge.s32.totalorder %s16, 6
      %s23 = sphi 0, %s35
      %s24 = sphi 0, %s31
      %s25 = sphi 0, %s23
      %s26 = sphi 0, %s24
      %s27 = sphi 0, %s25
      %s28 = sphi 0, %s26
      %s38 = sphi 0, %s40
      %s41 = sphi 0, %s38
      %s42 = sphi 0, %s41
      %s58 = sphi 0, %s42
      %s66 = sphi 0, %s68
      %s69 = sphi 0, %s66
      %s70 = sphi 0, %s69
      %s86 = sphi 0, %s70
      %s90 = sphi 0, %s90
      %s92 = sphi 0, %s90
      %s93 = sphi 0, %s92
      %s107 = sphi 0, %s93
      %s111 = sphi 0, %s111
      %s113 = sphi 0, %s111
      %s114 = sphi 0, %s113
      %s128 = sphi 0, %s114
      %s132 = sphi 0, %s132
      %s134 = sphi 0, %s132
      %s135 = sphi 0, %s134
      %s149 = sphi 0, %s135
      %s153 = sphi 0, %s153
      %s155 = sphi 0, %s153
      %s156 = sphi 0, %s155
      %s170 = sphi 0, %s156
      %s174 = sphi 0, %s174
      %s176 = sphi 0, %s174
      %s177 = sphi 0, %s176
      %s191 = sphi 0, %s177
      %s199 = sphi 0, %s201
      %s202 = sphi 0, %s199
      %s203 = sphi 0, %s202
      %s219 = sphi 0, %s203
    $region4: #{res_block_forward.3} parent=1 // loop_header_branch
      %19 = sbr.rel (%p17) target = $region8
    $region5: #{res_block_forward.3} parent=1 // loop_body
      %s21 = ssub.s32 %s16, 1
      %s22 = ssub.s32 %s16, 2
      %s29 = sadd.s32 1, %s24
      %p30 = scmp.ge.s32.totalorder %s29, 2
      %s31 = scalar_select %p30, 0, %s29
      %s32 = sadd.s32 1, %s23
      %s33 = scalar_select %p30, %s32, %s23
      %p34 = scmp.ge.s32.totalorder %s33, 2
      %s35 = scalar_select %p34, 0, %s33
      %s36 = ssub.s32 %s23, %s35
      %p37 = scmp.eq.s32.totalorder %s36, 0
      %s39 = sadd.s32 %s38, 1
      %s40 = scalar_select %p37, %s38, %s39
      %p43 = pneg %p37
      %p44 = scmp.eq.s32.totalorder %s16, 3
      %p45 = por %p43, %p44
      %p46 = scmp.ne.s32.totalorder %s38, %s41
      %p47 = scmp.eq.s32.totalorder %s16, 0
      %p48 = por %p46, %p47
      %p49 = scmp.ne.s32.totalorder %s38, %s41
      %p50 = scmp.eq.s32.totalorder %s21, 3
      %p51 = por %p49, %p50
      %p52 = scmp.ne.s32.totalorder %s41, %s42
      %p53 = scmp.eq.s32.totalorder %s21, 0
      %p54 = por %p52, %p53
      %p55 = scmp.ne.s32.totalorder %s41, %s42
      %p56 = scmp.eq.s32.totalorder %s22, 3
      %p57 = por %p55, %p56
      %p59 = scmp.ne.s32.totalorder %s42, %s58
      %p60 = scmp.eq.s32.totalorder %s22, 0
      %p61 = por %p59, %p60
      %s62 = ssub.s32 %s23, %s35
      %s63 = ssub.s32 %s24, %s31
      %s64 = sor.u32 %s62, %s63
      %p65 = scmp.eq.s32.totalorder %s64, 0
      %s67 = sadd.s32 %s66, 1
      %s68 = scalar_select %p65, %s66, %s67
      %p71 = pneg %p65
      %p72 = scmp.eq.s32.totalorder %s16, 3
      %p73 = por %p71, %p72
      %p74 = scmp.ne.s32.totalorder %s66, %s69
      %p75 = scmp.eq.s32.totalorder %s16, 0
      %p76 = por %p74, %p75
      %p77 = scmp.ne.s32.totalorder %s66, %s69
      %p78 = scmp.eq.s32.totalorder %s21, 3
      %p79 = por %p77, %p78
      %p80 = scmp.ne.s32.totalorder %s69, %s70
      %p81 = scmp.eq.s32.totalorder %s21, 0
      %p82 = por %p80, %p81
      %p83 = scmp.ne.s32.totalorder %s69, %s70
      %p84 = scmp.eq.s32.totalorder %s22, 3
      %p85 = por %p83, %p84
      %p87 = scmp.ne.s32.totalorder %s70, %s86
      %p88 = scmp.eq.s32.totalorder %s22, 0
      %p89 = por %p87, %p88
      %s91 = sadd.s32 %s90, 1
      %p94 = scmp.eq.s32.totalorder %s16, 3
      %p95 = scmp.ne.s32.totalorder %s90, %s92
      %p96 = scmp.eq.s32.totalorder %s16, 0
      %p97 = por %p95, %p96
      %p98 = scmp.ne.s32.totalorder %s90, %s92
      %p99 = scmp.eq.s32.totalorder %s21, 3
      %p100 = por %p98, %p99
      %p101 = scmp.ne.s32.totalorder %s92, %s93
      %p102 = scmp.eq.s32.totalorder %s21, 0
      %p103 = por %p101, %p102
      %p104 = scmp.ne.s32.totalorder %s92, %s93
      %p105 = scmp.eq.s32.totalorder %s22, 3
      %p106 = por %p104, %p105
      %p108 = scmp.ne.s32.totalorder %s93, %s107
      %p109 = scmp.eq.s32.totalorder %s22, 0
      %p110 = por %p108, %p109
      %s112 = sadd.s32 %s111, 1
      %p115 = scmp.eq.s32.totalorder %s16, 3
      %p116 = scmp.ne.s32.totalorder %s111, %s113
      %p117 = scmp.eq.s32.totalorder %s16, 0
      %p118 = por %p116, %p117
      %p119 = scmp.ne.s32.totalorder %s111, %s113
      %p120 = scmp.eq.s32.totalorder %s21, 3
      %p121 = por %p119, %p120
      %p122 = scmp.ne.s32.totalorder %s113, %s114
      %p123 = scmp.eq.s32.totalorder %s21, 0
      %p124 = por %p122, %p123
      %p125 = scmp.ne.s32.totalorder %s113, %s114
      %p126 = scmp.eq.s32.totalorder %s22, 3
      %p127 = por %p125, %p126
      %p129 = scmp.ne.s32.totalorder %s114, %s128
      %p130 = scmp.eq.s32.totalorder %s22, 0
      %p131 = por %p129, %p130
      %s133 = sadd.s32 %s132, 1
      %p136 = scmp.eq.s32.totalorder %s16, 3
      %p137 = scmp.ne.s32.totalorder %s132, %s134
      %p138 = scmp.eq.s32.totalorder %s16, 0
      %p139 = por %p137, %p138
      %p140 = scmp.ne.s32.totalorder %s132, %s134
      %p141 = scmp.eq.s32.totalorder %s21, 3
      %p142 = por %p140, %p141
      %p143 = scmp.ne.s32.totalorder %s134, %s135
      %p144 = scmp.eq.s32.totalorder %s21, 0
      %p145 = por %p143, %p144
      %p146 = scmp.ne.s32.totalorder %s134, %s135
      %p147 = scmp.eq.s32.totalorder %s22, 3
      %p148 = por %p146, %p147
      %p150 = scmp.ne.s32.totalorder %s135, %s149
      %p151 = scmp.eq.s32.totalorder %s22, 0
      %p152 = por %p150, %p151
      %s154 = sadd.s32 %s153, 1
      %p157 = scmp.eq.s32.totalorder %s16, 3
      %p158 = scmp.ne.s32.totalorder %s153, %s155
      %p159 = scmp.eq.s32.totalorder %s16, 0
      %p160 = por %p158, %p159
      %p161 = scmp.ne.s32.totalorder %s153, %s155
      %p162 = scmp.eq.s32.totalorder %s21, 3
      %p163 = por %p161, %p162
      %p164 = scmp.ne.s32.totalorder %s155, %s156
      %p165 = scmp.eq.s32.totalorder %s21, 0
      %p166 = por %p164, %p165
      %p167 = scmp.ne.s32.totalorder %s155, %s156
      %p168 = scmp.eq.s32.totalorder %s22, 3
      %p169 = por %p167, %p168
      %p171 = scmp.ne.s32.totalorder %s156, %s170
      %p172 = scmp.eq.s32.totalorder %s22, 0
      %p173 = por %p171, %p172
      %s175 = sadd.s32 %s174, 1
      %p178 = scmp.eq.s32.totalorder %s16, 3
      %p179 = scmp.ne.s32.totalorder %s174, %s176
      %p180 = scmp.eq.s32.totalorder %s16, 0
      %p181 = por %p179, %p180
      %p182 = scmp.ne.s32.totalorder %s174, %s176
      %p183 = scmp.eq.s32.totalorder %s21, 3
      %p184 = por %p182, %p183
      %p185 = scmp.ne.s32.totalorder %s176, %s177
      %p186 = scmp.eq.s32.totalorder %s21, 0
      %p187 = por %p185, %p186
      %p188 = scmp.ne.s32.totalorder %s176, %s177
      %p189 = scmp.eq.s32.totalorder %s22, 3
      %p190 = por %p188, %p189
      %p192 = scmp.ne.s32.totalorder %s177, %s191
      %p193 = scmp.eq.s32.totalorder %s22, 0
      %p194 = por %p192, %p193
      %s195 = ssub.s32 %s23, %s35
      %s196 = ssub.s32 %s24, %s31
      %s197 = sor.u32 %s195, %s196
      %p198 = scmp.eq.s32.totalorder %s197, 0
      %s200 = sadd.s32 %s199, 1
      %s201 = scalar_select %p198, %s199, %s200
      %p204 = pneg %p198
      %p205 = scmp.eq.s32.totalorder %s16, 3
      %p206 = por %p204, %p205
      %p207 = scmp.ne.s32.totalorder %s199, %s202
      %p208 = scmp.eq.s32.totalorder %s16, 0
      %p209 = por %p207, %p208
      %p210 = scmp.ne.s32.totalorder %s199, %s202
      %p211 = scmp.eq.s32.totalorder %s21, 3
      %p212 = por %p210, %p211
      %p213 = scmp.ne.s32.totalorder %s202, %s203
      %p214 = scmp.eq.s32.totalorder %s21, 0
      %p215 = por %p213, %p214
      %p216 = scmp.ne.s32.totalorder %s202, %s203
      %p217 = scmp.eq.s32.totalorder %s22, 3
      %p218 = por %p216, %p217
      %p220 = scmp.ne.s32.totalorder %s203, %s219
      %p221 = scmp.eq.s32.totalorder %s22, 0
      %p222 = por %p220, %p221
      %p223 = scmp.le.s32.totalorder 1, %s16
      %p224 = scmp.lt.s32.totalorder %s16, 5
      %p225 = pnand %p223, %p224
      %p226 = pneg %p225
      // Predicated region
      $region9: #{res_block_forward.3} parent=5 // pred_check
        _
      $region10: #{res_block_forward.3} parent=5 // pred_check_branch
        %228 = sbr.rel (%p225) target = $region12
      $region11: #{res_block_forward.3} parent=5 // pred_region
        %s229 = ssub.s32 %s16, 1
        // Predicated region
        $region13: #{res_block_forward.3} parent=11 // pred_check
          %p230 = pneg %p103
        $region14: #{res_block_forward.3} parent=11 // pred_check_branch
          %232 = sbr.rel (%p230) target = $region16
        $region15: #{res_block_forward.3} parent=11 // pred_region
          _
        $region16: #{res_block_forward.3} parent=11 // pred_fallthru
          _
        // Predicated region
        $region17: #{res_block_forward.3} parent=11 // pred_check
          %p233 = pneg %p124
        $region18: #{res_block_forward.3} parent=11 // pred_check_branch
          %235 = sbr.rel (%p233) target = $region20
        $region19: #{res_block_forward.3} parent=11 // pred_region
          _
        $region20: #{res_block_forward.3} parent=11 // pred_fallthru
          _
        // Predicated region
        $region21: #{res_block_forward.3} parent=11 // pred_check
          %p236 = pneg %p145
        $region22: #{res_block_forward.3} parent=11 // pred_check_branch
          %238 = sbr.rel (%p236) target = $region24
        $region23: #{res_block_forward.3} parent=11 // pred_region
          _
        $region24: #{res_block_forward.3} parent=11 // pred_fallthru
          _
        // Predicated region
        $region25: #{res_block_forward.3} parent=11 // pred_check
          %p239 = pneg %p166
        $region26: #{res_block_forward.3} parent=11 // pred_check_branch
          %241 = sbr.rel (%p239) target = $region28
        $region27: #{res_block_forward.3} parent=11 // pred_region
          _
        $region28: #{res_block_forward.3} parent=11 // pred_fallthru
          _
        // Predicated region
        $region29: #{res_block_forward.3} parent=11 // pred_check
          %p242 = pneg %p187
        $region30: #{res_block_forward.3} parent=11 // pred_check_branch
          %244 = sbr.rel (%p242) target = $region32
        $region31: #{res_block_forward.3} parent=11 // pred_region
          _
        $region32: #{res_block_forward.3} parent=11 // pred_fallthru
          _
      $region12: #{res_block_forward.3} parent=5 // pred_fallthru
        _
      %p245 = scmp.lt.s32.totalorder %s16, 4
      // Predicated region
      $region33: #{res_block_forward.3} parent=5 // pred_check
        %p246 = pneg %p245
      $region34: #{res_block_forward.3} parent=5 // pred_check_branch
        %248 = sbr.rel (%p246) target = $region36
      $region35: #{res_block_forward.3} parent=5 // pred_region
        // Predicated region
        $region37: #{res_block_forward.3} parent=35 // pred_check
          %p249 = pneg %p48
        $region38: #{res_block_forward.3} parent=35 // pred_check_branch
          %251 = sbr.rel (%p249) target = $region40
        $region39: #{res_block_forward.3} parent=35 // pred_region
          %p252 = scmp.lt.s32.totalorder %s23, 1
          %s253 = scalar_select %p252, %s23, 1
          %s254 = smul.addr %s253, 32
          %s255 = smul.addr %s254, 8
          %s256 = scalar_lea.vmem %s0, %s255
        $region40: #{res_block_forward.3} parent=35 // pred_fallthru
          _
        // Predicated region
        $region41: #{res_block_forward.3} parent=35 // pred_check
          %p257 = pneg %p76
        $region42: #{res_block_forward.3} parent=35 // pred_check_branch
          %259 = sbr.rel (%p257) target = $region44
        $region43: #{res_block_forward.3} parent=35 // pred_region
          %s260 = smul.u32 8, %s24
          %p261 = scmp.lt.s32.totalorder %s23, 1
          %s262 = scalar_select %p261, %s23, 1
          %p263 = scmp.lt.s32.totalorder %s260, 15
          %s264 = scalar_select %p263, %s260, 15
          %s265 = smul.addr %s264, 2
          %s266 = smul.addr %s262, 32
          %s267 = sadd.s32 %s265, %s266
          %s268 = smul.addr %s267, 8
          %s269 = scalar_lea.vmem %s1, %s268
          %s270 = smul.u32 8, %s24
        $region44: #{res_block_forward.3} parent=35 // pred_fallthru
          _
      $region36: #{res_block_forward.3} parent=5 // pred_fallthru
        _
      %p271 = scmp.le.s32.totalorder 1, %s16
      %p272 = scmp.lt.s32.totalorder %s16, 5
      %p273 = pnand %p271, %p272
      %p274 = pneg %p273
      // Predicated region
      $region45: #{res_block_forward.3} parent=5 // pred_check
        _
      $region46: #{res_block_forward.3} parent=5 // pred_check_branch
        %276 = sbr.rel (%p273) target = $region48
      $region47: #{res_block_forward.3} parent=5 // pred_region
        %s277 = ssub.s32 %s16, 1
        %p278 = scmp.lt.s32.totalorder %s25, 1
        %s279 = scalar_select %p278, %s25, 1
        %s280 = smul.addr %s279, 32
        %s281 = smul.addr %s280, 8
        %s282 = scalar_lea.vmem %s0, %s281
        %p283 = pneg %p54
        %p284 = pneg %p51
        %s285 = smul.u32 8, %s26
        %p286 = scmp.lt.s32.totalorder %s25, 1
        %s287 = scalar_select %p286, %s25, 1
        %p288 = scmp.lt.s32.totalorder %s285, 15
        %s289 = scalar_select %p288, %s285, 15
        %s290 = smul.addr %s289, 2
        %s291 = smul.addr %s287, 32
        %s292 = sadd.s32 %s290, %s291
        %s293 = smul.addr %s292, 8
        %s294 = scalar_lea.vmem %s1, %s293
        %p295 = pneg %p82
        %p296 = pneg %p79
        %p297 = pneg %p103
        %p298 = pneg %p100
        %p299 = pneg %p124
        %p300 = pneg %p121
        %p301 = pneg %p145
        %p302 = pneg %p142
        %p303 = pneg %p166
        %p304 = pneg %p163
        %p305 = pneg %p187
        %p306 = pneg %p184
        %p307 = pneg %p215
        %p308 = pneg %p212
        %s309 = sand.u32 %s202, 1
        %s310 = scalar_lea.sflag [#allocation4], %s309
        %s311 = sand.u32 %s202, 1
        %s312 = smul.addr %s311, 128
        %s313 = scalar_lea.vmem [#allocation3], %s312
        %p314 = scmp.lt.s32.totalorder %s25, 1
        %s315 = scalar_select %p314, %s25, 1
        %s316 = smul.addr %s315, 32
        %s317 = smul.addr %s316, 8
        %s318 = scalar_lea.vmem %s0, %s317
        %s319 = smul.u32 8, %s26
        %p320 = scmp.lt.s32.totalorder %s25, 1
        %s321 = scalar_select %p320, %s25, 1
        %p322 = scmp.lt.s32.totalorder %s319, 15
        %s323 = scalar_select %p322, %s319, 15
        %s324 = smul.addr %s323, 2
        %s325 = smul.addr %s321, 32
        %s326 = sadd.s32 %s324, %s325
        %s327 = smul.addr %s326, 8
        %s328 = scalar_lea.vmem %s1, %s327
        %s329 = smul.u32 8, %s26
        %s330 = smul.u32 8, %s26
        %p331 = scmp.eq.s32.totalorder %s26, 0
        // Predicated region
        $region49: #{res_block_forward.3} parent=47 // pred_check
          %p332 = pneg %p331
        $region50: #{res_block_forward.3} parent=47 // pred_check_branch
          %334 = sbr.rel (%p332) target = $region52
        $region51: #{res_block_forward.3} parent=47 // pred_region
          %v335 = vld [vmem:[%s318] sm:$0xff]
          %v336 = vld [vmem:[%s318 + $0x8] sm:$0xff]
          %v337 = vld [vmem:[%s318 + $0x10] sm:$0xff]
          %v338 = vld [vmem:[%s318 + $0x18] sm:$0xff]
          %v339 = vld [vmem:[%s318 + $0x20] sm:$0xff]
          %v340 = vld [vmem:[%s318 + $0x28] sm:$0xff]
          %v341 = vld [vmem:[%s318 + $0x30] sm:$0xff]
          %v342 = vld [vmem:[%s318 + $0x38] sm:$0xff]
          %v343 = vld [vmem:[%s318 + $0x40] sm:$0xff]
          %v344 = vld [vmem:[%s318 + $0x48] sm:$0xff]
          %v345 = vld [vmem:[%s318 + $0x50] sm:$0xff]
          %v346 = vld [vmem:[%s318 + $0x58] sm:$0xff]
          %v347 = vld [vmem:[%s318 + $0x60] sm:$0xff]
          %v348 = vld [vmem:[%s318 + $0x68] sm:$0xff]
          %v349 = vld [vmem:[%s318 + $0x70] sm:$0xff]
          %v350 = vld [vmem:[%s318 + $0x78] sm:$0xff]
          %v351 = vld [vmem:[%s318 + $0x80] sm:$0xff]
          %v352 = vld [vmem:[%s318 + $0x88] sm:$0xff]
          %v353 = vld [vmem:[%s318 + $0x90] sm:$0xff]
          %v354 = vld [vmem:[%s318 + $0x98] sm:$0xff]
          %v355 = vld [vmem:[%s318 + $0xa0] sm:$0xff]
          %v356 = vld [vmem:[%s318 + $0xa8] sm:$0xff]
          %v357 = vld [vmem:[%s318 + $0xb0] sm:$0xff]
          %v358 = vld [vmem:[%s318 + $0xb8] sm:$0xff]
          %v359 = vld [vmem:[%s318 + $0xc0] sm:$0xff]
          %v360 = vld [vmem:[%s318 + $0xc8] sm:$0xff]
          %v361 = vld [vmem:[%s318 + $0xd0] sm:$0xff]
          %v362 = vld [vmem:[%s318 + $0xd8] sm:$0xff]
          %v363 = vld [vmem:[%s318 + $0xe0] sm:$0xff]
          %v364 = vld [vmem:[%s318 + $0xe8] sm:$0xff]
          %v365 = vld [vmem:[%s318 + $0xf0] sm:$0xff]
          %v366 = vld [vmem:[%s318 + $0xf8] sm:$0xff]
          %v367 = vld [vmem:[%s2] sm:$0x1]
          %v369 = vlaneseq
          %v370 = vshrl.u32 %v369, 7
          %v371 = vsub.s32 0, %v370
          %v372 = vrot.slane %v367, %v371
          %v374 = vmul.f32 %v335, %v372
          %v375 = vmul.f32 %v336, %v372
          %v376 = vmul.f32 %v337, %v372
          %v377 = vmul.f32 %v338, %v372
          %v378 = vmul.f32 %v339, %v372
          %v379 = vmul.f32 %v340, %v372
          %v380 = vmul.f32 %v341, %v372
          %v381 = vmul.f32 %v342, %v372
          %v382 = vmul.f32 %v343, %v372
          %v383 = vmul.f32 %v344, %v372
          %v384 = vmul.f32 %v345, %v372
          %v385 = vmul.f32 %v346, %v372
          %v386 = vmul.f32 %v347, %v372
          %v387 = vmul.f32 %v348, %v372
          %v388 = vmul.f32 %v349, %v372
          %v389 = vmul.f32 %v350, %v372
          %v390 = vmul.f32 %v351, %v372
          %v391 = vmul.f32 %v352, %v372
          %v392 = vmul.f32 %v353, %v372
          %v393 = vmul.f32 %v354, %v372
          %v394 = vmul.f32 %v355, %v372
          %v395 = vmul.f32 %v356, %v372
          %v396 = vmul.f32 %v357, %v372
          %v397 = vmul.f32 %v358, %v372
          %v398 = vmul.f32 %v359, %v372
          %v399 = vmul.f32 %v360, %v372
          %v400 = vmul.f32 %v361, %v372
          %v401 = vmul.f32 %v362, %v372
          %v402 = vmul.f32 %v363, %v372
          %v403 = vmul.f32 %v364, %v372
          %v404 = vmul.f32 %v365, %v372
          %v405 = vmul.f32 %v366, %v372
          %v406 = vld [vmem:[%s3] sm:$0x1]
          %v408 = vlaneseq
          %v409 = vshrl.u32 %v408, 7
          %v410 = vsub.s32 0, %v409
          %v411 = vrot.slane %v406, %v410
          %v413 = vadd.f32 %v374, %v411
          %v414 = vadd.f32 %v375, %v411
          %v415 = vadd.f32 %v376, %v411
          %v416 = vadd.f32 %v377, %v411
          %v417 = vadd.f32 %v378, %v411
          %v418 = vadd.f32 %v379, %v411
          %v419 = vadd.f32 %v380, %v411
          %v420 = vadd.f32 %v381, %v411
          %v421 = vadd.f32 %v382, %v411
          %v422 = vadd.f32 %v383, %v411
          %v423 = vadd.f32 %v384, %v411
          %v424 = vadd.f32 %v385, %v411
          %v425 = vadd.f32 %v386, %v411
          %v426 = vadd.f32 %v387, %v411
          %v427 = vadd.f32 %v388, %v411
          %v428 = vadd.f32 %v389, %v411
          %v429 = vadd.f32 %v390, %v411
          %v430 = vadd.f32 %v391, %v411
          %v431 = vadd.f32 %v392, %v411
          %v432 = vadd.f32 %v393, %v411
          %v433 = vadd.f32 %v394, %v411
          %v434 = vadd.f32 %v395, %v411
          %v435 = vadd.f32 %v396, %v411
          %v436 = vadd.f32 %v397, %v411
          %v437 = vadd.f32 %v398, %v411
          %v438 = vadd.f32 %v399, %v411
          %v439 = vadd.f32 %v400, %v411
          %v440 = vadd.f32 %v401, %v411
          %v441 = vadd.f32 %v402, %v411
          %v442 = vadd.f32 %v403, %v411
          %v443 = vadd.f32 %v404, %v411
          %v444 = vadd.f32 %v405, %v411
          %vm445 = vcmp.gt.f32.partialorder %v413, 0.0
          %vm446 = vcmp.gt.f32.partialorder %v414, 0.0
          %vm447 = vcmp.gt.f32.partialorder %v415, 0.0
          %vm448 = vcmp.gt.f32.partialorder %v416, 0.0
          %vm449 = vcmp.gt.f32.partialorder %v417, 0.0
          %vm450 = vcmp.gt.f32.partialorder %v418, 0.0
          %vm451 = vcmp.gt.f32.partialorder %v419, 0.0
          %vm452 = vcmp.gt.f32.partialorder %v420, 0.0
          %vm453 = vcmp.gt.f32.partialorder %v421, 0.0
          %vm454 = vcmp.gt.f32.partialorder %v422, 0.0
          %vm455 = vcmp.gt.f32.partialorder %v423, 0.0
          %vm456 = vcmp.gt.f32.partialorder %v424, 0.0
          %vm457 = vcmp.gt.f32.partialorder %v425, 0.0
          %vm458 = vcmp.gt.f32.partialorder %v426, 0.0
          %vm459 = vcmp.gt.f32.partialorder %v427, 0.0
          %vm460 = vcmp.gt.f32.partialorder %v428, 0.0
          %vm461 = vcmp.gt.f32.partialorder %v429, 0.0
          %vm462 = vcmp.gt.f32.partialorder %v430, 0.0
          %vm463 = vcmp.gt.f32.partialorder %v431, 0.0
          %vm464 = vcmp.gt.f32.partialorder %v432, 0.0
          %vm465 = vcmp.gt.f32.partialorder %v433, 0.0
          %vm466 = vcmp.gt.f32.partialorder %v434, 0.0
          %vm467 = vcmp.gt.f32.partialorder %v435, 0.0
          %vm468 = vcmp.gt.f32.partialorder %v436, 0.0
          %vm469 = vcmp.gt.f32.partialorder %v437, 0.0
          %vm470 = vcmp.gt.f32.partialorder %v438, 0.0
          %vm471 = vcmp.gt.f32.partialorder %v439, 0.0
          %vm472 = vcmp.gt.f32.partialorder %v440, 0.0
          %vm473 = vcmp.gt.f32.partialorder %v441, 0.0
          %vm474 = vcmp.gt.f32.partialorder %v442, 0.0
          %vm475 = vcmp.gt.f32.partialorder %v443, 0.0
          %vm476 = vcmp.gt.f32.partialorder %v444, 0.0
          %v477 = vld [vmem:[%s4] sm:$0x1]
          %v479 = vlaneseq
          %v480 = vshrl.u32 %v479, 7
          %v481 = vsub.s32 0, %v480
          %v482 = vrot.slane %v477, %v481
          %v484 = vmul.f32 %v482, %v413
          %v485 = vmul.f32 %v482, %v414
          %v486 = vmul.f32 %v482, %v415
          %v487 = vmul.f32 %v482, %v416
          %v488 = vmul.f32 %v482, %v417
          %v489 = vmul.f32 %v482, %v418
          %v490 = vmul.f32 %v482, %v419
          %v491 = vmul.f32 %v482, %v420
          %v492 = vmul.f32 %v482, %v421
          %v493 = vmul.f32 %v482, %v422
          %v494 = vmul.f32 %v482, %v423
          %v495 = vmul.f32 %v482, %v424
          %v496 = vmul.f32 %v482, %v425
          %v497 = vmul.f32 %v482, %v426
          %v498 = vmul.f32 %v482, %v427
          %v499 = vmul.f32 %v482, %v428
          %v500 = vmul.f32 %v482, %v429
          %v501 = vmul.f32 %v482, %v430
          %v502 = vmul.f32 %v482, %v431
          %v503 = vmul.f32 %v482, %v432
          %v504 = vmul.f32 %v482, %v433
          %v505 = vmul.f32 %v482, %v434
          %v506 = vmul.f32 %v482, %v435
          %v507 = vmul.f32 %v482, %v436
          %v508 = vmul.f32 %v482, %v437
          %v509 = vmul.f32 %v482, %v438
          %v510 = vmul.f32 %v482, %v439
          %v511 = vmul.f32 %v482, %v440
          %v512 = vmul.f32 %v482, %v441
          %v513 = vmul.f32 %v482, %v442
          %v514 = vmul.f32 %v482, %v443
          %v515 = vmul.f32 %v482, %v444
          %v516 = vsel %vm445, %v413, %v484
          %v517 = vsel %vm446, %v414, %v485
          %v518 = vsel %vm447, %v415, %v486
          %v519 = vsel %vm448, %v416, %v487
          %v520 = vsel %vm449, %v417, %v488
          %v521 = vsel %vm450, %v418, %v489
          %v522 = vsel %vm451, %v419, %v490
          %v523 = vsel %vm452, %v420, %v491
          %v524 = vsel %vm453, %v421, %v492
          %v525 = vsel %vm454, %v422, %v493
          %v526 = vsel %vm455, %v423, %v494
          %v527 = vsel %vm456, %v424, %v495
          %v528 = vsel %vm457, %v425, %v496
          %v529 = vsel %vm458, %v426, %v497
          %v530 = vsel %vm459, %v427, %v498
          %v531 = vsel %vm460, %v428, %v499
          %v532 = vsel %vm461, %v429, %v500
          %v533 = vsel %vm462, %v430, %v501
          %v534 = vsel %vm463, %v431, %v502
          %v535 = vsel %vm464, %v432, %v503
          %v536 = vsel %vm465, %v433, %v504
          %v537 = vsel %vm466, %v434, %v505
          %v538 = vsel %vm467, %v435, %v506
          %v539 = vsel %vm468, %v436, %v507
          %v540 = vsel %vm469, %v437, %v508
          %v541 = vsel %vm470, %v438, %v509
          %v542 = vsel %vm471, %v439, %v510
          %v543 = vsel %vm472, %v440, %v511
          %v544 = vsel %vm473, %v441, %v512
          %v545 = vsel %vm474, %v442, %v513
          %v546 = vsel %vm475, %v443, %v514
          %v547 = vsel %vm476, %v444, %v515
          %548 = vst [vmem:[#allocation2] sm:$0xff] 0.0
          %vm549 = vcmask 261120
          %550 = vst.msk [vmem:[#allocation2 + $0x8] sm:$0xff] %vm549, 0.0
          %551 = vst [vmem:[#allocation2 + $0x10] sm:$0xff] 0.0
          %552 = vst.msk [vmem:[#allocation2 + $0x18] sm:$0xff] %vm549, 0.0
          %553 = vst [vmem:[#allocation2 + $0x20] sm:$0xff] 0.0
          %554 = vst.msk [vmem:[#allocation2 + $0x28] sm:$0xff] %vm549, 0.0
          %555 = vst [vmem:[#allocation2 + $0x30] sm:$0xff] 0.0
          %556 = vst.msk [vmem:[#allocation2 + $0x38] sm:$0xff] %vm549, 0.0
          %557 = vst [vmem:[#allocation2 + $0x40] sm:$0xff] 0.0
          %558 = vst.msk [vmem:[#allocation2 + $0x48] sm:$0xff] %vm549, 0.0
          %559 = vst [vmem:[#allocation2 + $0x50] sm:$0xff] 0.0
          %560 = vst.msk [vmem:[#allocation2 + $0x58] sm:$0xff] %vm549, 0.0
          %561 = vst [vmem:[#allocation2 + $0x60] sm:$0xff] 0.0
          %562 = vst.msk [vmem:[#allocation2 + $0x68] sm:$0xff] %vm549, 0.0
          %563 = vst [vmem:[#allocation2 + $0x70] sm:$0xff] 0.0
          %564 = vst.msk [vmem:[#allocation2 + $0x78] sm:$0xff] %vm549, 0.0
          %565 = vst [vmem:[#allocation2 + $0x80] sm:$0xff] 0.0
          %566 = vst.msk [vmem:[#allocation2 + $0x88] sm:$0xff] %vm549, 0.0
          %567 = vst [vmem:[#allocation2 + $0x90] sm:$0xff] 0.0
          %568 = vst.msk [vmem:[#allocation2 + $0x98] sm:$0xff] %vm549, 0.0
          %569 = vst [vmem:[#allocation2 + $0xa0] sm:$0xff] 0.0
          %570 = vst.msk [vmem:[#allocation2 + $0xa8] sm:$0xff] %vm549, 0.0
          %571 = vst [vmem:[#allocation2 + $0xb0] sm:$0xff] 0.0
          %572 = vst.msk [vmem:[#allocation2 + $0xb8] sm:$0xff] %vm549, 0.0
          %573 = vst [vmem:[#allocation2 + $0xc0] sm:$0xff] 0.0
          %574 = vst.msk [vmem:[#allocation2 + $0xc8] sm:$0xff] %vm549, 0.0
          %575 = vst [vmem:[#allocation2 + $0xd0] sm:$0xff] 0.0
          %576 = vst.msk [vmem:[#allocation2 + $0xd8] sm:$0xff] %vm549, 0.0
          %577 = vst [vmem:[#allocation2 + $0xe0] sm:$0xff] 0.0
          %578 = vst.msk [vmem:[#allocation2 + $0xe8] sm:$0xff] %vm549, 0.0
          %579 = vst [vmem:[#allocation2 + $0xf0] sm:$0xff] 0.0
          %580 = vst.msk [vmem:[#allocation2 + $0xf8] sm:$0xff] %vm549, 0.0
          %581 = vst [vmem:[#allocation2 + $0x100] sm:$0xff] 0.0
          %582 = vst.msk [vmem:[#allocation2 + $0x108] sm:$0xff] %vm549, 0.0
          %583 = vst [vmem:[#allocation2 + $0x110] sm:$0xff] 0.0
          %584 = vst.msk [vmem:[#allocation2 + $0x118] sm:$0xff] %vm549, 0.0
          %585 = vst [vmem:[#allocation2 + $0x120] sm:$0xff] 0.0
          %586 = vst.msk [vmem:[#allocation2 + $0x128] sm:$0xff] %vm549, 0.0
          %587 = vst [vmem:[#allocation2 + $0x130] sm:$0xff] 0.0
          %588 = vst.msk [vmem:[#allocation2 + $0x138] sm:$0xff] %vm549, 0.0
          %589 = vst [vmem:[#allocation2 + $0x140] sm:$0xff] 0.0
          %590 = vst.msk [vmem:[#allocation2 + $0x148] sm:$0xff] %vm549, 0.0
          %591 = vst [vmem:[#allocation2 + $0x150] sm:$0xff] 0.0
          %592 = vst.msk [vmem:[#allocation2 + $0x158] sm:$0xff] %vm549, 0.0
          %593 = vst [vmem:[#allocation2 + $0x160] sm:$0xff] 0.0
          %594 = vst.msk [vmem:[#allocation2 + $0x168] sm:$0xff] %vm549, 0.0
          %595 = vst [vmem:[#allocation2 + $0x170] sm:$0xff] 0.0
          %596 = vst.msk [vmem:[#allocation2 + $0x178] sm:$0xff] %vm549, 0.0
          %597 = vst [vmem:[#allocation2 + $0x180] sm:$0xff] 0.0
          %598 = vst.msk [vmem:[#allocation2 + $0x188] sm:$0xff] %vm549, 0.0
          %599 = vst [vmem:[#allocation2 + $0x190] sm:$0xff] 0.0
          %600 = vst.msk [vmem:[#allocation2 + $0x198] sm:$0xff] %vm549, 0.0
          %601 = vst [vmem:[#allocation2 + $0x1a0] sm:$0xff] 0.0
          %602 = vst.msk [vmem:[#allocation2 + $0x1a8] sm:$0xff] %vm549, 0.0
          %603 = vst [vmem:[#allocation2 + $0x1b0] sm:$0xff] 0.0
          %604 = vst.msk [vmem:[#allocation2 + $0x1b8] sm:$0xff] %vm549, 0.0
          %605 = vst [vmem:[#allocation2 + $0x1c0] sm:$0xff] 0.0
          %606 = vst.msk [vmem:[#allocation2 + $0x1c8] sm:$0xff] %vm549, 0.0
          %607 = vst [vmem:[#allocation2 + $0x1d0] sm:$0xff] 0.0
          %608 = vst.msk [vmem:[#allocation2 + $0x1d8] sm:$0xff] %vm549, 0.0
          %609 = vst [vmem:[#allocation2 + $0x1e0] sm:$0xff] 0.0
          %610 = vst.msk [vmem:[#allocation2 + $0x1e8] sm:$0xff] %vm549, 0.0
          %611 = vst [vmem:[#allocation2 + $0x1f0] sm:$0xff] 0.0
          %612 = vst.msk [vmem:[#allocation2 + $0x1f8] sm:$0xff] %vm549, 0.0
          %613 = vst [vmem:[#allocation2 + $0x200] sm:$0xff] 0.0
          %614 = vst.msk [vmem:[#allocation2 + $0x208] sm:$0xff] %vm549, 0.0
          %615 = vst [vmem:[#allocation2 + $0x210] sm:$0xff] 0.0
          %616 = vst.msk [vmem:[#allocation2 + $0x218] sm:$0xff] %vm549, 0.0
          %617 = vst [vmem:[#allocation2 + $0x220] sm:$0xff] 0.0
          %618 = vst.msk [vmem:[#allocation2 + $0x228] sm:$0xff] %vm549, 0.0
          %619 = vst [vmem:[#allocation2 + $0x230] sm:$0xff] 0.0
          %620 = vst.msk [vmem:[#allocation2 + $0x238] sm:$0xff] %vm549, 0.0
          %621 = vst [vmem:[#allocation2 + $0x240] sm:$0xff] 0.0
          %622 = vst.msk [vmem:[#allocation2 + $0x248] sm:$0xff] %vm549, 0.0
          %623 = vst [vmem:[#allocation2 + $0x250] sm:$0xff] 0.0
          %624 = vst.msk [vmem:[#allocation2 + $0x258] sm:$0xff] %vm549, 0.0
          %625 = vst [vmem:[#allocation2 + $0x260] sm:$0xff] 0.0
          %626 = vst.msk [vmem:[#allocation2 + $0x268] sm:$0xff] %vm549, 0.0
          %627 = vst [vmem:[#allocation2 + $0x270] sm:$0xff] 0.0
          %628 = vst.msk [vmem:[#allocation2 + $0x278] sm:$0xff] %vm549, 0.0
          %vm661 = vcmask 1041408
          %v662 = vrot.slane %v516, 6
          %v663 = vrot.slane %v517, 6
          %v664 = vsel %vm661, %v662, %v663
          %v665 = vrot.slane %v518, 6
          %v666 = vrot.slane %v519, 6
          %v667 = vsel %vm661, %v665, %v666
          %v668 = vrot.slane %v520, 6
          %v669 = vrot.slane %v521, 6
          %v670 = vsel %vm661, %v668, %v669
          %v671 = vrot.slane %v522, 6
          %v672 = vrot.slane %v523, 6
          %v673 = vsel %vm661, %v671, %v672
          %v674 = vrot.slane %v524, 6
          %v675 = vrot.slane %v525, 6
          %v676 = vsel %vm661, %v674, %v675
          %v677 = vrot.slane %v526, 6
          %v678 = vrot.slane %v527, 6
          %v679 = vsel %vm661, %v677, %v678
          %v680 = vrot.slane %v528, 6
          %v681 = vrot.slane %v529, 6
          %v682 = vsel %vm661, %v680, %v681
          %v683 = vrot.slane %v530, 6
          %v684 = vrot.slane %v531, 6
          %v685 = vsel %vm661, %v683, %v684
          %v686 = vrot.slane %v532, 6
          %v687 = vrot.slane %v533, 6
          %v688 = vsel %vm661, %v686, %v687
          %v689 = vrot.slane %v534, 6
          %v690 = vrot.slane %v535, 6
          %v691 = vsel %vm661, %v689, %v690
          %v692 = vrot.slane %v536, 6
          %v693 = vrot.slane %v537, 6
          %v694 = vsel %vm661, %v692, %v693
          %v695 = vrot.slane %v538, 6
          %v696 = vrot.slane %v539, 6
          %v697 = vsel %vm661, %v695, %v696
          %v698 = vrot.slane %v540, 6
          %v699 = vrot.slane %v541, 6
          %v700 = vsel %vm661, %v698, %v699
          %v701 = vrot.slane %v542, 6
          %v702 = vrot.slane %v543, 6
          %v703 = vsel %vm661, %v701, %v702
          %v704 = vrot.slane %v544, 6
          %v705 = vrot.slane %v545, 6
          %v706 = vsel %vm661, %v704, %v705
          %v707 = vrot.slane %v546, 6
          %v708 = vrot.slane %v547, 6
          %v709 = vsel %vm661, %v707, %v708
          %s742 = scalar_lea.vmem [#allocation2], 64
          %vm743 = vcmask 261122
          %744 = vst.msk [vmem:[%s742] sm:$0xfc] %vm743, %v662
          %745 = vst.msk [vmem:[%s742 + $0x10] sm:$0xff] %vm549, %v664
          %746 = vst.msk [vmem:[%s742 + $0x20] sm:$0xfc] %vm743, %v665
          %747 = vst.msk [vmem:[%s742 + $0x30] sm:$0xff] %vm549, %v667
          %748 = vst.msk [vmem:[%s742 + $0x40] sm:$0xfc] %vm743, %v668
          %749 = vst.msk [vmem:[%s742 + $0x50] sm:$0xff] %vm549, %v670
          %750 = vst.msk [vmem:[%s742 + $0x60] sm:$0xfc] %vm743, %v671
          %751 = vst.msk [vmem:[%s742 + $0x70] sm:$0xff] %vm549, %v673
          %752 = vst.msk [vmem:[%s742 + $0x80] sm:$0xfc] %vm743, %v674
          %753 = vst.msk [vmem:[%s742 + $0x90] sm:$0xff] %vm549, %v676
          %754 = vst.msk [vmem:[%s742 + $0xa0] sm:$0xfc] %vm743, %v677
          %755 = vst.msk [vmem:[%s742 + $0xb0] sm:$0xff] %vm549, %v679
          %756 = vst.msk [vmem:[%s742 + $0xc0] sm:$0xfc] %vm743, %v680
          %757 = vst.msk [vmem:[%s742 + $0xd0] sm:$0xff] %vm549, %v682
          %758 = vst.msk [vmem:[%s742 + $0xe0] sm:$0xfc] %vm743, %v683
          %759 = vst.msk [vmem:[%s742 + $0xf0] sm:$0xff] %vm549, %v685
          %760 = vst.msk [vmem:[%s742 + $0x100] sm:$0xfc] %vm743, %v686
          %761 = vst.msk [vmem:[%s742 + $0x110] sm:$0xff] %vm549, %v688
          %762 = vst.msk [vmem:[%s742 + $0x120] sm:$0xfc] %vm743, %v689
          %763 = vst.msk [vmem:[%s742 + $0x130] sm:$0xff] %vm549, %v691
          %764 = vst.msk [vmem:[%s742 + $0x140] sm:$0xfc] %vm743, %v692
          %765 = vst.msk [vmem:[%s742 + $0x150] sm:$0xff] %vm549, %v694
          %766 = vst.msk [vmem:[%s742 + $0x160] sm:$0xfc] %vm743, %v695
          %767 = vst.msk [vmem:[%s742 + $0x170] sm:$0xff] %vm549, %v697
          %768 = vst.msk [vmem:[%s742 + $0x180] sm:$0xfc] %vm743, %v698
          %769 = vst.msk [vmem:[%s742 + $0x190] sm:$0xff] %vm549, %v700
          %770 = vst.msk [vmem:[%s742 + $0x1a0] sm:$0xfc] %vm743, %v701
          %771 = vst.msk [vmem:[%s742 + $0x1b0] sm:$0xff] %vm549, %v703
          %772 = vst.msk [vmem:[%s742 + $0x1c0] sm:$0xfc] %vm743, %v704
          %773 = vst.msk [vmem:[%s742 + $0x1d0] sm:$0xff] %vm549, %v706
          %774 = vst.msk [vmem:[%s742 + $0x1e0] sm:$0xfc] %vm743, %v707
          %775 = vst.msk [vmem:[%s742 + $0x1f0] sm:$0xff] %vm549, %v709
          %vm776 = vcmask 1040384
          %v777 = vrot.slane %v516, 7
          %v778 = vrot.slane %v517, 7
          %v779 = vsel %vm776, %v777, %v778
          %v780 = vrot.slane %v518, 7
          %v781 = vrot.slane %v519, 7
          %v782 = vsel %vm776, %v780, %v781
          %v783 = vrot.slane %v520, 7
          %v784 = vrot.slane %v521, 7
          %v785 = vsel %vm776, %v783, %v784
          %v786 = vrot.slane %v522, 7
          %v787 = vrot.slane %v523, 7
          %v788 = vsel %vm776, %v786, %v787
          %v789 = vrot.slane %v524, 7
          %v790 = vrot.slane %v525, 7
          %v791 = vsel %vm776, %v789, %v790
          %v792 = vrot.slane %v526, 7
          %v793 = vrot.slane %v527, 7
          %v794 = vsel %vm776, %v792, %v793
          %v795 = vrot.slane %v528, 7
          %v796 = vrot.slane %v529, 7
          %v797 = vsel %vm776, %v795, %v796
          %v798 = vrot.slane %v530, 7
          %v799 = vrot.slane %v531, 7
          %v800 = vsel %vm776, %v798, %v799
          %v801 = vrot.slane %v532, 7
          %v802 = vrot.slane %v533, 7
          %v803 = vsel %vm776, %v801, %v802
          %v804 = vrot.slane %v534, 7
          %v805 = vrot.slane %v535, 7
          %v806 = vsel %vm776, %v804, %v805
          %v807 = vrot.slane %v536, 7
          %v808 = vrot.slane %v537, 7
          %v809 = vsel %vm776, %v807, %v808
          %v810 = vrot.slane %v538, 7
          %v811 = vrot.slane %v539, 7
          %v812 = vsel %vm776, %v810, %v811
          %v813 = vrot.slane %v540, 7
          %v814 = vrot.slane %v541, 7
          %v815 = vsel %vm776, %v813, %v814
          %v816 = vrot.slane %v542, 7
          %v817 = vrot.slane %v543, 7
          %v818 = vsel %vm776, %v816, %v817
          %v819 = vrot.slane %v544, 7
          %v820 = vrot.slane %v545, 7
          %v821 = vsel %vm776, %v819, %v820
          %v822 = vrot.slane %v546, 7
          %v823 = vrot.slane %v547, 7
          %v824 = vsel %vm776, %v822, %v823
          %825 = vrot.lane.b32.xlu0 %v777, 32
          %v826 = vpop.permute.xlu0 %825
          %827 = vrot.lane.b32.xlu0 %v779, 32
          %v828 = vpop.permute.xlu0 %827
          %829 = vrot.lane.b32.xlu0 %v780, 32
          %v830 = vpop.permute.xlu0 %829
          %831 = vrot.lane.b32.xlu0 %v782, 32
          %v832 = vpop.permute.xlu0 %831
          %833 = vrot.lane.b32.xlu0 %v783, 32
          %v834 = vpop.permute.xlu0 %833
          %835 = vrot.lane.b32.xlu0 %v785, 32
          %v836 = vpop.permute.xlu0 %835
          %837 = vrot.lane.b32.xlu0 %v786, 32
          %v838 = vpop.permute.xlu0 %837
          %839 = vrot.lane.b32.xlu0 %v788, 32
          %v840 = vpop.permute.xlu0 %839
          %841 = vrot.lane.b32.xlu0 %v789, 32
          %v842 = vpop.permute.xlu0 %841
          %843 = vrot.lane.b32.xlu0 %v791, 32
          %v844 = vpop.permute.xlu0 %843
          %845 = vrot.lane.b32.xlu0 %v792, 32
          %v846 = vpop.permute.xlu0 %845
          %847 = vrot.lane.b32.xlu0 %v794, 32
          %v848 = vpop.permute.xlu0 %847
          %849 = vrot.lane.b32.xlu0 %v795, 32
          %v850 = vpop.permute.xlu0 %849
          %851 = vrot.lane.b32.xlu0 %v797, 32
          %v852 = vpop.permute.xlu0 %851
          %853 = vrot.lane.b32.xlu0 %v798, 32
          %v854 = vpop.permute.xlu0 %853
          %855 = vrot.lane.b32.xlu0 %v800, 32
          %v856 = vpop.permute.xlu0 %855
          %857 = vrot.lane.b32.xlu0 %v801, 32
          %v858 = vpop.permute.xlu0 %857
          %859 = vrot.lane.b32.xlu0 %v803, 32
          %v860 = vpop.permute.xlu0 %859
          %861 = vrot.lane.b32.xlu0 %v804, 32
          %v862 = vpop.permute.xlu0 %861
          %863 = vrot.lane.b32.xlu0 %v806, 32
          %v864 = vpop.permute.xlu0 %863
          %865 = vrot.lane.b32.xlu0 %v807, 32
          %v866 = vpop.permute.xlu0 %865
          %867 = vrot.lane.b32.xlu0 %v809, 32
          %v868 = vpop.permute.xlu0 %867
          %869 = vrot.lane.b32.xlu0 %v810, 32
          %v870 = vpop.permute.xlu0 %869
          %871 = vrot.lane.b32.xlu0 %v812, 32
          %v872 = vpop.permute.xlu0 %871
          %873 = vrot.lane.b32.xlu0 %v813, 32
          %v874 = vpop.permute.xlu0 %873
          %875 = vrot.lane.b32.xlu0 %v815, 32
          %v876 = vpop.permute.xlu0 %875
          %877 = vrot.lane.b32.xlu0 %v816, 32
          %v878 = vpop.permute.xlu0 %877
          %879 = vrot.lane.b32.xlu0 %v818, 32
          %v880 = vpop.permute.xlu0 %879
          %881 = vrot.lane.b32.xlu0 %v819, 32
          %v882 = vpop.permute.xlu0 %881
          %883 = vrot.lane.b32.xlu0 %v821, 32
          %v884 = vpop.permute.xlu0 %883
          %885 = vrot.lane.b32.xlu0 %v822, 32
          %v886 = vpop.permute.xlu0 %885
          %887 = vrot.lane.b32.xlu0 %v824, 32
          %v888 = vpop.permute.xlu0 %887
          %vm921 = vcmask 523521
          %922 = vst.msk [vmem:[%s742] sm:$0xfe] %vm921, %v826
          %vm923 = vcmask 523520
          %924 = vst.msk [vmem:[%s742 + $0x10] sm:$0xff] %vm923, %v828
          %925 = vst.msk [vmem:[%s742 + $0x20] sm:$0xfe] %vm921, %v830
          %926 = vst.msk [vmem:[%s742 + $0x30] sm:$0xff] %vm923, %v832
          %927 = vst.msk [vmem:[%s742 + $0x40] sm:$0xfe] %vm921, %v834
          %928 = vst.msk [vmem:[%s742 + $0x50] sm:$0xff] %vm923, %v836
          %929 = vst.msk [vmem:[%s742 + $0x60] sm:$0xfe] %vm921, %v838
          %930 = vst.msk [vmem:[%s742 + $0x70] sm:$0xff] %vm923, %v840
          %931 = vst.msk [vmem:[%s742 + $0x80] sm:$0xfe] %vm921, %v842
          %932 = vst.msk [vmem:[%s742 + $0x90] sm:$0xff] %vm923, %v844
          %933 = vst.msk [vmem:[%s742 + $0xa0] sm:$0xfe] %vm921, %v846
          %934 = vst.msk [vmem:[%s742 + $0xb0] sm:$0xff] %vm923, %v848
          %935 = vst.msk [vmem:[%s742 + $0xc0] sm:$0xfe] %vm921, %v850
          %936 = vst.msk [vmem:[%s742 + $0xd0] sm:$0xff] %vm923, %v852
          %937 = vst.msk [vmem:[%s742 + $0xe0] sm:$0xfe] %vm921, %v854
          %938 = vst.msk [vmem:[%s742 + $0xf0] sm:$0xff] %vm923, %v856
          %939 = vst.msk [vmem:[%s742 + $0x100] sm:$0xfe] %vm921, %v858
          %940 = vst.msk [vmem:[%s742 + $0x110] sm:$0xff] %vm923, %v860
          %941 = vst.msk [vmem:[%s742 + $0x120] sm:$0xfe] %vm921, %v862
          %942 = vst.msk [vmem:[%s742 + $0x130] sm:$0xff] %vm923, %v864
          %943 = vst.msk [vmem:[%s742 + $0x140] sm:$0xfe] %vm921, %v866
          %944 = vst.msk [vmem:[%s742 + $0x150] sm:$0xff] %vm923, %v868
          %945 = vst.msk [vmem:[%s742 + $0x160] sm:$0xfe] %vm921, %v870
          %946 = vst.msk [vmem:[%s742 + $0x170] sm:$0xff] %vm923, %v872
          %947 = vst.msk [vmem:[%s742 + $0x180] sm:$0xfe] %vm921, %v874
          %948 = vst.msk [vmem:[%s742 + $0x190] sm:$0xff] %vm923, %v876
          %949 = vst.msk [vmem:[%s742 + $0x1a0] sm:$0xfe] %vm921, %v878
          %950 = vst.msk [vmem:[%s742 + $0x1b0] sm:$0xff] %vm923, %v880
          %951 = vst.msk [vmem:[%s742 + $0x1c0] sm:$0xfe] %vm921, %v882
          %952 = vst.msk [vmem:[%s742 + $0x1d0] sm:$0xff] %vm923, %v884
          %953 = vst.msk [vmem:[%s742 + $0x1e0] sm:$0xfe] %vm921, %v886
          %954 = vst.msk [vmem:[%s742 + $0x1f0] sm:$0xff] %vm923, %v888
          %955 = vrot.lane.b32.xlu0 %v516, 64
          %v956 = vpop.permute.xlu0 %955
          %957 = vrot.lane.b32.xlu0 %v517, 64
          %v958 = vpop.permute.xlu0 %957
          %959 = vrot.lane.b32.xlu0 %v518, 64
          %v960 = vpop.permute.xlu0 %959
          %961 = vrot.lane.b32.xlu0 %v519, 64
          %v962 = vpop.permute.xlu0 %961
          %963 = vrot.lane.b32.xlu0 %v520, 64
          %v964 = vpop.permute.xlu0 %963
          %965 = vrot.lane.b32.xlu0 %v521, 64
          %v966 = vpop.permute.xlu0 %965
          %967 = vrot.lane.b32.xlu0 %v522, 64
          %v968 = vpop.permute.xlu0 %967
          %969 = vrot.lane.b32.xlu0 %v523, 64
          %v970 = vpop.permute.xlu0 %969
          %971 = vrot.lane.b32.xlu0 %v524, 64
          %v972 = vpop.permute.xlu0 %971
          %973 = vrot.lane.b32.xlu0 %v525, 64
          %v974 = vpop.permute.xlu0 %973
          %975 = vrot.lane.b32.xlu0 %v526, 64
          %v976 = vpop.permute.xlu0 %975
          %977 = vrot.lane.b32.xlu0 %v527, 64
          %v978 = vpop.permute.xlu0 %977
          %979 = vrot.lane.b32.xlu0 %v528, 64
          %v980 = vpop.permute.xlu0 %979
          %981 = vrot.lane.b32.xlu0 %v529, 64
          %v982 = vpop.permute.xlu0 %981
          %983 = vrot.lane.b32.xlu0 %v530, 64
          %v984 = vpop.permute.xlu0 %983
          %985 = vrot.lane.b32.xlu0 %v531, 64
          %v986 = vpop.permute.xlu0 %985
          %987 = vrot.lane.b32.xlu0 %v532, 64
          %v988 = vpop.permute.xlu0 %987
          %989 = vrot.lane.b32.xlu0 %v533, 64
          %v990 = vpop.permute.xlu0 %989
          %991 = vrot.lane.b32.xlu0 %v534, 64
          %v992 = vpop.permute.xlu0 %991
          %993 = vrot.lane.b32.xlu0 %v535, 64
          %v994 = vpop.permute.xlu0 %993
          %995 = vrot.lane.b32.xlu0 %v536, 64
          %v996 = vpop.permute.xlu0 %995
          %997 = vrot.lane.b32.xlu0 %v537, 64
          %v998 = vpop.permute.xlu0 %997
          %999 = vrot.lane.b32.xlu0 %v538, 64
          %v1000 = vpop.permute.xlu0 %999
          %1001 = vrot.lane.b32.xlu0 %v539, 64
          %v1002 = vpop.permute.xlu0 %1001
          %1003 = vrot.lane.b32.xlu0 %v540, 64
          %v1004 = vpop.permute.xlu0 %1003
          %1005 = vrot.lane.b32.xlu0 %v541, 64
          %v1006 = vpop.permute.xlu0 %1005
          %1007 = vrot.lane.b32.xlu0 %v542, 64
          %v1008 = vpop.permute.xlu0 %1007
          %1009 = vrot.lane.b32.xlu0 %v543, 64
          %v1010 = vpop.permute.xlu0 %1009
          %1011 = vrot.lane.b32.xlu0 %v544, 64
          %v1012 = vpop.permute.xlu0 %1011
          %1013 = vrot.lane.b32.xlu0 %v545, 64
          %v1014 = vpop.permute.xlu0 %1013
          %1015 = vrot.lane.b32.xlu0 %v546, 64
          %v1016 = vpop.permute.xlu0 %1015
          %1017 = vrot.lane.b32.xlu0 %v547, 64
          %v1018 = vpop.permute.xlu0 %1017
          %vm1051 = vcmask 785920
          %1052 = vst.msk [vmem:[%s742] sm:$0xff] %vm1051, %v956
          %1053 = vst.msk [vmem:[%s742 + $0x10] sm:$0xff] %vm1051, %v958
          %1054 = vst.msk [vmem:[%s742 + $0x20] sm:$0xff] %vm1051, %v960
          %1055 = vst.msk [vmem:[%s742 + $0x30] sm:$0xff] %vm1051, %v962
          %1056 = vst.msk [vmem:[%s742 + $0x40] sm:$0xff] %vm1051, %v964
          %1057 = vst.msk [vmem:[%s742 + $0x50] sm:$0xff] %vm1051, %v966
          %1058 = vst.msk [vmem:[%s742 + $0x60] sm:$0xff] %vm1051, %v968
          %1059 = vst.msk [vmem:[%s742 + $0x70] sm:$0xff] %vm1051, %v970
          %1060 = vst.msk [vmem:[%s742 + $0x80] sm:$0xff] %vm1051, %v972
          %1061 = vst.msk [vmem:[%s742 + $0x90] sm:$0xff] %vm1051, %v974
          %1062 = vst.msk [vmem:[%s742 + $0xa0] sm:$0xff] %vm1051, %v976
          %1063 = vst.msk [vmem:[%s742 + $0xb0] sm:$0xff] %vm1051, %v978
          %1064 = vst.msk [vmem:[%s742 + $0xc0] sm:$0xff] %vm1051, %v980
          %1065 = vst.msk [vmem:[%s742 + $0xd0] sm:$0xff] %vm1051, %v982
          %1066 = vst.msk [vmem:[%s742 + $0xe0] sm:$0xff] %vm1051, %v984
          %1067 = vst.msk [vmem:[%s742 + $0xf0] sm:$0xff] %vm1051, %v986
          %1068 = vst.msk [vmem:[%s742 + $0x100] sm:$0xff] %vm1051, %v988
          %1069 = vst.msk [vmem:[%s742 + $0x110] sm:$0xff] %vm1051, %v990
          %1070 = vst.msk [vmem:[%s742 + $0x120] sm:$0xff] %vm1051, %v992
          %1071 = vst.msk [vmem:[%s742 + $0x130] sm:$0xff] %vm1051, %v994
          %1072 = vst.msk [vmem:[%s742 + $0x140] sm:$0xff] %vm1051, %v996
          %1073 = vst.msk [vmem:[%s742 + $0x150] sm:$0xff] %vm1051, %v998
          %1074 = vst.msk [vmem:[%s742 + $0x160] sm:$0xff] %vm1051, %v1000
          %1075 = vst.msk [vmem:[%s742 + $0x170] sm:$0xff] %vm1051, %v1002
          %1076 = vst.msk [vmem:[%s742 + $0x180] sm:$0xff] %vm1051, %v1004
          %1077 = vst.msk [vmem:[%s742 + $0x190] sm:$0xff] %vm1051, %v1006
          %1078 = vst.msk [vmem:[%s742 + $0x1a0] sm:$0xff] %vm1051, %v1008
          %1079 = vst.msk [vmem:[%s742 + $0x1b0] sm:$0xff] %vm1051, %v1010
          %1080 = vst.msk [vmem:[%s742 + $0x1c0] sm:$0xff] %vm1051, %v1012
          %1081 = vst.msk [vmem:[%s742 + $0x1d0] sm:$0xff] %vm1051, %v1014
          %1082 = vst.msk [vmem:[%s742 + $0x1e0] sm:$0xff] %vm1051, %v1016
          %1083 = vst.msk [vmem:[%s742 + $0x1f0] sm:$0xff] %vm1051, %v1018
          %vm1084 = vcmask 1046528
          %v1085 = vrot.slane %v516, 1
          %v1086 = vrot.slane %v517, 1
          %v1087 = vsel %vm1084, %v1085, %v1086
          %v1088 = vrot.slane %v518, 1
          %v1089 = vrot.slane %v519, 1
          %v1090 = vsel %vm1084, %v1088, %v1089
          %v1091 = vrot.slane %v520, 1
          %v1092 = vrot.slane %v521, 1
          %v1093 = vsel %vm1084, %v1091, %v1092
          %v1094 = vrot.slane %v522, 1
          %v1095 = vrot.slane %v523, 1
          %v1096 = vsel %vm1084, %v1094, %v1095
          %v1097 = vrot.slane %v524, 1
          %v1098 = vrot.slane %v525, 1
          %v1099 = vsel %vm1084, %v1097, %v1098
          %v1100 = vrot.slane %v526, 1
          %v1101 = vrot.slane %v527, 1
          %v1102 = vsel %vm1084, %v1100, %v1101
          %v1103 = vrot.slane %v528, 1
          %v1104 = vrot.slane %v529, 1
          %v1105 = vsel %vm1084, %v1103, %v1104
          %v1106 = vrot.slane %v530, 1
          %v1107 = vrot.slane %v531, 1
          %v1108 = vsel %vm1084, %v1106, %v1107
          %v1109 = vrot.slane %v532, 1
          %v1110 = vrot.slane %v533, 1
          %v1111 = vsel %vm1084, %v1109, %v1110
          %v1112 = vrot.slane %v534, 1
          %v1113 = vrot.slane %v535, 1
          %v1114 = vsel %vm1084, %v1112, %v1113
          %v1115 = vrot.slane %v536, 1
          %v1116 = vrot.slane %v537, 1
          %v1117 = vsel %vm1084, %v1115, %v1116
          %v1118 = vrot.slane %v538, 1
          %v1119 = vrot.slane %v539, 1
          %v1120 = vsel %vm1084, %v1118, %v1119
          %v1121 = vrot.slane %v540, 1
          %v1122 = vrot.slane %v541, 1
          %v1123 = vsel %vm1084, %v1121, %v1122
          %v1124 = vrot.slane %v542, 1
          %v1125 = vrot.slane %v543, 1
          %v1126 = vsel %vm1084, %v1124, %v1125
          %v1127 = vrot.slane %v544, 1
          %v1128 = vrot.slane %v545, 1
          %v1129 = vsel %vm1084, %v1127, %v1128
          %v1130 = vrot.slane %v546, 1
          %v1131 = vrot.slane %v547, 1
          %v1132 = vsel %vm1084, %v1130, %v1131
          %1133 = vrot.lane.b32.xlu0 %v1087, 96
          %v1134 = vpop.permute.xlu0 %1133
          %1135 = vrot.lane.b32.xlu0 %v1086, 96
          %v1136 = vpop.permute.xlu0 %1135
          %1137 = vrot.lane.b32.xlu0 %v1090, 96
          %v1138 = vpop.permute.xlu0 %1137
          %1139 = vrot.lane.b32.xlu0 %v1089, 96
          %v1140 = vpop.permute.xlu0 %1139
          %1141 = vrot.lane.b32.xlu0 %v1093, 96
          %v1142 = vpop.permute.xlu0 %1141
          %1143 = vrot.lane.b32.xlu0 %v1092, 96
          %v1144 = vpop.permute.xlu0 %1143
          %1145 = vrot.lane.b32.xlu0 %v1096, 96
          %v1146 = vpop.permute.xlu0 %1145
          %1147 = vrot.lane.b32.xlu0 %v1095, 96
          %v1148 = vpop.permute.xlu0 %1147
          %1149 = vrot.lane.b32.xlu0 %v1099, 96
          %v1150 = vpop.permute.xlu0 %1149
          %1151 = vrot.lane.b32.xlu0 %v1098, 96
          %v1152 = vpop.permute.xlu0 %1151
          %1153 = vrot.lane.b32.xlu0 %v1102, 96
          %v1154 = vpop.permute.xlu0 %1153
          %1155 = vrot.lane.b32.xlu0 %v1101, 96
          %v1156 = vpop.permute.xlu0 %1155
          %1157 = vrot.lane.b32.xlu0 %v1105, 96
          %v1158 = vpop.permute.xlu0 %1157
          %1159 = vrot.lane.b32.xlu0 %v1104, 96
          %v1160 = vpop.permute.xlu0 %1159
          %1161 = vrot.lane.b32.xlu0 %v1108, 96
          %v1162 = vpop.permute.xlu0 %1161
          %1163 = vrot.lane.b32.xlu0 %v1107, 96
          %v1164 = vpop.permute.xlu0 %1163
          %1165 = vrot.lane.b32.xlu0 %v1111, 96
          %v1166 = vpop.permute.xlu0 %1165
          %1167 = vrot.lane.b32.xlu0 %v1110, 96
          %v1168 = vpop.permute.xlu0 %1167
          %1169 = vrot.lane.b32.xlu0 %v1114, 96
          %v1170 = vpop.permute.xlu0 %1169
          %1171 = vrot.lane.b32.xlu0 %v1113, 96
          %v1172 = vpop.permute.xlu0 %1171
          %1173 = vrot.lane.b32.xlu0 %v1117, 96
          %v1174 = vpop.permute.xlu0 %1173
          %1175 = vrot.lane.b32.xlu0 %v1116, 96
          %v1176 = vpop.permute.xlu0 %1175
          %1177 = vrot.lane.b32.xlu0 %v1120, 96
          %v1178 = vpop.permute.xlu0 %1177
          %1179 = vrot.lane.b32.xlu0 %v1119, 96
          %v1180 = vpop.permute.xlu0 %1179
          %1181 = vrot.lane.b32.xlu0 %v1123, 96
          %v1182 = vpop.permute.xlu0 %1181
          %1183 = vrot.lane.b32.xlu0 %v1122, 96
          %v1184 = vpop.permute.xlu0 %1183
          %1185 = vrot.lane.b32.xlu0 %v1126, 96
          %v1186 = vpop.permute.xlu0 %1185
          %1187 = vrot.lane.b32.xlu0 %v1125, 96
          %v1188 = vpop.permute.xlu0 %1187
          %1189 = vrot.lane.b32.xlu0 %v1129, 96
          %v1190 = vpop.permute.xlu0 %1189
          %1191 = vrot.lane.b32.xlu0 %v1128, 96
          %v1192 = vpop.permute.xlu0 %1191
          %1193 = vrot.lane.b32.xlu0 %v1132, 96
          %v1194 = vpop.permute.xlu0 %1193
          %1195 = vrot.lane.b32.xlu0 %v1131, 96
          %v1196 = vpop.permute.xlu0 %1195
          %vm1229 = vcmask 1048320
          %1230 = vst.msk [vmem:[%s742] sm:$0xff] %vm1229, %v1134
          %vm1231 = vcmask 1047296
          %1232 = vst.msk [vmem:[%s742 + $0x10] sm:$0x7f] %vm1231, %v1136
          %1233 = vst.msk [vmem:[%s742 + $0x20] sm:$0xff] %vm1229, %v1138
          %1234 = vst.msk [vmem:[%s742 + $0x30] sm:$0x7f] %vm1231, %v1140
          %1235 = vst.msk [vmem:[%s742 + $0x40] sm:$0xff] %vm1229, %v1142
          %1236 = vst.msk [vmem:[%s742 + $0x50] sm:$0x7f] %vm1231, %v1144
          %1237 = vst.msk [vmem:[%s742 + $0x60] sm:$0xff] %vm1229, %v1146
          %1238 = vst.msk [vmem:[%s742 + $0x70] sm:$0x7f] %vm1231, %v1148
          %1239 = vst.msk [vmem:[%s742 + $0x80] sm:$0xff] %vm1229, %v1150
          %1240 = vst.msk [vmem:[%s742 + $0x90] sm:$0x7f] %vm1231, %v1152
          %1241 = vst.msk [vmem:[%s742 + $0xa0] sm:$0xff] %vm1229, %v1154
          %1242 = vst.msk [vmem:[%s742 + $0xb0] sm:$0x7f] %vm1231, %v1156
          %1243 = vst.msk [vmem:[%s742 + $0xc0] sm:$0xff] %vm1229, %v1158
          %1244 = vst.msk [vmem:[%s742 + $0xd0] sm:$0x7f] %vm1231, %v1160
          %1245 = vst.msk [vmem:[%s742 + $0xe0] sm:$0xff] %vm1229, %v1162
          %1246 = vst.msk [vmem:[%s742 + $0xf0] sm:$0x7f] %vm1231, %v1164
          %1247 = vst.msk [vmem:[%s742 + $0x100] sm:$0xff] %vm1229, %v1166
          %1248 = vst.msk [vmem:[%s742 + $0x110] sm:$0x7f] %vm1231, %v1168
          %1249 = vst.msk [vmem:[%s742 + $0x120] sm:$0xff] %vm1229, %v1170
          %1250 = vst.msk [vmem:[%s742 + $0x130] sm:$0x7f] %vm1231, %v1172
          %1251 = vst.msk [vmem:[%s742 + $0x140] sm:$0xff] %vm1229, %v1174
          %1252 = vst.msk [vmem:[%s742 + $0x150] sm:$0x7f] %vm1231, %v1176
          %1253 = vst.msk [vmem:[%s742 + $0x160] sm:$0xff] %vm1229, %v1178
          %1254 = vst.msk [vmem:[%s742 + $0x170] sm:$0x7f] %vm1231, %v1180
          %1255 = vst.msk [vmem:[%s742 + $0x180] sm:$0xff] %vm1229, %v1182
          %1256 = vst.msk [vmem:[%s742 + $0x190] sm:$0x7f] %vm1231, %v1184
          %1257 = vst.msk [vmem:[%s742 + $0x1a0] sm:$0xff] %vm1229, %v1186
          %1258 = vst.msk [vmem:[%s742 + $0x1b0] sm:$0x7f] %vm1231, %v1188
          %1259 = vst.msk [vmem:[%s742 + $0x1c0] sm:$0xff] %vm1229, %v1190
          %1260 = vst.msk [vmem:[%s742 + $0x1d0] sm:$0x7f] %vm1231, %v1192
          %1261 = vst.msk [vmem:[%s742 + $0x1e0] sm:$0xff] %vm1229, %v1194
          %1262 = vst.msk [vmem:[%s742 + $0x1f0] sm:$0x7f] %vm1231, %v1196
          %vm1263 = vcmask 1045504
          %v1264 = vrot.slane %v516, 2
          %v1265 = vrot.slane %v517, 2
          %v1266 = vsel %vm1263, %v1264, %v1265
          %v1267 = vrot.slane %v518, 2
          %v1268 = vrot.slane %v519, 2
          %v1269 = vsel %vm1263, %v1267, %v1268
          %v1270 = vrot.slane %v520, 2
          %v1271 = vrot.slane %v521, 2
          %v1272 = vsel %vm1263, %v1270, %v1271
          %v1273 = vrot.slane %v522, 2
          %v1274 = vrot.slane %v523, 2
          %v1275 = vsel %vm1263, %v1273, %v1274
          %v1276 = vrot.slane %v524, 2
          %v1277 = vrot.slane %v525, 2
          %v1278 = vsel %vm1263, %v1276, %v1277
          %v1279 = vrot.slane %v526, 2
          %v1280 = vrot.slane %v527, 2
          %v1281 = vsel %vm1263, %v1279, %v1280
          %v1282 = vrot.slane %v528, 2
          %v1283 = vrot.slane %v529, 2
          %v1284 = vsel %vm1263, %v1282, %v1283
          %v1285 = vrot.slane %v530, 2
          %v1286 = vrot.slane %v531, 2
          %v1287 = vsel %vm1263, %v1285, %v1286
          %v1288 = vrot.slane %v532, 2
          %v1289 = vrot.slane %v533, 2
          %v1290 = vsel %vm1263, %v1288, %v1289
          %v1291 = vrot.slane %v534, 2
          %v1292 = vrot.slane %v535, 2
          %v1293 = vsel %vm1263, %v1291, %v1292
          %v1294 = vrot.slane %v536, 2
          %v1295 = vrot.slane %v537, 2
          %v1296 = vsel %vm1263, %v1294, %v1295
          %v1297 = vrot.slane %v538, 2
          %v1298 = vrot.slane %v539, 2
          %v1299 = vsel %vm1263, %v1297, %v1298
          %v1300 = vrot.slane %v540, 2
          %v1301 = vrot.slane %v541, 2
          %v1302 = vsel %vm1263, %v1300, %v1301
          %v1303 = vrot.slane %v542, 2
          %v1304 = vrot.slane %v543, 2
          %v1305 = vsel %vm1263, %v1303, %v1304
          %v1306 = vrot.slane %v544, 2
          %v1307 = vrot.slane %v545, 2
          %v1308 = vsel %vm1263, %v1306, %v1307
          %v1309 = vrot.slane %v546, 2
          %v1310 = vrot.slane %v547, 2
          %v1311 = vsel %vm1263, %v1309, %v1310
          %1344 = vst.msk [vmem:[%s742 + $0x8] sm:$0xff] %vm549, %v1266
          %vm1345 = vcmask 259072
          %1346 = vst.msk [vmem:[%s742 + $0x18] sm:$0x3f] %vm1345, %v1265
          %1347 = vst.msk [vmem:[%s742 + $0x28] sm:$0xff] %vm549, %v1269
          %1348 = vst.msk [vmem:[%s742 + $0x38] sm:$0x3f] %vm1345, %v1268
          %1349 = vst.msk [vmem:[%s742 + $0x48] sm:$0xff] %vm549, %v1272
          %1350 = vst.msk [vmem:[%s742 + $0x58] sm:$0x3f] %vm1345, %v1271
          %1351 = vst.msk [vmem:[%s742 + $0x68] sm:$0xff] %vm549, %v1275
          %1352 = vst.msk [vmem:[%s742 + $0x78] sm:$0x3f] %vm1345, %v1274
          %1353 = vst.msk [vmem:[%s742 + $0x88] sm:$0xff] %vm549, %v1278
          %1354 = vst.msk [vmem:[%s742 + $0x98] sm:$0x3f] %vm1345, %v1277
          %1355 = vst.msk [vmem:[%s742 + $0xa8] sm:$0xff] %vm549, %v1281
          %1356 = vst.msk [vmem:[%s742 + $0xb8] sm:$0x3f] %vm1345, %v1280
          %1357 = vst.msk [vmem:[%s742 + $0xc8] sm:$0xff] %vm549, %v1284
          %1358 = vst.msk [vmem:[%s742 + $0xd8] sm:$0x3f] %vm1345, %v1283
          %1359 = vst.msk [vmem:[%s742 + $0xe8] sm:$0xff] %vm549, %v1287
          %1360 = vst.msk [vmem:[%s742 + $0xf8] sm:$0x3f] %vm1345, %v1286
          %1361 = vst.msk [vmem:[%s742 + $0x108] sm:$0xff] %vm549, %v1290
          %1362 = vst.msk [vmem:[%s742 + $0x118] sm:$0x3f] %vm1345, %v1289
          %1363 = vst.msk [vmem:[%s742 + $0x128] sm:$0xff] %vm549, %v1293
          %1364 = vst.msk [vmem:[%s742 + $0x138] sm:$0x3f] %vm1345, %v1292
          %1365 = vst.msk [vmem:[%s742 + $0x148] sm:$0xff] %vm549, %v1296
          %1366 = vst.msk [vmem:[%s742 + $0x158] sm:$0x3f] %vm1345, %v1295
          %1367 = vst.msk [vmem:[%s742 + $0x168] sm:$0xff] %vm549, %v1299
          %1368 = vst.msk [vmem:[%s742 + $0x178] sm:$0x3f] %vm1345, %v1298
          %1369 = vst.msk [vmem:[%s742 + $0x188] sm:$0xff] %vm549, %v1302
          %1370 = vst.msk [vmem:[%s742 + $0x198] sm:$0x3f] %vm1345, %v1301
          %1371 = vst.msk [vmem:[%s742 + $0x1a8] sm:$0xff] %vm549, %v1305
          %1372 = vst.msk [vmem:[%s742 + $0x1b8] sm:$0x3f] %vm1345, %v1304
          %1373 = vst.msk [vmem:[%s742 + $0x1c8] sm:$0xff] %vm549, %v1308
          %1374 = vst.msk [vmem:[%s742 + $0x1d8] sm:$0x3f] %vm1345, %v1307
          %1375 = vst.msk [vmem:[%s742 + $0x1e8] sm:$0xff] %vm549, %v1311
          %1376 = vst.msk [vmem:[%s742 + $0x1f8] sm:$0x3f] %vm1345, %v1310
        $region52: #{res_block_forward.3} parent=47 // pred_fallthru
          _
        %s1377 = smul.u32 %s26, 8
        %s1378 = smul.u32 %s1377, 4
        %s1379 = smul.addr %s1378, 8
        %s1380 = scalar_lea.vmem [#allocation2], %s1379
        %v1381 = vld [vmem:[%s1380] sm:$0xff]
        %v1382 = vld [vmem:[%s1380 + $0x8] sm:$0xff]
        %v1383 = vld [vmem:[%s1380 + $0x10] sm:$0xff]
        %v1384 = vld [vmem:[%s1380 + $0x18] sm:$0xff]
        %v1385 = vld [vmem:[%s1380 + $0x20] sm:$0xff]
        %v1386 = vld [vmem:[%s1380 + $0x28] sm:$0xff]
        %v1387 = vld [vmem:[%s1380 + $0x30] sm:$0xff]
        %v1388 = vld [vmem:[%s1380 + $0x38] sm:$0xff]
        %v1389 = vld [vmem:[%s1380 + $0x40] sm:$0xff]
        %v1390 = vld [vmem:[%s1380 + $0x48] sm:$0xff]
        %v1391 = vld [vmem:[%s1380 + $0x50] sm:$0xff]
        %v1392 = vld [vmem:[%s1380 + $0x58] sm:$0xff]
        %v1393 = vld [vmem:[%s1380 + $0x60] sm:$0xff]
        %v1394 = vld [vmem:[%s1380 + $0x68] sm:$0xff]
        %v1395 = vld [vmem:[%s1380 + $0x70] sm:$0xff]
        %v1396 = vld [vmem:[%s1380 + $0x78] sm:$0xff]
        %v1397 = vld [vmem:[%s1380 + $0x80] sm:$0xff]
        %v1398 = vld [vmem:[%s1380 + $0x88] sm:$0xff]
        %v1399 = vld [vmem:[%s1380 + $0x90] sm:$0xff]
        %v1400 = vld [vmem:[%s1380 + $0x98] sm:$0xff]
        %v1401 = vld [vmem:[%s1380 + $0xa0] sm:$0xff]
        %v1402 = vld [vmem:[%s1380 + $0xa8] sm:$0xff]
        %v1403 = vld [vmem:[%s1380 + $0xb0] sm:$0xff]
        %v1404 = vld [vmem:[%s1380 + $0xb8] sm:$0xff]
        %v1405 = vld [vmem:[%s1380 + $0xc0] sm:$0xff]
        %v1406 = vld [vmem:[%s1380 + $0xc8] sm:$0xff]
        %v1407 = vld [vmem:[%s1380 + $0xd0] sm:$0xff]
        %v1408 = vld [vmem:[%s1380 + $0xd8] sm:$0xff]
        %v1409 = vld [vmem:[%s1380 + $0xe0] sm:$0xff]
        %v1410 = vld [vmem:[%s1380 + $0xe8] sm:$0xff]
        %v1411 = vld [vmem:[%s1380 + $0xf0] sm:$0xff]
        %v1412 = vld [vmem:[%s1380 + $0xf8] sm:$0xff]
        %v1413 = vld [vmem:[%s1380 + $0x100] sm:$0xff]
        %v1414 = vld [vmem:[%s1380 + $0x108] sm:$0xff]
        %v1415 = vld [vmem:[%s1380 + $0x110] sm:$0xff]
        %v1416 = vld [vmem:[%s1380 + $0x118] sm:$0xff]
        %v1417 = vld [vmem:[%s1380 + $0x120] sm:$0xff]
        %v1418 = vld [vmem:[%s1380 + $0x128] sm:$0xff]
        %v1419 = vld [vmem:[%s1380 + $0x130] sm:$0xff]
        %v1420 = vld [vmem:[%s1380 + $0x138] sm:$0xff]
        %v1421 = vld [vmem:[%s1380 + $0x140] sm:$0xff]
        %v1422 = vld [vmem:[%s1380 + $0x148] sm:$0xff]
        %v1423 = vld [vmem:[%s1380 + $0x150] sm:$0xff]
        %v1424 = vld [vmem:[%s1380 + $0x158] sm:$0xff]
        %v1425 = vld [vmem:[%s1380 + $0x160] sm:$0xff]
        %v1426 = vld [vmem:[%s1380 + $0x168] sm:$0xff]
        %v1427 = vld [vmem:[%s1380 + $0x170] sm:$0xff]
        %v1428 = vld [vmem:[%s1380 + $0x178] sm:$0xff]
        %v1429 = vld [vmem:[%s5] sm:$0xff]
        %v1430 = vld [vmem:[%s5 + $0x8] sm:$0xff]
        %v1431 = vld [vmem:[%s5 + $0x10] sm:$0xff]
        %v1432 = vld [vmem:[%s5 + $0x18] sm:$0xff]
        %v1433 = vld [vmem:[%s5 + $0x20] sm:$0xff]
        %v1434 = vld [vmem:[%s5 + $0x28] sm:$0xff]
        %v1435 = vld [vmem:[%s5 + $0x30] sm:$0xff]
        %v1436 = vld [vmem:[%s5 + $0x38] sm:$0xff]
        %v1437 = vld [vmem:[%s5 + $0x40] sm:$0xff]
        %v1438 = vld [vmem:[%s5 + $0x48] sm:$0xff]
        %v1439 = vld [vmem:[%s5 + $0x50] sm:$0xff]
        %v1440 = vld [vmem:[%s5 + $0x58] sm:$0xff]
        %v1441 = vld [vmem:[%s5 + $0x60] sm:$0xff]
        %v1442 = vld [vmem:[%s5 + $0x68] sm:$0xff]
        %v1443 = vld [vmem:[%s5 + $0x70] sm:$0xff]
        %v1444 = vld [vmem:[%s5 + $0x78] sm:$0xff]
        %v1445 = vld [vmem:[%s5 + $0x80] sm:$0xff]
        %v1446 = vld [vmem:[%s5 + $0x88] sm:$0xff]
        %v1447 = vld [vmem:[%s5 + $0x90] sm:$0xff]
        %v1448 = vld [vmem:[%s5 + $0x98] sm:$0xff]
        %s1449 = scalar_lea.vmem %s5, 160
        %v1450 = vld [vmem:[%s1449] sm:$0xff]
        %v1451 = vld [vmem:[%s1449 + $0x8] sm:$0xff]
        %v1452 = vld [vmem:[%s1449 + $0x10] sm:$0xff]
        %v1453 = vld [vmem:[%s1449 + $0x18] sm:$0xff]
        %v1454 = vld [vmem:[%s1449 + $0x20] sm:$0xff]
        %v1455 = vld [vmem:[%s1449 + $0x28] sm:$0xff]
        %v1456 = vld [vmem:[%s1449 + $0x30] sm:$0xff]
        %v1457 = vld [vmem:[%s1449 + $0x38] sm:$0xff]
        %v1458 = vld [vmem:[%s1449 + $0x40] sm:$0xff]
        %v1459 = vld [vmem:[%s1449 + $0x48] sm:$0xff]
        %v1460 = vld [vmem:[%s1449 + $0x50] sm:$0xff]
        %v1461 = vld [vmem:[%s1449 + $0x58] sm:$0xff]
        %v1462 = vld [vmem:[%s1449 + $0x60] sm:$0xff]
        %v1463 = vld [vmem:[%s1449 + $0x68] sm:$0xff]
        %v1464 = vld [vmem:[%s1449 + $0x70] sm:$0xff]
        %v1465 = vld [vmem:[%s1449 + $0x78] sm:$0xff]
        %v1466 = vld [vmem:[%s1449 + $0x80] sm:$0xff]
        %v1467 = vld [vmem:[%s1449 + $0x88] sm:$0xff]
        %v1468 = vld [vmem:[%s1449 + $0x90] sm:$0xff]
        %v1469 = vld [vmem:[%s1449 + $0x98] sm:$0xff]
        %vm1470 = vcmask 261120
        %v1472 = vsel %vm1470, %v1386, 0
        %v1475 = vsel %vm1470, %v1388, 0
        %v1478 = vsel %vm1470, %v1390, 0
        %v1481 = vsel %vm1470, %v1392, 0
        %v1484 = vsel %vm1470, %v1394, 0
        %v1487 = vsel %vm1470, %v1396, 0
        %v1490 = vsel %vm1470, %v1398, 0
        %v1493 = vsel %vm1470, %v1400, 0
        %v1496 = vsel %vm1470, %v1402, 0
        %v1499 = vsel %vm1470, %v1404, 0
        %v1502 = vsel %vm1470, %v1406, 0
        %v1505 = vsel %vm1470, %v1408, 0
        %v1508 = vsel %vm1470, %v1410, 0
        %v1511 = vsel %vm1470, %v1412, 0
        %v1514 = vsel %vm1470, %v1414, 0
        %v1517 = vsel %vm1470, %v1416, 0
        %1519 = vmatprep.subr.mxu0 0.0
        %1520 = vmatpush1.msra.mxu0 %v1450
        %1521 = vmatprep.subr.mxu0 0.0
        %1522 = vmatpush1.msra.mxu0 %v1451
        %1523 = vmatprep.subr.mxu0 0.0
        %1524 = vmatpush1.msra.mxu0 %v1452
        %1525 = vmatprep.subr.mxu0 0.0
        %1526 = vmatpush1.msra.mxu0 %v1453
        %1527 = vmatprep.subr.mxu0 0.0
        %1528 = vmatpush1.msra.mxu0 %v1454
        %1529 = vmatprep.subr.mxu0 0.0
        %1530 = vmatpush1.msra.mxu0 %v1455
        %1531 = vmatprep.subr.mxu0 0.0
        %1532 = vmatpush1.msra.mxu0 %v1456
        %1533 = vmatprep.subr.mxu0 0.0
        %1534 = vmatpush1.msra.mxu0 %v1457
        %1535 = vmatprep.subr.mxu0 0.0
        %1536 = vmatpush1.msra.mxu0 %v1458
        %1537 = vmatprep.subr.mxu0 0.0
        %1538 = vmatpush1.msra.mxu0 %v1459
        %1539 = vmatprep.subr.mxu0 0.0
        %1540 = vmatpush1.msra.mxu0 %v1460
        %1541 = vmatprep.subr.mxu0 0.0
        %1542 = vmatpush1.msra.mxu0 %v1461
        %1543 = vmatprep.subr.mxu0 0.0
        %1544 = vmatpush1.msra.mxu0 %v1462
        %1545 = vmatprep.subr.mxu0 0.0
        %1546 = vmatpush1.msra.mxu0 %v1463
        %1547 = vmatprep.subr.mxu0 0.0
        %1548 = vmatpush1.msra.mxu0 %v1464
        %1549 = vmatprep.subr.mxu0 0.0
        %1550 = vmatpush1.msra.mxu0 %v1465
        %1551 = vmatprep.subr.mxu0 0.0
        %1552 = vmatpush1.msra.mxu0 %v1466
        %1553 = vmatprep.subr.mxu0 0.0
        %1554 = vmatpush1.msra.mxu0 %v1467
        %1555 = vmatprep.subr.mxu0 0.0
        %1556 = vmatpush1.msra.mxu0 %v1468
        %1557 = vmatprep.subr.mxu0 0.0
        %1558 = vmatpush1.msra.mxu0 %v1469
        %1559 = vmatprep.subr.mxu0 0.0
        %1560 = vmatpush1.msra.mxu0 0.0
        %1561 = vmatprep.subr.mxu0 0.0
        %1562 = vmatpush1.msra.mxu0 0.0
        %1563 = vmatprep.subr.mxu0 0.0
        %1564 = vmatpush1.msra.mxu0 0.0
        %1565 = vmatprep.subr.mxu0 0.0
        %1566 = vmatpush1.msra.mxu0 0.0
        %1567 = vmatprep.subr.mxu0 0.0
        %1568 = vmatpush1.msra.mxu0 0.0
        %1569 = vmatprep.subr.mxu0 0.0
        %1570 = vmatpush1.msra.mxu0 0.0
        %1571 = vmatprep.subr.mxu0 0.0
        %1572 = vmatpush1.msra.mxu0 0.0
        %1573 = vmatprep.subr.mxu0 0.0
        %1574 = vmatpush1.msra.mxu0 0.0
        %1575 = vmatprep.subr.mxu0 0.0
        %1576 = vmatpush1.msra.mxu0 0.0
        %1577 = vmatprep.subr.mxu0 0.0
        %1578 = vmatpush1.msra.mxu0 0.0
        %1579 = vmatprep.subr.mxu0 0.0
        %1580 = vmatpush1.msra.mxu0 0.0
        %1581 = vmatprep.subr.mxu0 0.0
        %1582 = vmatpush1.msra.mxu0 0.0
        %1583 = vmatprep.mubr.f32.mxu0 %v1472
        %1584 = vmatmul.mubr.f32.gmra.mrb[0].mxu0 %v1385
        %v1585 = vpop.f32.mrb[0].mxu0
        %v1586 = vadd.f32 0.0, %v1585
        %v1587 = vpop.f32.mrb[0].mxu0
        %1588 = vmatprep.mubr.f32.mxu0 %v1475
        %1589 = vmatmul.mubr.f32.gmra.mrb[0].mxu0 %v1387
        %v1590 = vpop.f32.mrb[0].mxu0
        %v1591 = vadd.f32 0.0, %v1590
        %v1592 = vpop.f32.mrb[0].mxu0
        %1593 = vmatprep.mubr.f32.mxu0 %v1478
        %1594 = vmatmul.mubr.f32.gmra.mrb[0].mxu0 %v1389
        %v1595 = vpop.f32.mrb[0].mxu0
        %v1596 = vadd.f32 0.0, %v1595
        %v1597 = vpop.f32.mrb[0].mxu0
        %1598 = vmatprep.mubr.f32.mxu0 %v1481
        %1599 = vmatmul.mubr.f32.gmra.mrb[0].mxu0 %v1391
        %v1600 = vpop.f32.mrb[0].mxu0
        %v1601 = vadd.f32 0.0, %v1600
        %v1602 = vpop.f32.mrb[0].mxu0
        %1603 = vmatprep.mubr.f32.mxu0 %v1484
        %1604 = vmatmul.mubr.f32.gmra.mrb[0].mxu0 %v1393
        %v1605 = vpop.f32.mrb[0].mxu0
        %v1606 = vadd.f32 0.0, %v1605
        %v1607 = vpop.f32.mrb[0].mxu0
        %1608 = vmatprep.mubr.f32.mxu0 %v1487
        %1609 = vmatmul.mubr.f32.gmra.mrb[0].mxu0 %v1395
        %v1610 = vpop.f32.mrb[0].mxu0
        %v1611 = vadd.f32 0.0, %v1610
        %v1612 = vpop.f32.mrb[0].mxu0
        %1613 = vmatprep.mubr.f32.mxu0 %v1490
        %1614 = vmatmul.mubr.f32.gmra.mrb[0].mxu0 %v1397
        %v1615 = vpop.f32.mrb[0].mxu0
        %v1616 = vadd.f32 0.0, %v1615
        %v1617 = vpop.f32.mrb[0].mxu0
        %1618 = vmatprep.mubr.f32.mxu0 %v1493
        %1619 = vmatmul.mubr.f32.gmra.mrb[0].mxu0 %v1399
        %v1620 = vpop.f32.mrb[0].mxu0
        %v1621 = vadd.f32 0.0, %v1620
        %v1622 = vpop.f32.mrb[0].mxu0
        %1623 = vmatprep.mubr.f32.mxu0 %v1496
        %1624 = vmatmul.mubr.f32.gmra.mrb[0].mxu0 %v1401
        %v1625 = vpop.f32.mrb[0].mxu0
        %v1626 = vadd.f32 0.0, %v1625
        %v1627 = vpop.f32.mrb[0].mxu0
        %1628 = vmatprep.mubr.f32.mxu0 %v1499
        %1629 = vmatmul.mubr.f32.gmra.mrb[0].mxu0 %v1403
        %v1630 = vpop.f32.mrb[0].mxu0
        %v1631 = vadd.f32 0.0, %v1630
        %v1632 = vpop.f32.mrb[0].mxu0
        %1633 = vmatprep.mubr.f32.mxu0 %v1502
        %1634 = vmatmul.mubr.f32.gmra.mrb[0].mxu0 %v1405
        %v1635 = vpop.f32.mrb[0].mxu0
        %v1636 = vadd.f32 0.0, %v1635
        %v1637 = vpop.f32.mrb[0].mxu0
        %1638 = vmatprep.mubr.f32.mxu0 %v1505
        %1639 = vmatmul.mubr.f32.gmra.mrb[0].mxu0 %v1407
        %v1640 = vpop.f32.mrb[0].mxu0
        %v1641 = vadd.f32 0.0, %v1640
        %v1642 = vpop.f32.mrb[0].mxu0
        %1643 = vmatprep.mubr.f32.mxu0 %v1508
        %1644 = vmatmul.mubr.f32.gmra.mrb[0].mxu0 %v1409
        %v1645 = vpop.f32.mrb[0].mxu0
        %v1646 = vadd.f32 0.0, %v1645
        %v1647 = vpop.f32.mrb[0].mxu0
        %1648 = vmatprep.mubr.f32.mxu0 %v1511
        %1649 = vmatmul.mubr.f32.gmra.mrb[0].mxu0 %v1411
        %v1650 = vpop.f32.mrb[0].mxu0
        %v1651 = vadd.f32 0.0, %v1650
        %v1652 = vpop.f32.mrb[0].mxu0
        %1653 = vmatprep.mubr.f32.mxu0 %v1514
        %1654 = vmatmul.mubr.f32.gmra.mrb[0].mxu0 %v1413
        %v1655 = vpop.f32.mrb[0].mxu0
        %v1656 = vadd.f32 0.0, %v1655
        %v1657 = vpop.f32.mrb[0].mxu0
        %1658 = vmatprep.mubr.f32.mxu0 %v1517
        %1659 = vmatmul.mubr.f32.gmra.mrb[0].mxu0 %v1415
        %v1660 = vpop.f32.mrb[0].mxu0
        %v1661 = vadd.f32 0.0, %v1660
        %v1662 = vpop.f32.mrb[0].mxu0
        %1663 = vdwg.mxu0
        %v1665 = vsel %vm1470, %v1382, 0
        %v1668 = vsel %vm1470, %v1384, 0
        %1670 = vmatprep.subr.mxu0 0.0
        %1671 = vmatpush1.msra.mxu0 %v1429
        %1672 = vmatprep.subr.mxu0 0.0
        %1673 = vmatpush1.msra.mxu0 %v1430
        %1674 = vmatprep.subr.mxu0 0.0
        %1675 = vmatpush1.msra.mxu0 %v1431
        %1676 = vmatprep.subr.mxu0 0.0
        %1677 = vmatpush1.msra.mxu0 %v1432
        %1678 = vmatprep.subr.mxu0 0.0
        %1679 = vmatpush1.msra.mxu0 %v1433
        %1680 = vmatprep.subr.mxu0 0.0
        %1681 = vmatpush1.msra.mxu0 %v1434
        %1682 = vmatprep.subr.mxu0 0.0
        %1683 = vmatpush1.msra.mxu0 %v1435
        %1684 = vmatprep.subr.mxu0 0.0
        %1685 = vmatpush1.msra.mxu0 %v1436
        %1686 = vmatprep.subr.mxu0 0.0
        %1687 = vmatpush1.msra.mxu0 %v1437
        %1688 = vmatprep.subr.mxu0 0.0
        %1689 = vmatpush1.msra.mxu0 %v1438
        %1690 = vmatprep.subr.mxu0 0.0
        %1691 = vmatpush1.msra.mxu0 %v1439
        %1692 = vmatprep.subr.mxu0 0.0
        %1693 = vmatpush1.msra.mxu0 %v1440
        %1694 = vmatprep.subr.mxu0 0.0
        %1695 = vmatpush1.msra.mxu0 %v1441
        %1696 = vmatprep.subr.mxu0 0.0
        %1697 = vmatpush1.msra.mxu0 %v1442
        %1698 = vmatprep.subr.mxu0 0.0
        %1699 = vmatpush1.msra.mxu0 %v1443
        %1700 = vmatprep.subr.mxu0 0.0
        %1701 = vmatpush1.msra.mxu0 %v1444
        %1702 = vmatprep.subr.mxu0 0.0
        %1703 = vmatpush1.msra.mxu0 %v1445
        %1704 = vmatprep.subr.mxu0 0.0
        %1705 = vmatpush1.msra.mxu0 %v1446
        %1706 = vmatprep.subr.mxu0 0.0
        %1707 = vmatpush1.msra.mxu0 %v1447
        %1708 = vmatprep.subr.mxu0 0.0
        %1709 = vmatpush1.msra.mxu0 %v1448
        %1710 = vmatprep.subr.mxu0 0.0
        %1711 = vmatpush1.msra.mxu0 0.0
        %1712 = vmatprep.subr.mxu0 0.0
        %1713 = vmatpush1.msra.mxu0 0.0
        %1714 = vmatprep.subr.mxu0 0.0
        %1715 = vmatpush1.msra.mxu0 0.0
        %1716 = vmatprep.subr.mxu0 0.0
        %1717 = vmatpush1.msra.mxu0 0.0
        %1718 = vmatprep.subr.mxu0 0.0
        %1719 = vmatpush1.msra.mxu0 0.0
        %1720 = vmatprep.subr.mxu0 0.0
        %1721 = vmatpush1.msra.mxu0 0.0
        %1722 = vmatprep.subr.mxu0 0.0
        %1723 = vmatpush1.msra.mxu0 0.0
        %1724 = vmatprep.subr.mxu0 0.0
        %1725 = vmatpush1.msra.mxu0 0.0
        %1726 = vmatprep.subr.mxu0 0.0
        %1727 = vmatpush1.msra.mxu0 0.0
        %1728 = vmatprep.subr.mxu0 0.0
        %1729 = vmatpush1.msra.mxu0 0.0
        %1730 = vmatprep.subr.mxu0 0.0
        %1731 = vmatpush1.msra.mxu0 0.0
        %1732 = vmatprep.subr.mxu0 0.0
        %1733 = vmatpush1.msra.mxu0 0.0
        %1734 = vmatprep.mubr.f32.mxu0 %v1665
        %1735 = vmatmul.mubr.f32.gmra.mrb[0].mxu0 %v1381
        %v1736 = vpop.f32.mrb[0].mxu0
        %v1737 = vadd.f32 %v1586, %v1736
        %v1738 = vpop.f32.mrb[0].mxu0
        %1739 = vmatprep.mubr.f32.mxu0 %v1668
        %1740 = vmatmul.mubr.f32.gmra.mrb[0].mxu0 %v1383
        %v1741 = vpop.f32.mrb[0].mxu0
        %v1742 = vadd.f32 %v1591, %v1741
        %v1743 = vpop.f32.mrb[0].mxu0
        %1744 = vmatprep.mubr.f32.mxu0 %v1472
        %1745 = vmatmul.mubr.f32.gmra.mrb[0].mxu0 %v1385
        %v1746 = vpop.f32.mrb[0].mxu0
        %v1747 = vadd.f32 %v1596, %v1746
        %v1748 = vpop.f32.mrb[0].mxu0
        %1749 = vmatprep.mubr.f32.mxu0 %v1475
        %1750 = vmatmul.mubr.f32.gmra.mrb[0].mxu0 %v1387
        %v1751 = vpop.f32.mrb[0].mxu0
        %v1752 = vadd.f32 %v1601, %v1751
        %v1753 = vpop.f32.mrb[0].mxu0
        %1754 = vmatprep.mubr.f32.mxu0 %v1478
        %1755 = vmatmul.mubr.f32.gmra.mrb[0].mxu0 %v1389
        %v1756 = vpop.f32.mrb[0].mxu0
        %v1757 = vadd.f32 %v1606, %v1756
        %v1758 = vpop.f32.mrb[0].mxu0
        %1759 = vmatprep.mubr.f32.mxu0 %v1481
        %1760 = vmatmul.mubr.f32.gmra.mrb[0].mxu0 %v1391
        %v1761 = vpop.f32.mrb[0].mxu0
        %v1762 = vadd.f32 %v1611, %v1761
        %v1763 = vpop.f32.mrb[0].mxu0
        %1764 = vmatprep.mubr.f32.mxu0 %v1484
        %1765 = vmatmul.mubr.f32.gmra.mrb[0].mxu0 %v1393
        %v1766 = vpop.f32.mrb[0].mxu0
        %v1767 = vadd.f32 %v1616, %v1766
        %v1768 = vpop.f32.mrb[0].mxu0
        %1769 = vmatprep.mubr.f32.mxu0 %v1487
        %1770 = vmatmul.mubr.f32.gmra.mrb[0].mxu0 %v1395
        %v1771 = vpop.f32.mrb[0].mxu0
        %v1772 = vadd.f32 %v1621, %v1771
        %v1773 = vpop.f32.mrb[0].mxu0
        %1774 = vmatprep.mubr.f32.mxu0 %v1490
        %1775 = vmatmul.mubr.f32.gmra.mrb[0].mxu0 %v1397
        %v1776 = vpop.f32.mrb[0].mxu0
        %v1777 = vadd.f32 %v1626, %v1776
        %v1778 = vpop.f32.mrb[0].mxu0
        %1779 = vmatprep.mubr.f32.mxu0 %v1493
        %1780 = vmatmul.mubr.f32.gmra.mrb[0].mxu0 %v1399
        %v1781 = vpop.f32.mrb[0].mxu0
        %v1782 = vadd.f32 %v1631, %v1781
        %v1783 = vpop.f32.mrb[0].mxu0
        %1784 = vmatprep.mubr.f32.mxu0 %v1496
        %1785 = vmatmul.mubr.f32.gmra.mrb[0].mxu0 %v1401
        %v1786 = vpop.f32.mrb[0].mxu0
        %v1787 = vadd.f32 %v1636, %v1786
        %v1788 = vpop.f32.mrb[0].mxu0
        %1789 = vmatprep.mubr.f32.mxu0 %v1499
        %1790 = vmatmul.mubr.f32.gmra.mrb[0].mxu0 %v1403
        %v1791 = vpop.f32.mrb[0].mxu0
        %v1792 = vadd.f32 %v1641, %v1791
        %v1793 = vpop.f32.mrb[0].mxu0
        %1794 = vmatprep.mubr.f32.mxu0 %v1502
        %1795 = vmatmul.mubr.f32.gmra.mrb[0].mxu0 %v1405
        %v1796 = vpop.f32.mrb[0].mxu0
        %v1797 = vadd.f32 %v1646, %v1796
        %v1798 = vpop.f32.mrb[0].mxu0
        %1799 = vmatprep.mubr.f32.mxu0 %v1505
        %1800 = vmatmul.mubr.f32.gmra.mrb[0].mxu0 %v1407
        %v1801 = vpop.f32.mrb[0].mxu0
        %v1802 = vadd.f32 %v1651, %v1801
        %v1803 = vpop.f32.mrb[0].mxu0
        %1804 = vmatprep.mubr.f32.mxu0 %v1508
        %1805 = vmatmul.mubr.f32.gmra.mrb[0].mxu0 %v1409
        %v1806 = vpop.f32.mrb[0].mxu0
        %v1807 = vadd.f32 %v1656, %v1806
        %v1808 = vpop.f32.mrb[0].mxu0
        %1809 = vmatprep.mubr.f32.mxu0 %v1511
        %1810 = vmatmul.mubr.f32.gmra.mrb[0].mxu0 %v1411
        %v1811 = vpop.f32.mrb[0].mxu0
        %v1812 = vadd.f32 %v1661, %v1811
        %v1813 = vpop.f32.mrb[0].mxu0
        %1814 = vdwg.mxu0
        %s1815 = scalar_lea.vmem %s5, 320
        %v1816 = vld [vmem:[%s1815] sm:$0xff]
        %v1817 = vld [vmem:[%s1815 + $0x8] sm:$0xff]
        %v1818 = vld [vmem:[%s1815 + $0x10] sm:$0xff]
        %v1819 = vld [vmem:[%s1815 + $0x18] sm:$0xff]
        %v1820 = vld [vmem:[%s1815 + $0x20] sm:$0xff]
        %v1821 = vld [vmem:[%s1815 + $0x28] sm:$0xff]
        %v1822 = vld [vmem:[%s1815 + $0x30] sm:$0xff]
        %v1823 = vld [vmem:[%s1815 + $0x38] sm:$0xff]
        %v1824 = vld [vmem:[%s1815 + $0x40] sm:$0xff]
        %v1825 = vld [vmem:[%s1815 + $0x48] sm:$0xff]
        %v1826 = vld [vmem:[%s1815 + $0x50] sm:$0xff]
        %v1827 = vld [vmem:[%s1815 + $0x58] sm:$0xff]
        %v1828 = vld [vmem:[%s1815 + $0x60] sm:$0xff]
        %v1829 = vld [vmem:[%s1815 + $0x68] sm:$0xff]
        %v1830 = vld [vmem:[%s1815 + $0x70] sm:$0xff]
        %v1831 = vld [vmem:[%s1815 + $0x78] sm:$0xff]
        %v1832 = vld [vmem:[%s1815 + $0x80] sm:$0xff]
        %v1833 = vld [vmem:[%s1815 + $0x88] sm:$0xff]
        %v1834 = vld [vmem:[%s1815 + $0x90] sm:$0xff]
        %v1835 = vld [vmem:[%s1815 + $0x98] sm:$0xff]
        %v1837 = vsel %vm1470, %v1418, 0
        %v1840 = vsel %vm1470, %v1420, 0
        %1842 = vmatprep.subr.mxu0 0.0
        %1843 = vmatpush1.msra.mxu0 %v1816
        %1844 = vmatprep.subr.mxu0 0.0
        %1845 = vmatpush1.msra.mxu0 %v1817
        %1846 = vmatprep.subr.mxu0 0.0
        %1847 = vmatpush1.msra.mxu0 %v1818
        %1848 = vmatprep.subr.mxu0 0.0
        %1849 = vmatpush1.msra.mxu0 %v1819
        %1850 = vmatprep.subr.mxu0 0.0
        %1851 = vmatpush1.msra.mxu0 %v1820
        %1852 = vmatprep.subr.mxu0 0.0
        %1853 = vmatpush1.msra.mxu0 %v1821
        %1854 = vmatprep.subr.mxu0 0.0
        %1855 = vmatpush1.msra.mxu0 %v1822
        %1856 = vmatprep.subr.mxu0 0.0
        %1857 = vmatpush1.msra.mxu0 %v1823
        %1858 = vmatprep.subr.mxu0 0.0
        %1859 = vmatpush1.msra.mxu0 %v1824
        %1860 = vmatprep.subr.mxu0 0.0
        %1861 = vmatpush1.msra.mxu0 %v1825
        %1862 = vmatprep.subr.mxu0 0.0
        %1863 = vmatpush1.msra.mxu0 %v1826
        %1864 = vmatprep.subr.mxu0 0.0
        %1865 = vmatpush1.msra.mxu0 %v1827
        %1866 = vmatprep.subr.mxu0 0.0
        %1867 = vmatpush1.msra.mxu0 %v1828
        %1868 = vmatprep.subr.mxu0 0.0
        %1869 = vmatpush1.msra.mxu0 %v1829
        %1870 = vmatprep.subr.mxu0 0.0
        %1871 = vmatpush1.msra.mxu0 %v1830
        %1872 = vmatprep.subr.mxu0 0.0
        %1873 = vmatpush1.msra.mxu0 %v1831
        %1874 = vmatprep.subr.mxu0 0.0
        %1875 = vmatpush1.msra.mxu0 %v1832
        %1876 = vmatprep.subr.mxu0 0.0
        %1877 = vmatpush1.msra.mxu0 %v1833
        %1878 = vmatprep.subr.mxu0 0.0
        %1879 = vmatpush1.msra.mxu0 %v1834
        %1880 = vmatprep.subr.mxu0 0.0
        %1881 = vmatpush1.msra.mxu0 %v1835
        %1882 = vmatprep.subr.mxu0 0.0
        %1883 = vmatpush1.msra.mxu0 0.0
        %1884 = vmatprep.subr.mxu0 0.0
        %1885 = vmatpush1.msra.mxu0 0.0
        %1886 = vmatprep.subr.mxu0 0.0
        %1887 = vmatpush1.msra.mxu0 0.0
        %1888 = vmatprep.subr.mxu0 0.0
        %1889 = vmatpush1.msra.mxu0 0.0
        %1890 = vmatprep.subr.mxu0 0.0
        %1891 = vmatpush1.msra.mxu0 0.0
        %1892 = vmatprep.subr.mxu0 0.0
        %1893 = vmatpush1.msra.mxu0 0.0
        %1894 = vmatprep.subr.mxu0 0.0
        %1895 = vmatpush1.msra.mxu0 0.0
        %1896 = vmatprep.subr.mxu0 0.0
        %1897 = vmatpush1.msra.mxu0 0.0
        %1898 = vmatprep.subr.mxu0 0.0
        %1899 = vmatpush1.msra.mxu0 0.0
        %1900 = vmatprep.subr.mxu0 0.0
        %1901 = vmatpush1.msra.mxu0 0.0
        %1902 = vmatprep.subr.mxu0 0.0
        %1903 = vmatpush1.msra.mxu0 0.0
        %1904 = vmatprep.subr.mxu0 0.0
        %1905 = vmatpush1.msra.mxu0 0.0
        %1906 = vmatprep.mubr.f32.mxu0 %v1478
        %1907 = vmatmul.mubr.f32.gmra.mrb[0].mxu0 %v1389
        %v1908 = vpop.f32.mrb[0].mxu0
        %v1909 = vadd.f32 0.0, %v1908
        %v1910 = vpop.f32.mrb[0].mxu0
        %1911 = vmatprep.mubr.f32.mxu0 %v1481
        %1912 = vmatmul.mubr.f32.gmra.mrb[0].mxu0 %v1391
        %v1913 = vpop.f32.mrb[0].mxu0
        %v1914 = vadd.f32 0.0, %v1913
        %v1915 = vpop.f32.mrb[0].mxu0
        %1916 = vmatprep.mubr.f32.mxu0 %v1484
        %1917 = vmatmul.mubr.f32.gmra.mrb[0].mxu0 %v1393
        %v1918 = vpop.f32.mrb[0].mxu0
        %v1919 = vadd.f32 0.0, %v1918
        %v1920 = vpop.f32.mrb[0].mxu0
        %1921 = vmatprep.mubr.f32.mxu0 %v1487
        %1922 = vmatmul.mubr.f32.gmra.mrb[0].mxu0 %v1395
        %v1923 = vpop.f32.mrb[0].mxu0
        %v1924 = vadd.f32 0.0, %v1923
        %v1925 = vpop.f32.mrb[0].mxu0
        %1926 = vmatprep.mubr.f32.mxu0 %v1490
        %1927 = vmatmul.mubr.f32.gmra.mrb[0].mxu0 %v1397
        %v1928 = vpop.f32.mrb[0].mxu0
        %v1929 = vadd.f32 0.0, %v1928
        %v1930 = vpop.f32.mrb[0].mxu0
        %1931 = vmatprep.mubr.f32.mxu0 %v1493
        %1932 = vmatmul.mubr.f32.gmra.mrb[0].mxu0 %v1399
        %v1933 = vpop.f32.mrb[0].mxu0
        %v1934 = vadd.f32 0.0, %v1933
        %v1935 = vpop.f32.mrb[0].mxu0
        %1936 = vmatprep.mubr.f32.mxu0 %v1496
        %1937 = vmatmul.mubr.f32.gmra.mrb[0].mxu0 %v1401
        %v1938 = vpop.f32.mrb[0].mxu0
        %v1939 = vadd.f32 0.0, %v1938
        %v1940 = vpop.f32.mrb[0].mxu0
        %1941 = vmatprep.mubr.f32.mxu0 %v1499
        %1942 = vmatmul.mubr.f32.gmra.mrb[0].mxu0 %v1403
        %v1943 = vpop.f32.mrb[0].mxu0
        %v1944 = vadd.f32 0.0, %v1943
        %v1945 = vpop.f32.mrb[0].mxu0
        %1946 = vmatprep.mubr.f32.mxu0 %v1502
        %1947 = vmatmul.mubr.f32.gmra.mrb[0].mxu0 %v1405
        %v1948 = vpop.f32.mrb[0].mxu0
        %v1949 = vadd.f32 0.0, %v1948
        %v1950 = vpop.f32.mrb[0].mxu0
        %1951 = vmatprep.mubr.f32.mxu0 %v1505
        %1952 = vmatmul.mubr.f32.gmra.mrb[0].mxu0 %v1407
        %v1953 = vpop.f32.mrb[0].mxu0
        %v1954 = vadd.f32 0.0, %v1953
        %v1955 = vpop.f32.mrb[0].mxu0
        %1956 = vmatprep.mubr.f32.mxu0 %v1508
        %1957 = vmatmul.mubr.f32.gmra.mrb[0].mxu0 %v1409
        %v1958 = vpop.f32.mrb[0].mxu0
        %v1959 = vadd.f32 0.0, %v1958
        %v1960 = vpop.f32.mrb[0].mxu0
        %1961 = vmatprep.mubr.f32.mxu0 %v1511
        %1962 = vmatmul.mubr.f32.gmra.mrb[0].mxu0 %v1411
        %v1963 = vpop.f32.mrb[0].mxu0
        %v1964 = vadd.f32 0.0, %v1963
        %v1965 = vpop.f32.mrb[0].mxu0
        %1966 = vmatprep.mubr.f32.mxu0 %v1514
        %1967 = vmatmul.mubr.f32.gmra.mrb[0].mxu0 %v1413
        %v1968 = vpop.f32.mrb[0].mxu0
        %v1969 = vadd.f32 0.0, %v1968
        %v1970 = vpop.f32.mrb[0].mxu0
        %1971 = vmatprep.mubr.f32.mxu0 %v1517
        %1972 = vmatmul.mubr.f32.gmra.mrb[0].mxu0 %v1415
        %v1973 = vpop.f32.mrb[0].mxu0
        %v1974 = vadd.f32 0.0, %v1973
        %v1975 = vpop.f32.mrb[0].mxu0
        %1976 = vmatprep.mubr.f32.mxu0 %v1837
        %1977 = vmatmul.mubr.f32.gmra.mrb[0].mxu0 %v1417
        %v1978 = vpop.f32.mrb[0].mxu0
        %v1979 = vadd.f32 0.0, %v1978
        %v1980 = vpop.f32.mrb[0].mxu0
        %1981 = vmatprep.mubr.f32.mxu0 %v1840
        %1982 = vmatmul.mubr.f32.gmra.mrb[0].mxu0 %v1419
        %v1983 = vpop.f32.mrb[0].mxu0
        %v1984 = vadd.f32 0.0, %v1983
        %v1985 = vpop.f32.mrb[0].mxu0
        %1986 = vdwg.mxu0
        %v1987 = vadd.f32 %v1737, %v1909
        %v1988 = vadd.f32 %v1742, %v1914
        %v1989 = vadd.f32 %v1747, %v1919
        %v1990 = vadd.f32 %v1752, %v1924
        %v1991 = vadd.f32 %v1757, %v1929
        %v1992 = vadd.f32 %v1762, %v1934
        %v1993 = vadd.f32 %v1767, %v1939
        %v1994 = vadd.f32 %v1772, %v1944
        %v1995 = vadd.f32 %v1777, %v1949
        %v1996 = vadd.f32 %v1782, %v1954
        %v1997 = vadd.f32 %v1787, %v1959
        %v1998 = vadd.f32 %v1792, %v1964
        %v1999 = vadd.f32 %v1797, %v1969
        %v2000 = vadd.f32 %v1802, %v1974
        %v2001 = vadd.f32 %v1807, %v1979
        %v2002 = vadd.f32 %v1812, %v1984
        %s2003 = scalar_lea.vmem %s5, 480
        %v2004 = vld [vmem:[%s2003] sm:$0xff]
        %v2005 = vld [vmem:[%s2003 + $0x8] sm:$0xff]
        %v2006 = vld [vmem:[%s2003 + $0x10] sm:$0xff]
        %v2007 = vld [vmem:[%s2003 + $0x18] sm:$0xff]
        %v2008 = vld [vmem:[%s2003 + $0x20] sm:$0xff]
        %v2009 = vld [vmem:[%s2003 + $0x28] sm:$0xff]
        %v2010 = vld [vmem:[%s2003 + $0x30] sm:$0xff]
        %v2011 = vld [vmem:[%s2003 + $0x38] sm:$0xff]
        %v2012 = vld [vmem:[%s2003 + $0x40] sm:$0xff]
        %v2013 = vld [vmem:[%s2003 + $0x48] sm:$0xff]
        %v2014 = vld [vmem:[%s2003 + $0x50] sm:$0xff]
        %v2015 = vld [vmem:[%s2003 + $0x58] sm:$0xff]
        %v2016 = vld [vmem:[%s2003 + $0x60] sm:$0xff]
        %v2017 = vld [vmem:[%s2003 + $0x68] sm:$0xff]
        %v2018 = vld [vmem:[%s2003 + $0x70] sm:$0xff]
        %v2019 = vld [vmem:[%s2003 + $0x78] sm:$0xff]
        %v2020 = vld [vmem:[%s2003 + $0x80] sm:$0xff]
        %v2021 = vld [vmem:[%s2003 + $0x88] sm:$0xff]
        %v2022 = vld [vmem:[%s2003 + $0x90] sm:$0xff]
        %v2023 = vld [vmem:[%s2003 + $0x98] sm:$0xff]
        %v2025 = vsel %vm1470, %v1422, 0
        %v2028 = vsel %vm1470, %v1424, 0
        %2030 = vmatprep.subr.mxu0 0.0
        %2031 = vmatpush1.msra.mxu0 %v2004
        %2032 = vmatprep.subr.mxu0 0.0
        %2033 = vmatpush1.msra.mxu0 %v2005
        %2034 = vmatprep.subr.mxu0 0.0
        %2035 = vmatpush1.msra.mxu0 %v2006
        %2036 = vmatprep.subr.mxu0 0.0
        %2037 = vmatpush1.msra.mxu0 %v2007
        %2038 = vmatprep.subr.mxu0 0.0
        %2039 = vmatpush1.msra.mxu0 %v2008
        %2040 = vmatprep.subr.mxu0 0.0
        %2041 = vmatpush1.msra.mxu0 %v2009
        %2042 = vmatprep.subr.mxu0 0.0
        %2043 = vmatpush1.msra.mxu0 %v2010
        %2044 = vmatprep.subr.mxu0 0.0
        %2045 = vmatpush1.msra.mxu0 %v2011
        %2046 = vmatprep.subr.mxu0 0.0
        %2047 = vmatpush1.msra.mxu0 %v2012
        %2048 = vmatprep.subr.mxu0 0.0
        %2049 = vmatpush1.msra.mxu0 %v2013
        %2050 = vmatprep.subr.mxu0 0.0
        %2051 = vmatpush1.msra.mxu0 %v2014
        %2052 = vmatprep.subr.mxu0 0.0
        %2053 = vmatpush1.msra.mxu0 %v2015
        %2054 = vmatprep.subr.mxu0 0.0
        %2055 = vmatpush1.msra.mxu0 %v2016
        %2056 = vmatprep.subr.mxu0 0.0
        %2057 = vmatpush1.msra.mxu0 %v2017
        %2058 = vmatprep.subr.mxu0 0.0
        %2059 = vmatpush1.msra.mxu0 %v2018
        %2060 = vmatprep.subr.mxu0 0.0
        %2061 = vmatpush1.msra.mxu0 %v2019
        %2062 = vmatprep.subr.mxu0 0.0
        %2063 = vmatpush1.msra.mxu0 %v2020
        %2064 = vmatprep.subr.mxu0 0.0
        %2065 = vmatpush1.msra.mxu0 %v2021
        %2066 = vmatprep.subr.mxu0 0.0
        %2067 = vmatpush1.msra.mxu0 %v2022
        %2068 = vmatprep.subr.mxu0 0.0
        %2069 = vmatpush1.msra.mxu0 %v2023
        %2070 = vmatprep.subr.mxu0 0.0
        %2071 = vmatpush1.msra.mxu0 0.0
        %2072 = vmatprep.subr.mxu0 0.0
        %2073 = vmatpush1.msra.mxu0 0.0
        %2074 = vmatprep.subr.mxu0 0.0
        %2075 = vmatpush1.msra.mxu0 0.0
        %2076 = vmatprep.subr.mxu0 0.0
        %2077 = vmatpush1.msra.mxu0 0.0
        %2078 = vmatprep.subr.mxu0 0.0
        %2079 = vmatpush1.msra.mxu0 0.0
        %2080 = vmatprep.subr.mxu0 0.0
        %2081 = vmatpush1.msra.mxu0 0.0
        %2082 = vmatprep.subr.mxu0 0.0
        %2083 = vmatpush1.msra.mxu0 0.0
        %2084 = vmatprep.subr.mxu0 0.0
        %2085 = vmatpush1.msra.mxu0 0.0
        %2086 = vmatprep.subr.mxu0 0.0
        %2087 = vmatpush1.msra.mxu0 0.0
        %2088 = vmatprep.subr.mxu0 0.0
        %2089 = vmatpush1.msra.mxu0 0.0
        %2090 = vmatprep.subr.mxu0 0.0
        %2091 = vmatpush1.msra.mxu0 0.0
        %2092 = vmatprep.subr.mxu0 0.0
        %2093 = vmatpush1.msra.mxu0 0.0
        %2094 = vmatprep.mubr.f32.mxu0 %v1484
        %2095 = vmatmul.mubr.f32.gmra.mrb[0].mxu0 %v1393
        %v2096 = vpop.f32.mrb[0].mxu0
        %v2097 = vadd.f32 0.0, %v2096
        %v2098 = vpop.f32.mrb[0].mxu0
        %2099 = vmatprep.mubr.f32.mxu0 %v1487
        %2100 = vmatmul.mubr.f32.gmra.mrb[0].mxu0 %v1395
        %v2101 = vpop.f32.mrb[0].mxu0
        %v2102 = vadd.f32 0.0, %v2101
        %v2103 = vpop.f32.mrb[0].mxu0
        %2104 = vmatprep.mubr.f32.mxu0 %v1490
        %2105 = vmatmul.mubr.f32.gmra.mrb[0].mxu0 %v1397
        %v2106 = vpop.f32.mrb[0].mxu0
        %v2107 = vadd.f32 0.0, %v2106
        %v2108 = vpop.f32.mrb[0].mxu0
        %2109 = vmatprep.mubr.f32.mxu0 %v1493
        %2110 = vmatmul.mubr.f32.gmra.mrb[0].mxu0 %v1399
        %v2111 = vpop.f32.mrb[0].mxu0
        %v2112 = vadd.f32 0.0, %v2111
        %v2113 = vpop.f32.mrb[0].mxu0
        %2114 = vmatprep.mubr.f32.mxu0 %v1496
        %2115 = vmatmul.mubr.f32.gmra.mrb[0].mxu0 %v1401
        %v2116 = vpop.f32.mrb[0].mxu0
        %v2117 = vadd.f32 0.0, %v2116
        %v2118 = vpop.f32.mrb[0].mxu0
        %2119 = vmatprep.mubr.f32.mxu0 %v1499
        %2120 = vmatmul.mubr.f32.gmra.mrb[0].mxu0 %v1403
        %v2121 = vpop.f32.mrb[0].mxu0
        %v2122 = vadd.f32 0.0, %v2121
        %v2123 = vpop.f32.mrb[0].mxu0
        %2124 = vmatprep.mubr.f32.mxu0 %v1502
        %2125 = vmatmul.mubr.f32.gmra.mrb[0].mxu0 %v1405
        %v2126 = vpop.f32.mrb[0].mxu0
        %v2127 = vadd.f32 0.0, %v2126
        %v2128 = vpop.f32.mrb[0].mxu0
        %2129 = vmatprep.mubr.f32.mxu0 %v1505
        %2130 = vmatmul.mubr.f32.gmra.mrb[0].mxu0 %v1407
        %v2131 = vpop.f32.mrb[0].mxu0
        %v2132 = vadd.f32 0.0, %v2131
        %v2133 = vpop.f32.mrb[0].mxu0
        %2134 = vmatprep.mubr.f32.mxu0 %v1508
        %2135 = vmatmul.mubr.f32.gmra.mrb[0].mxu0 %v1409
        %v2136 = vpop.f32.mrb[0].mxu0
        %v2137 = vadd.f32 0.0, %v2136
        %v2138 = vpop.f32.mrb[0].mxu0
        %2139 = vmatprep.mubr.f32.mxu0 %v1511
        %2140 = vmatmul.mubr.f32.gmra.mrb[0].mxu0 %v1411
        %v2141 = vpop.f32.mrb[0].mxu0
        %v2142 = vadd.f32 0.0, %v2141
        %v2143 = vpop.f32.mrb[0].mxu0
        %2144 = vmatprep.mubr.f32.mxu0 %v1514
        %2145 = vmatmul.mubr.f32.gmra.mrb[0].mxu0 %v1413
        %v2146 = vpop.f32.mrb[0].mxu0
        %v2147 = vadd.f32 0.0, %v2146
        %v2148 = vpop.f32.mrb[0].mxu0
        %2149 = vmatprep.mubr.f32.mxu0 %v1517
        %2150 = vmatmul.mubr.f32.gmra.mrb[0].mxu0 %v1415
        %v2151 = vpop.f32.mrb[0].mxu0
        %v2152 = vadd.f32 0.0, %v2151
        %v2153 = vpop.f32.mrb[0].mxu0
        %2154 = vmatprep.mubr.f32.mxu0 %v1837
        %2155 = vmatmul.mubr.f32.gmra.mrb[0].mxu0 %v1417
        %v2156 = vpop.f32.mrb[0].mxu0
        %v2157 = vadd.f32 0.0, %v2156
        %v2158 = vpop.f32.mrb[0].mxu0
        %2159 = vmatprep.mubr.f32.mxu0 %v1840
        %2160 = vmatmul.mubr.f32.gmra.mrb[0].mxu0 %v1419
        %v2161 = vpop.f32.mrb[0].mxu0
        %v2162 = vadd.f32 0.0, %v2161
        %v2163 = vpop.f32.mrb[0].mxu0
        %2164 = vmatprep.mubr.f32.mxu0 %v2025
        %2165 = vmatmul.mubr.f32.gmra.mrb[0].mxu0 %v1421
        %v2166 = vpop.f32.mrb[0].mxu0
        %v2167 = vadd.f32 0.0, %v2166
        %v2168 = vpop.f32.mrb[0].mxu0
        %2169 = vmatprep.mubr.f32.mxu0 %v2028
        %2170 = vmatmul.mubr.f32.gmra.mrb[0].mxu0 %v1423
        %v2171 = vpop.f32.mrb[0].mxu0
        %v2172 = vadd.f32 0.0, %v2171
        %v2173 = vpop.f32.mrb[0].mxu0
        %2174 = vdwg.mxu0
        %v2175 = vadd.f32 %v1987, %v2097
        %v2176 = vadd.f32 %v1988, %v2102
        %v2177 = vadd.f32 %v1989, %v2107
        %v2178 = vadd.f32 %v1990, %v2112
        %v2179 = vadd.f32 %v1991, %v2117
        %v2180 = vadd.f32 %v1992, %v2122
        %v2181 = vadd.f32 %v1993, %v2127
        %v2182 = vadd.f32 %v1994, %v2132
        %v2183 = vadd.f32 %v1995, %v2137
        %v2184 = vadd.f32 %v1996, %v2142
        %v2185 = vadd.f32 %v1997, %v2147
        %v2186 = vadd.f32 %v1998, %v2152
        %v2187 = vadd.f32 %v1999, %v2157
        %v2188 = vadd.f32 %v2000, %v2162
        %v2189 = vadd.f32 %v2001, %v2167
        %v2190 = vadd.f32 %v2002, %v2172
        %s2191 = scalar_lea.vmem %s5, 640
        %v2192 = vld [vmem:[%s2191] sm:$0xff]
        %v2193 = vld [vmem:[%s2191 + $0x8] sm:$0xff]
        %v2194 = vld [vmem:[%s2191 + $0x10] sm:$0xff]
        %v2195 = vld [vmem:[%s2191 + $0x18] sm:$0xff]
        %v2196 = vld [vmem:[%s2191 + $0x20] sm:$0xff]
        %v2197 = vld [vmem:[%s2191 + $0x28] sm:$0xff]
        %v2198 = vld [vmem:[%s2191 + $0x30] sm:$0xff]
        %v2199 = vld [vmem:[%s2191 + $0x38] sm:$0xff]
        %v2200 = vld [vmem:[%s2191 + $0x40] sm:$0xff]
        %v2201 = vld [vmem:[%s2191 + $0x48] sm:$0xff]
        %v2202 = vld [vmem:[%s2191 + $0x50] sm:$0xff]
        %v2203 = vld [vmem:[%s2191 + $0x58] sm:$0xff]
        %v2204 = vld [vmem:[%s2191 + $0x60] sm:$0xff]
        %v2205 = vld [vmem:[%s2191 + $0x68] sm:$0xff]
        %v2206 = vld [vmem:[%s2191 + $0x70] sm:$0xff]
        %v2207 = vld [vmem:[%s2191 + $0x78] sm:$0xff]
        %v2208 = vld [vmem:[%s2191 + $0x80] sm:$0xff]
        %v2209 = vld [vmem:[%s2191 + $0x88] sm:$0xff]
        %v2210 = vld [vmem:[%s2191 + $0x90] sm:$0xff]
        %v2211 = vld [vmem:[%s2191 + $0x98] sm:$0xff]
        %v2213 = vsel %vm1470, %v1426, 0
        %v2216 = vsel %vm1470, %v1428, 0
        %2218 = vmatprep.subr.mxu0 0.0
        %2219 = vmatpush1.msra.mxu0 %v2192
        %2220 = vmatprep.subr.mxu0 0.0
        %2221 = vmatpush1.msra.mxu0 %v2193
        %2222 = vmatprep.subr.mxu0 0.0
        %2223 = vmatpush1.msra.mxu0 %v2194
        %2224 = vmatprep.subr.mxu0 0.0
        %2225 = vmatpush1.msra.mxu0 %v2195
        %2226 = vmatprep.subr.mxu0 0.0
        %2227 = vmatpush1.msra.mxu0 %v2196
        %2228 = vmatprep.subr.mxu0 0.0
        %2229 = vmatpush1.msra.mxu0 %v2197
        %2230 = vmatprep.subr.mxu0 0.0
        %2231 = vmatpush1.msra.mxu0 %v2198
        %2232 = vmatprep.subr.mxu0 0.0
        %2233 = vmatpush1.msra.mxu0 %v2199
        %2234 = vmatprep.subr.mxu0 0.0
        %2235 = vmatpush1.msra.mxu0 %v2200
        %2236 = vmatprep.subr.mxu0 0.0
        %2237 = vmatpush1.msra.mxu0 %v2201
        %2238 = vmatprep.subr.mxu0 0.0
        %2239 = vmatpush1.msra.mxu0 %v2202
        %2240 = vmatprep.subr.mxu0 0.0
        %2241 = vmatpush1.msra.mxu0 %v2203
        %2242 = vmatprep.subr.mxu0 0.0
        %2243 = vmatpush1.msra.mxu0 %v2204
        %2244 = vmatprep.subr.mxu0 0.0
        %2245 = vmatpush1.msra.mxu0 %v2205
        %2246 = vmatprep.subr.mxu0 0.0
        %2247 = vmatpush1.msra.mxu0 %v2206
        %2248 = vmatprep.subr.mxu0 0.0
        %2249 = vmatpush1.msra.mxu0 %v2207
        %2250 = vmatprep.subr.mxu0 0.0
        %2251 = vmatpush1.msra.mxu0 %v2208
        %2252 = vmatprep.subr.mxu0 0.0
        %2253 = vmatpush1.msra.mxu0 %v2209
        %2254 = vmatprep.subr.mxu0 0.0
        %2255 = vmatpush1.msra.mxu0 %v2210
        %2256 = vmatprep.subr.mxu0 0.0
        %2257 = vmatpush1.msra.mxu0 %v2211
        %2258 = vmatprep.subr.mxu0 0.0
        %2259 = vmatpush1.msra.mxu0 0.0
        %2260 = vmatprep.subr.mxu0 0.0
        %2261 = vmatpush1.msra.mxu0 0.0
        %2262 = vmatprep.subr.mxu0 0.0
        %2263 = vmatpush1.msra.mxu0 0.0
        %2264 = vmatprep.subr.mxu0 0.0
        %2265 = vmatpush1.msra.mxu0 0.0
        %2266 = vmatprep.subr.mxu0 0.0
        %2267 = vmatpush1.msra.mxu0 0.0
        %2268 = vmatprep.subr.mxu0 0.0
        %2269 = vmatpush1.msra.mxu0 0.0
        %2270 = vmatprep.subr.mxu0 0.0
        %2271 = vmatpush1.msra.mxu0 0.0
        %2272 = vmatprep.subr.mxu0 0.0
        %2273 = vmatpush1.msra.mxu0 0.0
        %2274 = vmatprep.subr.mxu0 0.0
        %2275 = vmatpush1.msra.mxu0 0.0
        %2276 = vmatprep.subr.mxu0 0.0
        %2277 = vmatpush1.msra.mxu0 0.0
        %2278 = vmatprep.subr.mxu0 0.0
        %2279 = vmatpush1.msra.mxu0 0.0
        %2280 = vmatprep.subr.mxu0 0.0
        %2281 = vmatpush1.msra.mxu0 0.0
        %2282 = vmatprep.mubr.f32.mxu0 %v1490
        %2283 = vmatmul.mubr.f32.gmra.mrb[0].mxu0 %v1397
        %v2284 = vpop.f32.mrb[0].mxu0
        %v2285 = vadd.f32 0.0, %v2284
        %v2286 = vpop.f32.mrb[0].mxu0
        %2287 = vmatprep.mubr.f32.mxu0 %v1493
        %2288 = vmatmul.mubr.f32.gmra.mrb[0].mxu0 %v1399
        %v2289 = vpop.f32.mrb[0].mxu0
        %v2290 = vadd.f32 0.0, %v2289
        %v2291 = vpop.f32.mrb[0].mxu0
        %2292 = vmatprep.mubr.f32.mxu0 %v1496
        %2293 = vmatmul.mubr.f32.gmra.mrb[0].mxu0 %v1401
        %v2294 = vpop.f32.mrb[0].mxu0
        %v2295 = vadd.f32 0.0, %v2294
        %v2296 = vpop.f32.mrb[0].mxu0
        %2297 = vmatprep.mubr.f32.mxu0 %v1499
        %2298 = vmatmul.mubr.f32.gmra.mrb[0].mxu0 %v1403
        %v2299 = vpop.f32.mrb[0].mxu0
        %v2300 = vadd.f32 0.0, %v2299
        %v2301 = vpop.f32.mrb[0].mxu0
        %2302 = vmatprep.mubr.f32.mxu0 %v1502
        %2303 = vmatmul.mubr.f32.gmra.mrb[0].mxu0 %v1405
        %v2304 = vpop.f32.mrb[0].mxu0
        %v2305 = vadd.f32 0.0, %v2304
        %v2306 = vpop.f32.mrb[0].mxu0
        %2307 = vmatprep.mubr.f32.mxu0 %v1505
        %2308 = vmatmul.mubr.f32.gmra.mrb[0].mxu0 %v1407
        %v2309 = vpop.f32.mrb[0].mxu0
        %v2310 = vadd.f32 0.0, %v2309
        %v2311 = vpop.f32.mrb[0].mxu0
        %2312 = vmatprep.mubr.f32.mxu0 %v1508
        %2313 = vmatmul.mubr.f32.gmra.mrb[0].mxu0 %v1409
        %v2314 = vpop.f32.mrb[0].mxu0
        %v2315 = vadd.f32 0.0, %v2314
        %v2316 = vpop.f32.mrb[0].mxu0
        %2317 = vmatprep.mubr.f32.mxu0 %v1511
        %2318 = vmatmul.mubr.f32.gmra.mrb[0].mxu0 %v1411
        %v2319 = vpop.f32.mrb[0].mxu0
        %v2320 = vadd.f32 0.0, %v2319
        %v2321 = vpop.f32.mrb[0].mxu0
        %2322 = vmatprep.mubr.f32.mxu0 %v1514
        %2323 = vmatmul.mubr.f32.gmra.mrb[0].mxu0 %v1413
        %v2324 = vpop.f32.mrb[0].mxu0
        %v2325 = vadd.f32 0.0, %v2324
        %v2326 = vpop.f32.mrb[0].mxu0
        %2327 = vmatprep.mubr.f32.mxu0 %v1517
        %2328 = vmatmul.mubr.f32.gmra.mrb[0].mxu0 %v1415
        %v2329 = vpop.f32.mrb[0].mxu0
        %v2330 = vadd.f32 0.0, %v2329
        %v2331 = vpop.f32.mrb[0].mxu0
        %2332 = vmatprep.mubr.f32.mxu0 %v1837
        %2333 = vmatmul.mubr.f32.gmra.mrb[0].mxu0 %v1417
        %v2334 = vpop.f32.mrb[0].mxu0
        %v2335 = vadd.f32 0.0, %v2334
        %v2336 = vpop.f32.mrb[0].mxu0
        %2337 = vmatprep.mubr.f32.mxu0 %v1840
        %2338 = vmatmul.mubr.f32.gmra.mrb[0].mxu0 %v1419
        %v2339 = vpop.f32.mrb[0].mxu0
        %v2340 = vadd.f32 0.0, %v2339
        %v2341 = vpop.f32.mrb[0].mxu0
        %2342 = vmatprep.mubr.f32.mxu0 %v2025
        %2343 = vmatmul.mubr.f32.gmra.mrb[0].mxu0 %v1421
        %v2344 = vpop.f32.mrb[0].mxu0
        %v2345 = vadd.f32 0.0, %v2344
        %v2346 = vpop.f32.mrb[0].mxu0
        %2347 = vmatprep.mubr.f32.mxu0 %v2028
        %2348 = vmatmul.mubr.f32.gmra.mrb[0].mxu0 %v1423
        %v2349 = vpop.f32.mrb[0].mxu0
        %v2350 = vadd.f32 0.0, %v2349
        %v2351 = vpop.f32.mrb[0].mxu0
        %2352 = vmatprep.mubr.f32.mxu0 %v2213
        %2353 = vmatmul.mubr.f32.gmra.mrb[0].mxu0 %v1425
        %v2354 = vpop.f32.mrb[0].mxu0
        %v2355 = vadd.f32 0.0, %v2354
        %v2356 = vpop.f32.mrb[0].mxu0
        %2357 = vmatprep.mubr.f32.mxu0 %v2216
        %2358 = vmatmul.mubr.f32.gmra.mrb[0].mxu0 %v1427
        %v2359 = vpop.f32.mrb[0].mxu0
        %v2360 = vadd.f32 0.0, %v2359
        %v2361 = vpop.f32.mrb[0].mxu0
        %2362 = vdwg.mxu0
        %v2363 = vadd.f32 %v2175, %v2285
        %v2364 = vadd.f32 %v2176, %v2290
        %v2365 = vadd.f32 %v2177, %v2295
        %v2366 = vadd.f32 %v2178, %v2300
        %v2367 = vadd.f32 %v2179, %v2305
        %v2368 = vadd.f32 %v2180, %v2310
        %v2369 = vadd.f32 %v2181, %v2315
        %v2370 = vadd.f32 %v2182, %v2320
        %v2371 = vadd.f32 %v2183, %v2325
        %v2372 = vadd.f32 %v2184, %v2330
        %v2373 = vadd.f32 %v2185, %v2335
        %v2374 = vadd.f32 %v2186, %v2340
        %v2375 = vadd.f32 %v2187, %v2345
        %v2376 = vadd.f32 %v2188, %v2350
        %v2377 = vadd.f32 %v2189, %v2355
        %v2378 = vadd.f32 %v2190, %v2360
        %v2379 = vld [vmem:[%s6] sm:$0x1]
        %v2381 = vlaneseq
        %v2382 = vshrl.u32 %v2381, 7
        %v2383 = vsub.s32 0, %v2382
        %v2384 = vrot.slane %v2379, %v2383
        %v2386 = vadd.f32 %v2363, %v2384
        %v2387 = vadd.f32 %v2364, %v2384
        %v2388 = vadd.f32 %v2365, %v2384
        %v2389 = vadd.f32 %v2366, %v2384
        %v2390 = vadd.f32 %v2367, %v2384
        %v2391 = vadd.f32 %v2368, %v2384
        %v2392 = vadd.f32 %v2369, %v2384
        %v2393 = vadd.f32 %v2370, %v2384
        %v2394 = vadd.f32 %v2371, %v2384
        %v2395 = vadd.f32 %v2372, %v2384
        %v2396 = vadd.f32 %v2373, %v2384
        %v2397 = vadd.f32 %v2374, %v2384
        %v2398 = vadd.f32 %v2375, %v2384
        %v2399 = vadd.f32 %v2376, %v2384
        %v2400 = vadd.f32 %v2377, %v2384
        %v2401 = vadd.f32 %v2378, %v2384
        %v2402 = vld [vmem:[%s328] sm:$0xff]
        %v2403 = vld [vmem:[%s328 + $0x8] sm:$0xff]
        %v2404 = vld [vmem:[%s328 + $0x10] sm:$0xff]
        %v2405 = vld [vmem:[%s328 + $0x18] sm:$0xff]
        %v2406 = vld [vmem:[%s328 + $0x20] sm:$0xff]
        %v2407 = vld [vmem:[%s328 + $0x28] sm:$0xff]
        %v2408 = vld [vmem:[%s328 + $0x30] sm:$0xff]
        %v2409 = vld [vmem:[%s328 + $0x38] sm:$0xff]
        %v2410 = vld [vmem:[%s328 + $0x40] sm:$0xff]
        %v2411 = vld [vmem:[%s328 + $0x48] sm:$0xff]
        %v2412 = vld [vmem:[%s328 + $0x50] sm:$0xff]
        %v2413 = vld [vmem:[%s328 + $0x58] sm:$0xff]
        %v2414 = vld [vmem:[%s328 + $0x60] sm:$0xff]
        %v2415 = vld [vmem:[%s328 + $0x68] sm:$0xff]
        %v2416 = vld [vmem:[%s328 + $0x70] sm:$0xff]
        %v2417 = vld [vmem:[%s328 + $0x78] sm:$0xff]
        %v2418 = vadd.f32 %v2386, %v2402
        %v2419 = vadd.f32 %v2387, %v2403
        %v2420 = vadd.f32 %v2388, %v2404
        %v2421 = vadd.f32 %v2389, %v2405
        %v2422 = vadd.f32 %v2390, %v2406
        %v2423 = vadd.f32 %v2391, %v2407
        %v2424 = vadd.f32 %v2392, %v2408
        %v2425 = vadd.f32 %v2393, %v2409
        %v2426 = vadd.f32 %v2394, %v2410
        %v2427 = vadd.f32 %v2395, %v2411
        %v2428 = vadd.f32 %v2396, %v2412
        %v2429 = vadd.f32 %v2397, %v2413
        %v2430 = vadd.f32 %v2398, %v2414
        %v2431 = vadd.f32 %v2399, %v2415
        %v2432 = vadd.f32 %v2400, %v2416
        %v2433 = vadd.f32 %v2401, %v2417
        %2434 = vst.msk [vmem:[%s313] sm:$0xff] %vm1470, %v2418
        %2435 = vst.msk [vmem:[%s313 + $0x8] sm:$0xff] %vm1470, %v2419
        %2436 = vst.msk [vmem:[%s313 + $0x10] sm:$0xff] %vm1470, %v2420
        %2437 = vst.msk [vmem:[%s313 + $0x18] sm:$0xff] %vm1470, %v2421
        %2438 = vst.msk [vmem:[%s313 + $0x20] sm:$0xff] %vm1470, %v2422
        %2439 = vst.msk [vmem:[%s313 + $0x28] sm:$0xff] %vm1470, %v2423
        %2440 = vst.msk [vmem:[%s313 + $0x30] sm:$0xff] %vm1470, %v2424
        %2441 = vst.msk [vmem:[%s313 + $0x38] sm:$0xff] %vm1470, %v2425
        %2442 = vst.msk [vmem:[%s313 + $0x40] sm:$0xff] %vm1470, %v2426
        %2443 = vst.msk [vmem:[%s313 + $0x48] sm:$0xff] %vm1470, %v2427
        %2444 = vst.msk [vmem:[%s313 + $0x50] sm:$0xff] %vm1470, %v2428
        %2445 = vst.msk [vmem:[%s313 + $0x58] sm:$0xff] %vm1470, %v2429
        %2446 = vst.msk [vmem:[%s313 + $0x60] sm:$0xff] %vm1470, %v2430
        %2447 = vst.msk [vmem:[%s313 + $0x68] sm:$0xff] %vm1470, %v2431
        %2448 = vst.msk [vmem:[%s313 + $0x70] sm:$0xff] %vm1470, %v2432
        %2449 = vst.msk [vmem:[%s313 + $0x78] sm:$0xff] %vm1470, %v2433
        %s2450 = sand.u32 %s202, 1
        %s2451 = scalar_lea.sflag [#allocation4], %s2450
        %s2452 = sand.u32 %s202, 1
        %s2453 = smul.addr %s2452, 128
        %s2454 = scalar_lea.vmem [#allocation3], %s2453
        // Predicated region
        $region53: #{res_block_forward.3} parent=47 // pred_check
          %p2455 = pneg %p212
        $region54: #{res_block_forward.3} parent=47 // pred_check_branch
          %2457 = sbr.rel (%p2455) target = $region56
        $region55: #{res_block_forward.3} parent=47 // pred_region
          %s2458 = smul.u32 8, %s26
          %s2460 = ssub.s32 2048, 2048
          %2461 = vsyncadd %s2451, %s2460
          %s2462 = smul.addr %s2458, 2
          %s2463 = smul.addr %s25, 32
          %s2464 = sadd.s32 %s2462, %s2463
          %s2465 = smul.addr %s2464, 128
          %s2466 = scalar_lea.hbm %s7, %s2465
          %s2467 = sshll.u32 %s2454, 4
          %s2468 = int_to_ptr.vmem [resolvable:$true] %s2467
          %2473 = dma.vmem_to_hbm [thread:$0]  %s2468, 2048, %s2466, %s2451, 128, 128, 8
        $region56: #{res_block_forward.3} parent=47 // pred_fallthru
          _
      $region48: #{res_block_forward.3} parent=5 // pred_fallthru
        _
      %p2474 = scmp.le.s32.totalorder 2, %s16
      // Predicated region
      $region57: #{res_block_forward.3} parent=5 // pred_check
        %p2475 = pneg %p2474
      $region58: #{res_block_forward.3} parent=5 // pred_check_branch
        %2477 = sbr.rel (%p2475) target = $region60
      $region59: #{res_block_forward.3} parent=5 // pred_region
        %s2478 = ssub.s32 %s16, 2
        // Predicated region
        $region61: #{res_block_forward.3} parent=59 // pred_check
          %p2479 = pneg %p218
        $region62: #{res_block_forward.3} parent=59 // pred_check_branch
          %2481 = sbr.rel (%p2479) target = $region64
        $region63: #{res_block_forward.3} parent=59 // pred_region
          %s2482 = sand.u32 %s203, 1
          %s2483 = scalar_lea.sflag [#allocation4], %s2482
          %s2484 = sand.u32 %s203, 1
          %s2485 = smul.addr %s2484, 128
          %s2486 = scalar_lea.vmem [#allocation3], %s2485
          %2487 = dma.done %s2483, 2048
        $region64: #{res_block_forward.3} parent=59 // pred_fallthru
          _
      $region60: #{res_block_forward.3} parent=5 // pred_fallthru
        _
    $region6: #{res_block_forward.3} parent=1 // loop_footer
      %s20 = sadd.s32 1, %s16
    $region7: #{res_block_forward.3} parent=1 // loop_footer_branch
      %15 = sbr.rel target = $region3
    $region8: #{res_block_forward.3} parent=1 // loop_exit
      _
    %2488 = vsyncpa [#allocation4], 1
    %s2489 = scalar_lea.sflag [#allocation4], 1
    %2490 = vsyncpa %s2489, 1

</llo_original>
